<compile_context>
chip_gen: v7x
topology: tpu7x:2x2x1
jax: 0.10.0
libtpu: 0.0.40
codegen_flags: <defaults>
</compile_context>

<pallas_src>
import jax
import jax.numpy as jnp
from jax.experimental import pallas as pl
from jax.experimental.pallas import tpu as pltpu

_H = 7    # spatial height fed to the head
_W = 7    # real spatial width
_WP = 8   # width zero-padded to 8: never read by the 5x5 windows (max col = 6),
          # but makes rows/image = 56 (multiple of 8) so reshapes are free views


def _round_up(n, m):
    return (n + m - 1) // m * m


def _aux_head_kernel(x_ref, w1_ref, bn_scale_ref, bn_bias_ref, w2_ref,
                     wl_ref, bl_ref, out_ref):
    """One batch tile, fully VMEM resident.

    x_ref:        (TB*56, Cpad) bf16  flattened NHWC rows (W padded to 8)
    w1_ref:       (Cpad, 128)   bf16  1x1 conv weight (channel-padded)
    bn_scale_ref: (1, 128)      f32   folded BN scale = gamma / sqrt(var + eps)
    bn_bias_ref:  (1, 128)      f32   folded BN bias  = beta - mean * scale
    w2_ref:       (512, 768)    bf16  2x2 conv weight, tap-major rows
    wl_ref:       (768, NP)     bf16  classifier weight, lane-padded
    bl_ref:       (1, NP)       f32   classifier bias, lane-padded
    out_ref:      (TB, NP)      f32
    """
    rows = x_ref.shape[0]
    TB = rows // (_H * _WP)

    # --- ReLU (bf16), then Conv2d(C,128,1,bias=False) as ONE MXU matmul with
    # M = TB*7*8.  LHS arrives pre-flattened and tile-aligned from the wrapper.
    lhs = jnp.maximum(x_ref[...], 0)
    h = jnp.dot(lhs, w1_ref[...], preferred_element_type=jnp.float32)
    # 56 f32 rows per image (multiple of 8) -> tile-aligned, no relayout.
    h = h.reshape(TB, _H, _WP, 128)

    # --- AvgPool2d(5, stride=2, pad=0): the two H windows share rows 2..4 and
    # the two W windows share cols 2..4, so reuse the middle partial sums.
    r01 = jnp.sum(h[:, 0:2], axis=1)              # (TB, 8, 128)
    r24 = jnp.sum(h[:, 2:5], axis=1)
    r56 = jnp.sum(h[:, 5:7], axis=1)
    rows_top = r01 + r24                          # H rows 0..4
    rows_bot = r24 + r56                          # H rows 2..6

    # BN (inference, folded) with the 1/25 pool divisor; broadcasts hoisted once.
    scale_b = jnp.broadcast_to(bn_scale_ref[...] * (1.0 / 25.0), (TB, 128))
    bias_b = jnp.broadcast_to(bn_bias_ref[...], (TB, 128))

    def col_windows(r):
        c01 = jnp.sum(r[:, 0:2], axis=1)          # (TB, 128)
        c24 = jnp.sum(r[:, 2:5], axis=1)
        c56 = jnp.sum(r[:, 5:7], axis=1)
        return c01 + c24, c24 + c56               # W cols 0..4 / 2..6

    t00, t01 = col_windows(rows_top)
    t10, t11 = col_windows(rows_bot)

    # tap-major concat: column = (oh*2 + ow)*128 + cin, matching w2's row layout.
    act = jnp.concatenate(
        [jnp.maximum(t * scale_b + bias_b, 0.0) for t in (t00, t01, t10, t11)],
        axis=-1).astype(jnp.bfloat16)             # (TB, 512)

    # --- Conv2d(128,768,2,bias=False) on the 2x2 map == ONE K=512 matmul, + ReLU.
    h2 = jnp.maximum(
        jnp.dot(act, w2_ref[...], preferred_element_type=jnp.float32), 0.0)

    # --- classifier Linear(768, num_classes), lane-padded output (no masked vst).
    out_ref[...] = jnp.dot(h2.astype(jnp.bfloat16), wl_ref[...],
                           preferred_element_type=jnp.float32) + bl_ref[...]


def _tpu_generation():
    """Best-effort TPU generation (5/6/7); defaults to 6 if undetectable."""
    try:
        kind = jax.devices()[0].device_kind.lower()
    except Exception:
        return 6
    for gen in (7, 6, 5, 4):
        if "v%d" % gen in kind:
            return gen
    return 6


def _vmem_footprint_bytes(tb, c_pad, np_):
    """Rough per-step VMEM footprint: 2x-buffered x/out blocks, single-buffered
    weights, plus the f32 conv1 output and pooling temporaries."""
    x_blk = tb * _H * _WP * c_pad * 2                       # bf16 LHS tile
    out_blk = tb * np_ * 4
    weights = (c_pad * 128 + 512 * 768 + 768 * np_) * 2 + (np_ + 256) * 4
    h_f32 = tb * _H * _WP * 128 * 4                         # conv1 output
    pool_tmp = tb * (5 * _WP * 128 + 6 * 128 + 512 + 768) * 4
    return 2 * x_blk + 2 * out_blk + weights + h_f32 + pool_tmp


def _pick_batch_tile(b_pad, c_pad, np_, gen):
    """Largest batch tile (multiple of 8, divides b_pad) fitting the per-gen
    VMEM budget; on v7x keep >= 2 grid steps so both TensorCores get work."""
    budget = {5: 40 << 20, 6: 64 << 20, 7: 40 << 20}.get(gen, 40 << 20)
    candidates = (256, 128, 64, 32, 16, 8) if gen >= 6 else (128, 64, 32, 16, 8)
    max_tb = b_pad
    if gen >= 7 and b_pad >= 16:
        max_tb = (b_pad // 2) // 8 * 8
    tb = 8
    for cand in candidates:
        if (cand <= max_tb and b_pad % cand == 0
                and _vmem_footprint_bytes(cand, c_pad, np_) <= budget):
            tb = cand
            break
    cap = {5: 100 << 20, 6: 100 << 20, 7: 56 << 20}.get(gen, 56 << 20)
    vmem_limit = min(cap, max(32 << 20,
                              _vmem_footprint_bytes(tb, c_pad, np_) + (16 << 20)))
    return tb, int(vmem_limit)


def auxiliary_head_imagenet(x_nchw, params):
    """AuxiliaryHeadImageNet forward. x_nchw: (B, C, 7, 7). Returns (B, num_classes) f32."""
    num_classes = params["num_classes"]
    w1, w2, wl, bl = params["w1"], params["w2"], params["wl"], params["bl"]
    bn_scale, bn_bias = params["bn_scale"], params["bn_bias"]
    c_pad = w1.shape[0]
    NP = wl.shape[1]

    B, C, H, W = x_nchw.shape
    assert (H, W) == (_H, _W), (
        "classifier Linear(768, .) requires the head to be fed 7x7 maps")
    assert C <= c_pad and c_pad % 128 == 0

    # NCHW -> NHWC, zero-pad batch -> mult of 8, W 7->8, C -> Cpad, cast bf16,
    # flatten image rows so the kernel's matmul-1 LHS arrives tile-aligned.
    b_pad = max(8, _round_up(B, 8))
    x = jnp.transpose(x_nchw, (0, 2, 3, 1))
    x = jnp.pad(x, ((0, b_pad - B), (0, 0), (0, _WP - _W), (0, c_pad - C)))
    x2d = x.astype(jnp.bfloat16).reshape(b_pad * _H * _WP, c_pad)

    gen = _tpu_generation()
    TB, vmem_limit = _pick_batch_tile(b_pad, c_pad, NP, gen)
    grid = (b_pad // TB,)

    flops = 2 * b_pad * (_H * _WP * c_pad * 128 + 512 * 768 + 768 * NP)
    bytes_accessed = (x2d.size * 2 + (c_pad * 128 + 512 * 768 + 768 * NP) * 2
                      + (256 + NP) * 4 + b_pad * NP * 4)

    def run(single_buffer_consts):
        const_kw = ({"pipeline_mode": pl.Buffered(1)}
                    if single_buffer_consts else {})
        grid_spec = pltpu.PrefetchScalarGridSpec(
            num_scalar_prefetch=0,
            grid=grid,
            in_specs=[
                pl.BlockSpec((TB * _H * _WP, c_pad), lambda b: (b, 0)),    # x rows
                pl.BlockSpec((c_pad, 128), lambda b: (0, 0), **const_kw),  # w1
                pl.BlockSpec((1, 128), lambda b: (0, 0), **const_kw),      # bn scale
                pl.BlockSpec((1, 128), lambda b: (0, 0), **const_kw),      # bn bias
                pl.BlockSpec((512, 768), lambda b: (0, 0), **const_kw),    # w2
                pl.BlockSpec((768, NP), lambda b: (0, 0), **const_kw),     # wl
                pl.BlockSpec((1, NP), lambda b: (0, 0), **const_kw),       # bl
            ],
            out_specs=pl.BlockSpec((TB, NP), lambda b: (b, 0)),
        )
        return pl.pallas_call(
            _aux_head_kernel,
            out_shape=jax.ShapeDtypeStruct((b_pad, NP), jnp.float32),
            grid_spec=grid_spec,
            compiler_params=pltpu.CompilerParams(
                dimension_semantics=("parallel",),      # megacore-shard batch
                vmem_limit_bytes=vmem_limit),
            cost_estimate=pl.CostEstimate(flops=flops, transcendentals=0,
                                          bytes_accessed=bytes_accessed),
        )(x2d, w1, bn_scale, bn_bias, w2, wl, bl)

    try:
        out = run(True)      # single-buffer the constant weight blocks
    except Exception:
        out = run(False)     # fallback: build without pipeline_mode=Buffered(1)

    return out[:B, :num_classes]


def init_params(key, C, num_classes, eps=1e-5):
    """Deterministic synthetic parameters with the module's shapes, pre-laid-out
    for the kernel (bf16 MXU operands, channel-padded w1, tap-major fused w2,
    lane-padded classifier)."""
    k1, k2, k3, k4 = jax.random.split(key, 4)
    c_pad = _round_up(C, 128)
    NP = _round_up(num_classes, 128)

    # Conv2d(C, 128, 1, bias=False): torch weight (128, C, 1, 1) -> (Cpad, 128) bf16.
    conv1_w = jax.random.normal(k1, (128, C, 1, 1), jnp.float32) * 0.1
    w1 = jnp.zeros((c_pad, 128), jnp.float32).at[:C, :].set(
        jnp.transpose(conv1_w[:, :, 0, 0], (1, 0))).astype(jnp.bfloat16)

    # BatchNorm2d(128): PyTorch-default init, inference mode (running stats folded).
    gamma = jnp.ones((128,), jnp.float32)
    beta = jnp.zeros((128,), jnp.float32)
    running_mean = jnp.zeros((128,), jnp.float32)
    running_var = jnp.ones((128,), jnp.float32)
    scale = gamma / jnp.sqrt(running_var + eps)
    bias = beta - running_mean * scale

    # Conv2d(128, 768, 2, bias=False): torch (768, 128, 2, 2) -> (kh, kw, cin, cout)
    # -> fused (512, 768) tap-major rows, bf16.
    conv2_w = jax.random.normal(k2, (768, 128, 2, 2), jnp.float32) * 0.05
    w2 = jnp.transpose(conv2_w, (2, 3, 1, 0)).reshape(512, 768).astype(jnp.bfloat16)

    # Linear(768, num_classes): torch weight (num_classes, 768), bias (num_classes,),
    # zero-padded along the class axis to a multiple of 128 (lane-dense output).
    lin_w = jax.random.normal(k3, (num_classes, 768), jnp.float32) * 0.05
    lin_b = jax.random.normal(k4, (num_classes,), jnp.float32) * 0.1
    wl = jnp.zeros((768, NP), jnp.float32).at[:, :num_classes].set(
        jnp.transpose(lin_w, (1, 0))).astype(jnp.bfloat16)
    bl = jnp.zeros((1, NP), jnp.float32).at[0, :num_classes].set(lin_b)

    return dict(
        w1=w1,
        bn_scale=scale.reshape(1, 128),
        bn_bias=bias.reshape(1, 128),
        w2=w2,
        wl=wl,
        bl=bl,
        num_classes=num_classes,
    )


def _reference_forward(x_nchw, params):
    """Pure-JAX f32 reference of the PyTorch module (tolerance check only)."""
    num_classes = params["num_classes"]
    B, C, H, W = x_nchw.shape
    w1 = params["w1"].astype(jnp.float32)[:C, :]          # (C, 128)
    scale = params["bn_scale"].reshape(128)
    bias = params["bn_bias"].reshape(128)
    w2 = params["w2"].astype(jnp.float32)                 # (512, 768)
    wl = params["wl"].astype(jnp.float32)                 # (768, NP)
    bl = params["bl"].reshape(-1)

    x = jnp.maximum(x_nchw, 0.0)
    pooled = jnp.stack(
        [jnp.stack([x[:, :, oh * 2:oh * 2 + 5, ow * 2:ow * 2 + 5].mean(axis=(2, 3))
                    for ow in range(2)], axis=-1)
         for oh in range(2)], axis=-2)                    # (B, C, 2, 2)
    h = jnp.einsum("bchw,ck->bkhw", pooled, w1)
    h = jnp.maximum(h * scale[None, :, None, None] + bias[None, :, None, None], 0.0)
    act = jnp.concatenate([h[:, :, kh, kw] for kh in range(2) for kw in range(2)],
                          axis=-1)                        # (B, 512) tap-major
    h2 = jnp.maximum(act @ w2, 0.0)
    return (h2 @ wl + bl)[:, :num_classes]


if __name__ == "__main__":
    key = jax.random.PRNGKey(0)
    kx, kp = jax.random.split(key)

    B, C, H, W, num_classes = 2, 4, 7, 7, 10   # 7x7 implied by Linear(768, .)
    x = jax.random.normal(kx, (B, C, H, W), jnp.float32)   # PyTorch-style NCHW
    params = init_params(kp, C, num_classes)

    out = auxiliary_head_imagenet(x, params)
    jax.block_until_ready(out)
    assert out.shape == (B, num_classes) and out.dtype == jnp.float32

    ref = _reference_forward(x, params)
    max_err = float(jnp.max(jnp.abs(out - ref)))
    assert jnp.allclose(out, ref, rtol=2e-2, atol=2e-2), f"max_abs_err={max_err}"
    print("KERNEL_OK")
</pallas_src>

<mosaic_0001>
module attributes {stable_mosaic.version = 11 : i64} {
  func.func @_aux_head_kernel(%arg0: i32, %arg1: memref<448x128xbf16, #tpu.memory_space<vmem>>, %arg2: memref<128x128xbf16, #tpu.memory_space<vmem>>, %arg3: memref<1x128xf32, #tpu.memory_space<vmem>>, %arg4: memref<1x128xf32, #tpu.memory_space<vmem>>, %arg5: memref<512x768xbf16, #tpu.memory_space<vmem>>, %arg6: memref<768x128xbf16, #tpu.memory_space<vmem>>, %arg7: memref<1x128xf32, #tpu.memory_space<vmem>>, %arg8: memref<8x128xf32, #tpu.memory_space<vmem>>) attributes {dimension_semantics = [#tpu.dimension_semantics<parallel>], iteration_bounds = array<i64: 1>, scalar_prefetch = 0 : i64, scratch_operands = 0 : i64, tpu.core_type = #tpu.core_type<tc>, window_params = [{transform_indices = @transform_0, window_bounds = array<i64: 448, 128>}, {pipeline_mode = #tpu.pipeline_mode<synchronous>, transform_indices = @transform_1, window_bounds = array<i64: 128, 128>}, {pipeline_mode = #tpu.pipeline_mode<synchronous>, transform_indices = @transform_2, window_bounds = array<i64: 1, 128>}, {pipeline_mode = #tpu.pipeline_mode<synchronous>, transform_indices = @transform_3, window_bounds = array<i64: 1, 128>}, {pipeline_mode = #tpu.pipeline_mode<synchronous>, transform_indices = @transform_4, window_bounds = array<i64: 512, 768>}, {pipeline_mode = #tpu.pipeline_mode<synchronous>, transform_indices = @transform_5, window_bounds = array<i64: 768, 128>}, {pipeline_mode = #tpu.pipeline_mode<synchronous>, transform_indices = @transform_6, window_bounds = array<i64: 1, 128>}, {transform_indices = @transform_7, window_bounds = array<i64: 8, 128>}]} {
    %c0 = arith.constant 0 : index
    %c0_0 = arith.constant 0 : index
    %0 = vector.load %arg1[%c0, %c0_0] : memref<448x128xbf16, #tpu.memory_space<vmem>>, vector<448x128xbf16>
    %cst = arith.constant 0.000000e+00 : bf16
    %1 = vector.broadcast %cst : bf16 to vector<448x128xbf16>
    %2 = arith.maximumf %0, %1 : vector<448x128xbf16>
    %c0_1 = arith.constant 0 : index
    %c0_2 = arith.constant 0 : index
    %3 = vector.load %arg2[%c0_1, %c0_2] : memref<128x128xbf16, #tpu.memory_space<vmem>>, vector<128x128xbf16>
    %cst_3 = arith.constant dense<0.000000e+00> : vector<448x128xf32>
    %4 = tpu.matmul %2, %3, %cst_3 {dimension_numbers = #tpu.dot_dimension_numbers<[1], [0], [0], [1], [0, 0, 1, 1], [], []>} : vector<448x128xbf16>, vector<128x128xbf16>, vector<448x128xf32> -> vector<448x128xf32>
    %5 = vector.shape_cast %4 : vector<448x128xf32> to vector<8x7x8x128xf32>
    %6 = vector.extract_strided_slice %5 {offsets = [0, 0, 0, 0], sizes = [8, 2, 8, 128], strides = [1, 1, 1, 1]} : vector<8x7x8x128xf32> to vector<8x2x8x128xf32>
    %cst_4 = arith.constant dense<0.000000e+00> : vector<8x8x128xf32>
    %7 = vector.multi_reduction <add>, %6, %cst_4 [1] : vector<8x2x8x128xf32> to vector<8x8x128xf32>
    %8 = vector.extract_strided_slice %5 {offsets = [0, 2, 0, 0], sizes = [8, 3, 8, 128], strides = [1, 1, 1, 1]} : vector<8x7x8x128xf32> to vector<8x3x8x128xf32>
    %cst_5 = arith.constant dense<0.000000e+00> : vector<8x8x128xf32>
    %9 = vector.multi_reduction <add>, %8, %cst_5 [1] : vector<8x3x8x128xf32> to vector<8x8x128xf32>
    %10 = vector.extract_strided_slice %5 {offsets = [0, 5, 0, 0], sizes = [8, 2, 8, 128], strides = [1, 1, 1, 1]} : vector<8x7x8x128xf32> to vector<8x2x8x128xf32>
    %cst_6 = arith.constant dense<0.000000e+00> : vector<8x8x128xf32>
    %11 = vector.multi_reduction <add>, %10, %cst_6 [1] : vector<8x2x8x128xf32> to vector<8x8x128xf32>
    %12 = arith.addf %7, %9 : vector<8x8x128xf32>
    %13 = arith.addf %9, %11 : vector<8x8x128xf32>
    %c0_7 = arith.constant 0 : index
    %c0_8 = arith.constant 0 : index
    %14 = vector.load %arg3[%c0_7, %c0_8] : memref<1x128xf32, #tpu.memory_space<vmem>>, vector<1x128xf32>
    %cst_9 = arith.constant 4.000000e-02 : f32
    %15 = vector.broadcast %cst_9 : f32 to vector<1x128xf32>
    %16 = arith.mulf %14, %15 : vector<1x128xf32>
    %17 = vector.shape_cast %16 : vector<1x128xf32> to vector<1x128xf32>
    %18 = vector.broadcast %17 : vector<1x128xf32> to vector<8x128xf32>
    %c0_10 = arith.constant 0 : index
    %c0_11 = arith.constant 0 : index
    %19 = vector.load %arg4[%c0_10, %c0_11] : memref<1x128xf32, #tpu.memory_space<vmem>>, vector<1x128xf32>
    %20 = vector.shape_cast %19 : vector<1x128xf32> to vector<1x128xf32>
    %21 = vector.broadcast %20 : vector<1x128xf32> to vector<8x128xf32>
    %22 = vector.extract_strided_slice %12 {offsets = [0, 0, 0], sizes = [8, 2, 128], strides = [1, 1, 1]} : vector<8x8x128xf32> to vector<8x2x128xf32>
    %cst_12 = arith.constant dense<0.000000e+00> : vector<8x128xf32>
    %23 = vector.multi_reduction <add>, %22, %cst_12 [1] : vector<8x2x128xf32> to vector<8x128xf32>
    %24 = vector.extract_strided_slice %12 {offsets = [0, 2, 0], sizes = [8, 3, 128], strides = [1, 1, 1]} : vector<8x8x128xf32> to vector<8x3x128xf32>
    %cst_13 = arith.constant dense<0.000000e+00> : vector<8x128xf32>
    %25 = vector.multi_reduction <add>, %24, %cst_13 [1] : vector<8x3x128xf32> to vector<8x128xf32>
    %26 = vector.extract_strided_slice %12 {offsets = [0, 5, 0], sizes = [8, 2, 128], strides = [1, 1, 1]} : vector<8x8x128xf32> to vector<8x2x128xf32>
    %cst_14 = arith.constant dense<0.000000e+00> : vector<8x128xf32>
    %27 = vector.multi_reduction <add>, %26, %cst_14 [1] : vector<8x2x128xf32> to vector<8x128xf32>
    %28 = arith.addf %23, %25 : vector<8x128xf32>
    %29 = arith.addf %25, %27 : vector<8x128xf32>
    %30 = vector.extract_strided_slice %13 {offsets = [0, 0, 0], sizes = [8, 2, 128], strides = [1, 1, 1]} : vector<8x8x128xf32> to vector<8x2x128xf32>
    %cst_15 = arith.constant dense<0.000000e+00> : vector<8x128xf32>
    %31 = vector.multi_reduction <add>, %30, %cst_15 [1] : vector<8x2x128xf32> to vector<8x128xf32>
    %32 = vector.extract_strided_slice %13 {offsets = [0, 2, 0], sizes = [8, 3, 128], strides = [1, 1, 1]} : vector<8x8x128xf32> to vector<8x3x128xf32>
    %cst_16 = arith.constant dense<0.000000e+00> : vector<8x128xf32>
    %33 = vector.multi_reduction <add>, %32, %cst_16 [1] : vector<8x3x128xf32> to vector<8x128xf32>
    %34 = vector.extract_strided_slice %13 {offsets = [0, 5, 0], sizes = [8, 2, 128], strides = [1, 1, 1]} : vector<8x8x128xf32> to vector<8x2x128xf32>
    %cst_17 = arith.constant dense<0.000000e+00> : vector<8x128xf32>
    %35 = vector.multi_reduction <add>, %34, %cst_17 [1] : vector<8x2x128xf32> to vector<8x128xf32>
    %36 = arith.addf %31, %33 : vector<8x128xf32>
    %37 = arith.addf %33, %35 : vector<8x128xf32>
    %38 = arith.mulf %28, %18 : vector<8x128xf32>
    %39 = arith.addf %38, %21 : vector<8x128xf32>
    %cst_18 = arith.constant 0.000000e+00 : f32
    %40 = vector.broadcast %cst_18 : f32 to vector<8x128xf32>
    %41 = arith.maximumf %39, %40 : vector<8x128xf32>
    %42 = arith.mulf %29, %18 : vector<8x128xf32>
    %43 = arith.addf %42, %21 : vector<8x128xf32>
    %cst_19 = arith.constant 0.000000e+00 : f32
    %44 = vector.broadcast %cst_19 : f32 to vector<8x128xf32>
    %45 = arith.maximumf %43, %44 : vector<8x128xf32>
    %46 = arith.mulf %36, %18 : vector<8x128xf32>
    %47 = arith.addf %46, %21 : vector<8x128xf32>
    %cst_20 = arith.constant 0.000000e+00 : f32
    %48 = vector.broadcast %cst_20 : f32 to vector<8x128xf32>
    %49 = arith.maximumf %47, %48 : vector<8x128xf32>
    %50 = arith.mulf %37, %18 : vector<8x128xf32>
    %51 = arith.addf %50, %21 : vector<8x128xf32>
    %cst_21 = arith.constant 0.000000e+00 : f32
    %52 = vector.broadcast %cst_21 : f32 to vector<8x128xf32>
    %53 = arith.maximumf %51, %52 : vector<8x128xf32>
    %54 = tpu.concatenate %41, %45, %49, %53 in 1 : vector<8x128xf32>, vector<8x128xf32>, vector<8x128xf32>, vector<8x128xf32> -> vector<8x512xf32>
    %55 = arith.truncf %54 : vector<8x512xf32> to vector<8x512xbf16>
    %c0_22 = arith.constant 0 : index
    %c0_23 = arith.constant 0 : index
    %56 = vector.load %arg5[%c0_22, %c0_23] : memref<512x768xbf16, #tpu.memory_space<vmem>>, vector<512x768xbf16>
    %cst_24 = arith.constant dense<0.000000e+00> : vector<8x768xf32>
    %57 = tpu.matmul %55, %56, %cst_24 {dimension_numbers = #tpu.dot_dimension_numbers<[1], [0], [0], [1], [0, 0, 1, 1], [], []>} : vector<8x512xbf16>, vector<512x768xbf16>, vector<8x768xf32> -> vector<8x768xf32>
    %cst_25 = arith.constant 0.000000e+00 : f32
    %58 = vector.broadcast %cst_25 : f32 to vector<8x768xf32>
    %59 = arith.maximumf %57, %58 : vector<8x768xf32>
    %60 = arith.truncf %59 : vector<8x768xf32> to vector<8x768xbf16>
    %c0_26 = arith.constant 0 : index
    %c0_27 = arith.constant 0 : index
    %61 = vector.load %arg6[%c0_26, %c0_27] : memref<768x128xbf16, #tpu.memory_space<vmem>>, vector<768x128xbf16>
    %cst_28 = arith.constant dense<0.000000e+00> : vector<8x128xf32>
    %62 = tpu.matmul %60, %61, %cst_28 {dimension_numbers = #tpu.dot_dimension_numbers<[1], [0], [0], [1], [0, 0, 1, 1], [], []>} : vector<8x768xbf16>, vector<768x128xbf16>, vector<8x128xf32> -> vector<8x128xf32>
    %c0_29 = arith.constant 0 : index
    %c0_30 = arith.constant 0 : index
    %63 = vector.load %arg7[%c0_29, %c0_30] : memref<1x128xf32, #tpu.memory_space<vmem>>, vector<1x128xf32>
    %64 = vector.broadcast %63 : vector<1x128xf32> to vector<8x128xf32>
    %65 = arith.addf %62, %64 : vector<8x128xf32>
    %c0_31 = arith.constant 0 : index
    %c0_32 = arith.constant 0 : index
    %66 = vector.load %arg8[%c0_31, %c0_32] : memref<8x128xf32, #tpu.memory_space<vmem>>, vector<8x128xf32>
    tpu.vector_store %arg8[%c0_31, %c0_32], %65 {strides = array<i32>} : memref<8x128xf32, #tpu.memory_space<vmem>>, vector<8x128xf32>,
    return
  }
  func.func @transform_0(%arg0: i32) -> (i32, i32) {
    %c0_i32 = arith.constant 0 : i32
    %c0_i32_0 = arith.constant 0 : i32
    return %arg0, %c0_i32 : i32, i32
  }
  func.func @transform_1(%arg0: i32) -> (i32, i32) {
    %c0_i32 = arith.constant 0 : i32
    %c0_i32_0 = arith.constant 0 : i32
    %c0_i32_1 = arith.constant 0 : i32
    return %c0_i32, %c0_i32_0 : i32, i32
  }
  func.func @transform_2(%arg0: i32) -> (i32, i32) {
    %c0_i32 = arith.constant 0 : i32
    %c0_i32_0 = arith.constant 0 : i32
    %c0_i32_1 = arith.constant 0 : i32
    return %c0_i32, %c0_i32_0 : i32, i32
  }
  func.func @transform_3(%arg0: i32) -> (i32, i32) {
    %c0_i32 = arith.constant 0 : i32
    %c0_i32_0 = arith.constant 0 : i32
    %c0_i32_1 = arith.constant 0 : i32
    return %c0_i32, %c0_i32_0 : i32, i32
  }
  func.func @transform_4(%arg0: i32) -> (i32, i32) {
    %c0_i32 = arith.constant 0 : i32
    %c0_i32_0 = arith.constant 0 : i32
    %c0_i32_1 = arith.constant 0 : i32
    return %c0_i32, %c0_i32_0 : i32, i32
  }
  func.func @transform_5(%arg0: i32) -> (i32, i32) {
    %c0_i32 = arith.constant 0 : i32
    %c0_i32_0 = arith.constant 0 : i32
    %c0_i32_1 = arith.constant 0 : i32
    return %c0_i32, %c0_i32_0 : i32, i32
  }
  func.func @transform_6(%arg0: i32) -> (i32, i32) {
    %c0_i32 = arith.constant 0 : i32
    %c0_i32_0 = arith.constant 0 : i32
    %c0_i32_1 = arith.constant 0 : i32
    return %c0_i32, %c0_i32_0 : i32, i32
  }
  func.func @transform_7(%arg0: i32) -> (i32, i32) {
    %c0_i32 = arith.constant 0 : i32
    %c0_i32_0 = arith.constant 0 : i32
    return %arg0, %c0_i32 : i32, i32
  }
}

module attributes {stable_mosaic.version = 11 : i64} {
  func.func @_aux_head_kernel(%arg0: i32, %arg1: memref<448x128xbf16, #tpu.memory_space<vmem>>, %arg2: memref<128x128xbf16, #tpu.memory_space<vmem>>, %arg3: memref<1x128xf32, #tpu.memory_space<vmem>>, %arg4: memref<1x128xf32, #tpu.memory_space<vmem>>, %arg5: memref<512x768xbf16, #tpu.memory_space<vmem>>, %arg6: memref<768x128xbf16, #tpu.memory_space<vmem>>, %arg7: memref<1x128xf32, #tpu.memory_space<vmem>>, %arg8: memref<8x128xf32, #tpu.memory_space<vmem>>) attributes {dimension_semantics = [#tpu.dimension_semantics<parallel>], iteration_bounds = array<i64: 1>, scalar_prefetch = 0 : i64, scratch_operands = 0 : i64, tpu.core_type = #tpu.core_type<tc>, window_params = [{transform_indices = @transform_0, window_bounds = array<i64: 448, 128>}, {pipeline_mode = #tpu.pipeline_mode<synchronous>, transform_indices = @transform_1, window_bounds = array<i64: 128, 128>}, {pipeline_mode = #tpu.pipeline_mode<synchronous>, transform_indices = @transform_2, window_bounds = array<i64: 1, 128>}, {pipeline_mode = #tpu.pipeline_mode<synchronous>, transform_indices = @transform_3, window_bounds = array<i64: 1, 128>}, {pipeline_mode = #tpu.pipeline_mode<synchronous>, transform_indices = @transform_4, window_bounds = array<i64: 512, 768>}, {pipeline_mode = #tpu.pipeline_mode<synchronous>, transform_indices = @transform_5, window_bounds = array<i64: 768, 128>}, {pipeline_mode = #tpu.pipeline_mode<synchronous>, transform_indices = @transform_6, window_bounds = array<i64: 1, 128>}, {transform_indices = @transform_7, window_bounds = array<i64: 8, 128>}]} {
    %c0 = arith.constant 0 : index
    %c0_0 = arith.constant 0 : index
    %0 = vector.load %arg1[%c0, %c0_0] : memref<448x128xbf16, #tpu.memory_space<vmem>>, vector<448x128xbf16>
    %cst = arith.constant 0.000000e+00 : bf16
    %1 = vector.broadcast %cst : bf16 to vector<448x128xbf16>
    %2 = arith.maximumf %0, %1 : vector<448x128xbf16>
    %c0_1 = arith.constant 0 : index
    %c0_2 = arith.constant 0 : index
    %3 = vector.load %arg2[%c0_1, %c0_2] : memref<128x128xbf16, #tpu.memory_space<vmem>>, vector<128x128xbf16>
    %cst_3 = arith.constant dense<0.000000e+00> : vector<448x128xf32>
    %4 = tpu.matmul %2, %3, %cst_3 {dimension_numbers = #tpu.dot_dimension_numbers<[1], [0], [0], [1], [0, 0, 1, 1], [], []>} : vector<448x128xbf16>, vector<128x128xbf16>, vector<448x128xf32> -> vector<448x128xf32>
    %5 = vector.shape_cast %4 : vector<448x128xf32> to vector<8x7x8x128xf32>
    %6 = vector.extract_strided_slice %5 {offsets = [0, 0, 0, 0], sizes = [8, 2, 8, 128], strides = [1, 1, 1, 1]} : vector<8x7x8x128xf32> to vector<8x2x8x128xf32>
    %cst_4 = arith.constant dense<0.000000e+00> : vector<8x8x128xf32>
    %7 = vector.multi_reduction <add>, %6, %cst_4 [1] : vector<8x2x8x128xf32> to vector<8x8x128xf32>
    %8 = vector.extract_strided_slice %5 {offsets = [0, 2, 0, 0], sizes = [8, 3, 8, 128], strides = [1, 1, 1, 1]} : vector<8x7x8x128xf32> to vector<8x3x8x128xf32>
    %cst_5 = arith.constant dense<0.000000e+00> : vector<8x8x128xf32>
    %9 = vector.multi_reduction <add>, %8, %cst_5 [1] : vector<8x3x8x128xf32> to vector<8x8x128xf32>
    %10 = vector.extract_strided_slice %5 {offsets = [0, 5, 0, 0], sizes = [8, 2, 8, 128], strides = [1, 1, 1, 1]} : vector<8x7x8x128xf32> to vector<8x2x8x128xf32>
    %cst_6 = arith.constant dense<0.000000e+00> : vector<8x8x128xf32>
    %11 = vector.multi_reduction <add>, %10, %cst_6 [1] : vector<8x2x8x128xf32> to vector<8x8x128xf32>
    %12 = arith.addf %7, %9 : vector<8x8x128xf32>
    %13 = arith.addf %9, %11 : vector<8x8x128xf32>
    %c0_7 = arith.constant 0 : index
    %c0_8 = arith.constant 0 : index
    %14 = vector.load %arg3[%c0_7, %c0_8] : memref<1x128xf32, #tpu.memory_space<vmem>>, vector<1x128xf32>
    %cst_9 = arith.constant 4.000000e-02 : f32
    %15 = vector.broadcast %cst_9 : f32 to vector<1x128xf32>
    %16 = arith.mulf %14, %15 : vector<1x128xf32>
    %17 = vector.shape_cast %16 : vector<1x128xf32> to vector<1x128xf32>
    %18 = vector.broadcast %17 : vector<1x128xf32> to vector<8x128xf32>
    %c0_10 = arith.constant 0 : index
    %c0_11 = arith.constant 0 : index
    %19 = vector.load %arg4[%c0_10, %c0_11] : memref<1x128xf32, #tpu.memory_space<vmem>>, vector<1x128xf32>
    %20 = vector.shape_cast %19 : vector<1x128xf32> to vector<1x128xf32>
    %21 = vector.broadcast %20 : vector<1x128xf32> to vector<8x128xf32>
    %22 = vector.extract_strided_slice %12 {offsets = [0, 0, 0], sizes = [8, 2, 128], strides = [1, 1, 1]} : vector<8x8x128xf32> to vector<8x2x128xf32>
    %cst_12 = arith.constant dense<0.000000e+00> : vector<8x128xf32>
    %23 = vector.multi_reduction <add>, %22, %cst_12 [1] : vector<8x2x128xf32> to vector<8x128xf32>
    %24 = vector.extract_strided_slice %12 {offsets = [0, 2, 0], sizes = [8, 3, 128], strides = [1, 1, 1]} : vector<8x8x128xf32> to vector<8x3x128xf32>
    %cst_13 = arith.constant dense<0.000000e+00> : vector<8x128xf32>
    %25 = vector.multi_reduction <add>, %24, %cst_13 [1] : vector<8x3x128xf32> to vector<8x128xf32>
    %26 = vector.extract_strided_slice %12 {offsets = [0, 5, 0], sizes = [8, 2, 128], strides = [1, 1, 1]} : vector<8x8x128xf32> to vector<8x2x128xf32>
    %cst_14 = arith.constant dense<0.000000e+00> : vector<8x128xf32>
    %27 = vector.multi_reduction <add>, %26, %cst_14 [1] : vector<8x2x128xf32> to vector<8x128xf32>
    %28 = arith.addf %23, %25 : vector<8x128xf32>
    %29 = arith.addf %25, %27 : vector<8x128xf32>
    %30 = vector.extract_strided_slice %13 {offsets = [0, 0, 0], sizes = [8, 2, 128], strides = [1, 1, 1]} : vector<8x8x128xf32> to vector<8x2x128xf32>
    %cst_15 = arith.constant dense<0.000000e+00> : vector<8x128xf32>
    %31 = vector.multi_reduction <add>, %30, %cst_15 [1] : vector<8x2x128xf32> to vector<8x128xf32>
    %32 = vector.extract_strided_slice %13 {offsets = [0, 2, 0], sizes = [8, 3, 128], strides = [1, 1, 1]} : vector<8x8x128xf32> to vector<8x3x128xf32>
    %cst_16 = arith.constant dense<0.000000e+00> : vector<8x128xf32>
    %33 = vector.multi_reduction <add>, %32, %cst_16 [1] : vector<8x3x128xf32> to vector<8x128xf32>
    %34 = vector.extract_strided_slice %13 {offsets = [0, 5, 0], sizes = [8, 2, 128], strides = [1, 1, 1]} : vector<8x8x128xf32> to vector<8x2x128xf32>
    %cst_17 = arith.constant dense<0.000000e+00> : vector<8x128xf32>
    %35 = vector.multi_reduction <add>, %34, %cst_17 [1] : vector<8x2x128xf32> to vector<8x128xf32>
    %36 = arith.addf %31, %33 : vector<8x128xf32>
    %37 = arith.addf %33, %35 : vector<8x128xf32>
    %38 = arith.mulf %28, %18 : vector<8x128xf32>
    %39 = arith.addf %38, %21 : vector<8x128xf32>
    %cst_18 = arith.constant 0.000000e+00 : f32
    %40 = vector.broadcast %cst_18 : f32 to vector<8x128xf32>
    %41 = arith.maximumf %39, %40 : vector<8x128xf32>
    %42 = arith.mulf %29, %18 : vector<8x128xf32>
    %43 = arith.addf %42, %21 : vector<8x128xf32>
    %cst_19 = arith.constant 0.000000e+00 : f32
    %44 = vector.broadcast %cst_19 : f32 to vector<8x128xf32>
    %45 = arith.maximumf %43, %44 : vector<8x128xf32>
    %46 = arith.mulf %36, %18 : vector<8x128xf32>
    %47 = arith.addf %46, %21 : vector<8x128xf32>
    %cst_20 = arith.constant 0.000000e+00 : f32
    %48 = vector.broadcast %cst_20 : f32 to vector<8x128xf32>
    %49 = arith.maximumf %47, %48 : vector<8x128xf32>
    %50 = arith.mulf %37, %18 : vector<8x128xf32>
    %51 = arith.addf %50, %21 : vector<8x128xf32>
    %cst_21 = arith.constant 0.000000e+00 : f32
    %52 = vector.broadcast %cst_21 : f32 to vector<8x128xf32>
    %53 = arith.maximumf %51, %52 : vector<8x128xf32>
    %54 = tpu.concatenate %41, %45, %49, %53 in 1 : vector<8x128xf32>, vector<8x128xf32>, vector<8x128xf32>, vector<8x128xf32> -> vector<8x512xf32>
    %55 = arith.truncf %54 : vector<8x512xf32> to vector<8x512xbf16>
    %c0_22 = arith.constant 0 : index
    %c0_23 = arith.constant 0 : index
    %56 = vector.load %arg5[%c0_22, %c0_23] : memref<512x768xbf16, #tpu.memory_space<vmem>>, vector<512x768xbf16>
    %cst_24 = arith.constant dense<0.000000e+00> : vector<8x768xf32>
    %57 = tpu.matmul %55, %56, %cst_24 {dimension_numbers = #tpu.dot_dimension_numbers<[1], [0], [0], [1], [0, 0, 1, 1], [], []>} : vector<8x512xbf16>, vector<512x768xbf16>, vector<8x768xf32> -> vector<8x768xf32>
    %cst_25 = arith.constant 0.000000e+00 : f32
    %58 = vector.broadcast %cst_25 : f32 to vector<8x768xf32>
    %59 = arith.maximumf %57, %58 : vector<8x768xf32>
    %60 = arith.truncf %59 : vector<8x768xf32> to vector<8x768xbf16>
    %c0_26 = arith.constant 0 : index
    %c0_27 = arith.constant 0 : index
    %61 = vector.load %arg6[%c0_26, %c0_27] : memref<768x128xbf16, #tpu.memory_space<vmem>>, vector<768x128xbf16>
    %cst_28 = arith.constant dense<0.000000e+00> : vector<8x128xf32>
    %62 = tpu.matmul %60, %61, %cst_28 {dimension_numbers = #tpu.dot_dimension_numbers<[1], [0], [0], [1], [0, 0, 1, 1], [], []>} : vector<8x768xbf16>, vector<768x128xbf16>, vector<8x128xf32> -> vector<8x128xf32>
    %c0_29 = arith.constant 0 : index
    %c0_30 = arith.constant 0 : index
    %63 = vector.load %arg7[%c0_29, %c0_30] : memref<1x128xf32, #tpu.memory_space<vmem>>, vector<1x128xf32>
    %64 = vector.broadcast %63 : vector<1x128xf32> to vector<8x128xf32>
    %65 = arith.addf %62, %64 : vector<8x128xf32>
    %c0_31 = arith.constant 0 : index
    %c0_32 = arith.constant 0 : index
    %66 = vector.load %arg8[%c0_31, %c0_32] : memref<8x128xf32, #tpu.memory_space<vmem>>, vector<8x128xf32>
    tpu.vector_store %arg8[%c0_31, %c0_32], %65 {strides = array<i32>} : memref<8x128xf32, #tpu.memory_space<vmem>>, vector<8x128xf32>,
    return
  }
  func.func @transform_0(%arg0: i32) -> (i32, i32) {
    %c0_i32 = arith.constant 0 : i32
    %c0_i32_0 = arith.constant 0 : i32
    return %arg0, %c0_i32 : i32, i32
  }
  func.func @transform_1(%arg0: i32) -> (i32, i32) {
    %c0_i32 = arith.constant 0 : i32
    %c0_i32_0 = arith.constant 0 : i32
    %c0_i32_1 = arith.constant 0 : i32
    return %c0_i32, %c0_i32_0 : i32, i32
  }
  func.func @transform_2(%arg0: i32) -> (i32, i32) {
    %c0_i32 = arith.constant 0 : i32
    %c0_i32_0 = arith.constant 0 : i32
    %c0_i32_1 = arith.constant 0 : i32
    return %c0_i32, %c0_i32_0 : i32, i32
  }
  func.func @transform_3(%arg0: i32) -> (i32, i32) {
    %c0_i32 = arith.constant 0 : i32
    %c0_i32_0 = arith.constant 0 : i32
    %c0_i32_1 = arith.constant 0 : i32
    return %c0_i32, %c0_i32_0 : i32, i32
  }
  func.func @transform_4(%arg0: i32) -> (i32, i32) {
    %c0_i32 = arith.constant 0 : i32
    %c0_i32_0 = arith.constant 0 : i32
    %c0_i32_1 = arith.constant 0 : i32
    return %c0_i32, %c0_i32_0 : i32, i32
  }
  func.func @transform_5(%arg0: i32) -> (i32, i32) {
    %c0_i32 = arith.constant 0 : i32
    %c0_i32_0 = arith.constant 0 : i32
    %c0_i32_1 = arith.constant 0 : i32
    return %c0_i32, %c0_i32_0 : i32, i32
  }
  func.func @transform_6(%arg0: i32) -> (i32, i32) {
    %c0_i32 = arith.constant 0 : i32
    %c0_i32_0 = arith.constant 0 : i32
    %c0_i32_1 = arith.constant 0 : i32
    return %c0_i32, %c0_i32_0 : i32, i32
  }
  func.func @transform_7(%arg0: i32) -> (i32, i32) {
    %c0_i32 = arith.constant 0 : i32
    %c0_i32_0 = arith.constant 0 : i32
    return %arg0, %c0_i32 : i32, i32
  }
}

</mosaic_0001>

<llo_original>
// kernel: tpu_custom_call.1
$region0: #{tpu_custom_call.1}
  #allocation0 [shape = 'u32[]', space=smem, size = 0x4, offset = 0x4, fixed_abs, tag = 'smem constant byte address 0x4 - core index']
  #allocation1 [shape = 'u32[144,128]{1,0:T(1,128)}', space=vmem, size = 0x12000, scoped, tag = 'internal scratch']
  %s0 = inlined_call_operand.hbm [shape: bf16[448,128], index: 0, kind: input, shape index: {}]
  %s1 = inlined_call_operand.hbm [shape: bf16[128,128], index: 1, kind: input, shape index: {}]
  %s2 = inlined_call_operand.vmem [shape: f32[1,128], index: 2, kind: input, shape index: {}]
  %s3 = inlined_call_operand.vmem [shape: f32[1,128], index: 3, kind: input, shape index: {}]
  %s4 = inlined_call_operand.hbm [shape: bf16[512,768], index: 4, kind: input, shape index: {}]
  %s5 = inlined_call_operand.hbm [shape: bf16[768,128], index: 5, kind: input, shape index: {}]
  %s6 = inlined_call_operand.vmem [shape: f32[1,128], index: 6, kind: input, shape index: {}]
  %s7 = inlined_call_operand.hbm [shape: f32[8,128], index: 7, kind: output, shape index: {}]
  %s8 = sld [smem:[#allocation0]]
  $region54: #{tpu_custom_call.1} parent=0
    _
  %s10 = ssub.s32 1, %s8
  %s11 = scalar_select 0, %s10, %s8
  $region1: #{tpu_custom_call.1} parent=0
    #allocation2 [shape = 'u8[114688]{0}', space=vmem, size = 0x1c000, scoped, tag = 'input window, operand 0, single buffered']
    #allocation3 [shape = 's32[1]{0}', space=sflag, size = 0x4, scoped, tag = 'scoped memory for tpu_custom_call.1']
    #allocation4 [shape = 's32[1]{0}', space=sflag, size = 0x4, scoped, tag = 'scoped memory for tpu_custom_call.1']
    #allocation5 [shape = 'u8[32768]{0}', space=vmem, size = 0x8000, scoped, tag = 'input window, operand 1, single buffered']
    #allocation6 [shape = 's32[1]{0}', space=sflag, size = 0x4, scoped, tag = 'scoped memory for tpu_custom_call.1']
    #allocation7 [shape = 'u8[786432]{0}', space=vmem, size = 0xc0000, scoped, tag = 'input window, operand 4, single buffered']
    #allocation8 [shape = 'u8[196608]{0}', space=vmem, size = 0x30000, scoped, tag = 'input window, operand 5, single buffered']
    #allocation9 [shape = 's32[1]{0}', space=sflag, size = 0x4, scoped, tag = 'scoped memory for tpu_custom_call.1']
    #allocation10 [shape = 'u8[4096]{0}', space=vmem, size = 0x1000, scoped, tag = 'output window, operand 0, single buffered']
    %12 = vsyncpa [#allocation3], 0
    %13 = vsyncpa [#allocation6], 0
    %14 = vsyncpa [#allocation9], 0
    %15 = vsyncpa [#allocation4], 0
    // Predicated region
    $region2: #{tpu_custom_call.1} parent=1 // pred_check
      _
    $region3: #{tpu_custom_call.1} parent=1 // pred_check_branch
      %17 = sbr.rel (0) target = $region5
    $region4: #{tpu_custom_call.1} parent=1 // pred_region
      %s19 = ssub.s32 3584, 3584
      %20 = vsyncadd [#allocation3], %s19
      %s21 = sshll.u32 [#allocation2], 4
      %s22 = int_to_ptr.vmem [resolvable:$true] %s21
      %27 = dma.hbm_to_vmem [thread:$0]  %s0, 3584, %s22, [#allocation3], 64, 64, 4
    $region5: #{tpu_custom_call.1} parent=1 // pred_fallthru
      _
    // Predicated region
    $region6: #{tpu_custom_call.1} parent=1 // pred_check
      _
    $region7: #{tpu_custom_call.1} parent=1 // pred_check_branch
      %29 = sbr.rel (0) target = $region9
    $region8: #{tpu_custom_call.1} parent=1 // pred_region
      %s31 = ssub.s32 1024, 1024
      %32 = vsyncadd [#allocation6], %s31
      %s33 = sshll.u32 [#allocation5], 4
      %s34 = int_to_ptr.vmem [resolvable:$true] %s33
      %39 = dma.hbm_to_vmem [thread:$0]  %s1, 1024, %s34, [#allocation6], 64, 64, 4
    $region9: #{tpu_custom_call.1} parent=1 // pred_fallthru
      _
    // Predicated region
    $region10: #{tpu_custom_call.1} parent=1 // pred_check
      _
    $region11: #{tpu_custom_call.1} parent=1 // pred_check_branch
      %41 = sbr.rel (0) target = $region13
    $region12: #{tpu_custom_call.1} parent=1 // pred_region
      _
    $region13: #{tpu_custom_call.1} parent=1 // pred_fallthru
      _
    // Predicated region
    $region14: #{tpu_custom_call.1} parent=1 // pred_check
      _
    $region15: #{tpu_custom_call.1} parent=1 // pred_check_branch
      %43 = sbr.rel (0) target = $region17
    $region16: #{tpu_custom_call.1} parent=1 // pred_region
      _
    $region17: #{tpu_custom_call.1} parent=1 // pred_fallthru
      _
    // Predicated region
    $region18: #{tpu_custom_call.1} parent=1 // pred_check
      _
    $region19: #{tpu_custom_call.1} parent=1 // pred_check_branch
      %45 = sbr.rel (0) target = $region21
    $region20: #{tpu_custom_call.1} parent=1 // pred_region
      %s47 = ssub.s32 24576, 24576
      %48 = vsyncadd [#allocation6], %s47
      %s49 = sshll.u32 [#allocation7], 4
      %s50 = int_to_ptr.vmem [resolvable:$true] %s49
      %55 = dma.hbm_to_vmem [thread:$0]  %s4, 24576, %s50, [#allocation6], 384, 384, 24
    $region21: #{tpu_custom_call.1} parent=1 // pred_fallthru
      _
    // Predicated region
    $region22: #{tpu_custom_call.1} parent=1 // pred_check
      _
    $region23: #{tpu_custom_call.1} parent=1 // pred_check_branch
      %57 = sbr.rel (0) target = $region25
    $region24: #{tpu_custom_call.1} parent=1 // pred_region
      %s59 = ssub.s32 6144, 6144
      %60 = vsyncadd [#allocation9], %s59
      %s61 = sshll.u32 [#allocation8], 4
      %s62 = int_to_ptr.vmem [resolvable:$true] %s61
      %67 = dma.hbm_to_vmem [thread:$0]  %s5, 6144, %s62, [#allocation9], 64, 64, 4
    $region25: #{tpu_custom_call.1} parent=1 // pred_fallthru
      _
    // Predicated region
    $region26: #{tpu_custom_call.1} parent=1 // pred_check
      _
    $region27: #{tpu_custom_call.1} parent=1 // pred_check_branch
      %69 = sbr.rel (0) target = $region29
    $region28: #{tpu_custom_call.1} parent=1 // pred_region
      _
    $region29: #{tpu_custom_call.1} parent=1 // pred_fallthru
      _
    // Predicated region
    $region30: #{tpu_custom_call.1} parent=1 // pred_check
      _
    $region31: #{tpu_custom_call.1} parent=1 // pred_check_branch
      %71 = sbr.rel (0) target = $region33
    $region32: #{tpu_custom_call.1} parent=1 // pred_region
      %72 = dma.done [#allocation3], 3584
    $region33: #{tpu_custom_call.1} parent=1 // pred_fallthru
      _
    // Predicated region
    $region34: #{tpu_custom_call.1} parent=1 // pred_check
      _
    $region35: #{tpu_custom_call.1} parent=1 // pred_check_branch
      %74 = sbr.rel (0) target = $region37
    $region36: #{tpu_custom_call.1} parent=1 // pred_region
      %75 = dma.done [#allocation6], 1024
    $region37: #{tpu_custom_call.1} parent=1 // pred_fallthru
      _
    // Predicated region
    $region38: #{tpu_custom_call.1} parent=1 // pred_check
      _
    $region39: #{tpu_custom_call.1} parent=1 // pred_check_branch
      %77 = sbr.rel (0) target = $region41
    $region40: #{tpu_custom_call.1} parent=1 // pred_region
      %78 = dma.done [#allocation6], 24576
    $region41: #{tpu_custom_call.1} parent=1 // pred_fallthru
      _
    // Predicated region
    $region42: #{tpu_custom_call.1} parent=1 // pred_check
      _
    $region43: #{tpu_custom_call.1} parent=1 // pred_check_branch
      %80 = sbr.rel (0) target = $region45
    $region44: #{tpu_custom_call.1} parent=1 // pred_region
      %81 = dma.done [#allocation9], 6144
    $region45: #{tpu_custom_call.1} parent=1 // pred_fallthru
      _
    %v83 = vld [vmem:[#allocation2] sm:$0xf]
    %v84 = vld [vmem:[#allocation2 + $0x4] sm:$0xf]
    %v85 = vld [vmem:[#allocation2 + $0x8] sm:$0xf]
    %v86 = vld [vmem:[#allocation2 + $0xc] sm:$0xf]
    %v87 = vld [vmem:[#allocation2 + $0x10] sm:$0xf]
    %v88 = vld [vmem:[#allocation2 + $0x14] sm:$0xf]
    %v89 = vld [vmem:[#allocation2 + $0x18] sm:$0xf]
    %v90 = vld [vmem:[#allocation2 + $0x1c] sm:$0xf]
    %v91 = vld [vmem:[#allocation2 + $0x20] sm:$0xf]
    %v92 = vld [vmem:[#allocation2 + $0x24] sm:$0xf]
    %v93 = vld [vmem:[#allocation2 + $0x28] sm:$0xf]
    %v94 = vld [vmem:[#allocation2 + $0x2c] sm:$0xf]
    %v95 = vld [vmem:[#allocation2 + $0x30] sm:$0xf]
    %v96 = vld [vmem:[#allocation2 + $0x34] sm:$0xf]
    %v97 = vld [vmem:[#allocation2 + $0x38] sm:$0xf]
    %v98 = vld [vmem:[#allocation2 + $0x3c] sm:$0xf]
    %v99 = vld [vmem:[#allocation2 + $0x40] sm:$0xf]
    %v100 = vld [vmem:[#allocation2 + $0x44] sm:$0xf]
    %v101 = vld [vmem:[#allocation2 + $0x48] sm:$0xf]
    %v102 = vld [vmem:[#allocation2 + $0x4c] sm:$0xf]
    %v103 = vld [vmem:[#allocation2 + $0x50] sm:$0xf]
    %v104 = vld [vmem:[#allocation2 + $0x54] sm:$0xf]
    %v105 = vld [vmem:[#allocation2 + $0x58] sm:$0xf]
    %v106 = vld [vmem:[#allocation2 + $0x5c] sm:$0xf]
    %v107 = vld [vmem:[#allocation2 + $0x60] sm:$0xf]
    %v108 = vld [vmem:[#allocation2 + $0x64] sm:$0xf]
    %v109 = vld [vmem:[#allocation2 + $0x68] sm:$0xf]
    %v110 = vld [vmem:[#allocation2 + $0x6c] sm:$0xf]
    %v111 = vld [vmem:[#allocation2 + $0x70] sm:$0xf]
    %v112 = vld [vmem:[#allocation2 + $0x74] sm:$0xf]
    %v113 = vld [vmem:[#allocation2 + $0x78] sm:$0xf]
    %v114 = vld [vmem:[#allocation2 + $0x7c] sm:$0xf]
    %v115 = vld [vmem:[#allocation2 + $0x80] sm:$0xf]
    %v116 = vld [vmem:[#allocation2 + $0x84] sm:$0xf]
    %v117 = vld [vmem:[#allocation2 + $0x88] sm:$0xf]
    %v118 = vld [vmem:[#allocation2 + $0x8c] sm:$0xf]
    %v119 = vld [vmem:[#allocation2 + $0x90] sm:$0xf]
    %v120 = vld [vmem:[#allocation2 + $0x94] sm:$0xf]
    %v121 = vld [vmem:[#allocation2 + $0x98] sm:$0xf]
    %v122 = vld [vmem:[#allocation2 + $0x9c] sm:$0xf]
    %v123 = vld [vmem:[#allocation2 + $0xa0] sm:$0xf]
    %v124 = vld [vmem:[#allocation2 + $0xa4] sm:$0xf]
    %v125 = vld [vmem:[#allocation2 + $0xa8] sm:$0xf]
    %v126 = vld [vmem:[#allocation2 + $0xac] sm:$0xf]
    %v127 = vld [vmem:[#allocation2 + $0xb0] sm:$0xf]
    %v128 = vld [vmem:[#allocation2 + $0xb4] sm:$0xf]
    %v129 = vld [vmem:[#allocation2 + $0xb8] sm:$0xf]
    %v130 = vld [vmem:[#allocation2 + $0xbc] sm:$0xf]
    %v131 = vld [vmem:[#allocation2 + $0xc0] sm:$0xf]
    %v132 = vld [vmem:[#allocation2 + $0xc4] sm:$0xf]
    %v133 = vld [vmem:[#allocation2 + $0xc8] sm:$0xf]
    %v134 = vld [vmem:[#allocation2 + $0xcc] sm:$0xf]
    %v135 = vld [vmem:[#allocation2 + $0xd0] sm:$0xf]
    %v136 = vld [vmem:[#allocation2 + $0xd4] sm:$0xf]
    %v137 = vld [vmem:[#allocation2 + $0xd8] sm:$0xf]
    %v138 = vld [vmem:[#allocation2 + $0xdc] sm:$0xf]
    %v139 = vmax.bf16 %v83, 0
    %v140 = vmax.bf16 %v84, 0
    %v141 = vmax.bf16 %v85, 0
    %v142 = vmax.bf16 %v86, 0
    %v143 = vmax.bf16 %v87, 0
    %v144 = vmax.bf16 %v88, 0
    %v145 = vmax.bf16 %v89, 0
    %v146 = vmax.bf16 %v90, 0
    %v147 = vmax.bf16 %v91, 0
    %v148 = vmax.bf16 %v92, 0
    %v149 = vmax.bf16 %v93, 0
    %v150 = vmax.bf16 %v94, 0
    %v151 = vmax.bf16 %v95, 0
    %v152 = vmax.bf16 %v96, 0
    %v153 = vmax.bf16 %v97, 0
    %v154 = vmax.bf16 %v98, 0
    %v155 = vmax.bf16 %v99, 0
    %v156 = vmax.bf16 %v100, 0
    %v157 = vmax.bf16 %v101, 0
    %v158 = vmax.bf16 %v102, 0
    %v159 = vmax.bf16 %v103, 0
    %v160 = vmax.bf16 %v104, 0
    %v161 = vmax.bf16 %v105, 0
    %v162 = vmax.bf16 %v106, 0
    %v163 = vmax.bf16 %v107, 0
    %v164 = vmax.bf16 %v108, 0
    %v165 = vmax.bf16 %v109, 0
    %v166 = vmax.bf16 %v110, 0
    %v167 = vmax.bf16 %v111, 0
    %v168 = vmax.bf16 %v112, 0
    %v169 = vmax.bf16 %v113, 0
    %v170 = vmax.bf16 %v114, 0
    %v171 = vmax.bf16 %v115, 0
    %v172 = vmax.bf16 %v116, 0
    %v173 = vmax.bf16 %v117, 0
    %v174 = vmax.bf16 %v118, 0
    %v175 = vmax.bf16 %v119, 0
    %v176 = vmax.bf16 %v120, 0
    %v177 = vmax.bf16 %v121, 0
    %v178 = vmax.bf16 %v122, 0
    %v179 = vmax.bf16 %v123, 0
    %v180 = vmax.bf16 %v124, 0
    %v181 = vmax.bf16 %v125, 0
    %v182 = vmax.bf16 %v126, 0
    %v183 = vmax.bf16 %v127, 0
    %v184 = vmax.bf16 %v128, 0
    %v185 = vmax.bf16 %v129, 0
    %v186 = vmax.bf16 %v130, 0
    %v187 = vmax.bf16 %v131, 0
    %v188 = vmax.bf16 %v132, 0
    %v189 = vmax.bf16 %v133, 0
    %v190 = vmax.bf16 %v134, 0
    %v191 = vmax.bf16 %v135, 0
    %v192 = vmax.bf16 %v136, 0
    %v193 = vmax.bf16 %v137, 0
    %v194 = vmax.bf16 %v138, 0
    %v195 = vld [vmem:[#allocation5] sm:$0xf]
    %v196 = vld [vmem:[#allocation5 + $0x4] sm:$0xf]
    %v197 = vld [vmem:[#allocation5 + $0x8] sm:$0xf]
    %v198 = vld [vmem:[#allocation5 + $0xc] sm:$0xf]
    %v199 = vld [vmem:[#allocation5 + $0x10] sm:$0xf]
    %v200 = vld [vmem:[#allocation5 + $0x14] sm:$0xf]
    %v201 = vld [vmem:[#allocation5 + $0x18] sm:$0xf]
    %v202 = vld [vmem:[#allocation5 + $0x1c] sm:$0xf]
    %v203 = vld [vmem:[#allocation5 + $0x20] sm:$0xf]
    %v204 = vld [vmem:[#allocation5 + $0x24] sm:$0xf]
    %v205 = vld [vmem:[#allocation5 + $0x28] sm:$0xf]
    %v206 = vld [vmem:[#allocation5 + $0x2c] sm:$0xf]
    %v207 = vld [vmem:[#allocation5 + $0x30] sm:$0xf]
    %v208 = vld [vmem:[#allocation5 + $0x34] sm:$0xf]
    %v209 = vld [vmem:[#allocation5 + $0x38] sm:$0xf]
    %v210 = vld [vmem:[#allocation5 + $0x3c] sm:$0xf]
    %v267 = vunpack.c.l.b16 %v139
    %v268 = vunpack.c.l.b16 %v140
    %v269 = vunpack.c.l.b16 %v141
    %v270 = vunpack.c.l.b16 %v142
    %v271 = vunpack.c.l.b16 %v143
    %v272 = vunpack.c.l.b16 %v144
    %v273 = vunpack.c.l.b16 %v145
    %v274 = vunpack.c.l.b16 %v146
    %v275 = vunpack.c.l.b16 %v147
    %v276 = vunpack.c.l.b16 %v148
    %v277 = vunpack.c.l.b16 %v149
    %v278 = vunpack.c.l.b16 %v150
    %v279 = vunpack.c.l.b16 %v151
    %v280 = vunpack.c.l.b16 %v152
    %v281 = vunpack.c.l.b16 %v153
    %v282 = vunpack.c.l.b16 %v154
    %v283 = vunpack.c.l.b16 %v155
    %v284 = vunpack.c.l.b16 %v156
    %v285 = vunpack.c.l.b16 %v157
    %v286 = vunpack.c.l.b16 %v158
    %v287 = vunpack.c.l.b16 %v159
    %v288 = vunpack.c.l.b16 %v160
    %v289 = vunpack.c.l.b16 %v161
    %v290 = vunpack.c.l.b16 %v162
    %v291 = vunpack.c.l.b16 %v163
    %v292 = vunpack.c.l.b16 %v164
    %v293 = vunpack.c.l.b16 %v165
    %v294 = vunpack.c.l.b16 %v166
    %v295 = vunpack.c.l.b16 %v167
    %v296 = vunpack.c.l.b16 %v168
    %v297 = vunpack.c.l.b16 %v169
    %v298 = vunpack.c.l.b16 %v170
    %v299 = vunpack.c.l.b16 %v171
    %v300 = vunpack.c.l.b16 %v172
    %v301 = vunpack.c.l.b16 %v173
    %v302 = vunpack.c.l.b16 %v174
    %v303 = vunpack.c.l.b16 %v175
    %v304 = vunpack.c.l.b16 %v176
    %v305 = vunpack.c.l.b16 %v177
    %v306 = vunpack.c.l.b16 %v178
    %v307 = vunpack.c.l.b16 %v179
    %v308 = vunpack.c.l.b16 %v180
    %v309 = vunpack.c.l.b16 %v181
    %v310 = vunpack.c.l.b16 %v182
    %v311 = vunpack.c.l.b16 %v183
    %v312 = vunpack.c.l.b16 %v184
    %v313 = vunpack.c.l.b16 %v185
    %v314 = vunpack.c.l.b16 %v186
    %v315 = vunpack.c.l.b16 %v187
    %v316 = vunpack.c.l.b16 %v188
    %v317 = vunpack.c.l.b16 %v189
    %v318 = vunpack.c.l.b16 %v190
    %v319 = vunpack.c.l.b16 %v191
    %v320 = vunpack.c.l.b16 %v192
    %v321 = vunpack.c.l.b16 %v193
    %v322 = vunpack.c.l.b16 %v194
    %v323 = vpack.c.b16 %v268, %v267
    %v324 = vpack.c.b16 %v270, %v269
    %v325 = vpack.c.b16 %v272, %v271
    %v326 = vpack.c.b16 %v274, %v273
    %v327 = vpack.c.b16 %v276, %v275
    %v328 = vpack.c.b16 %v278, %v277
    %v329 = vpack.c.b16 %v280, %v279
    %v330 = vpack.c.b16 %v282, %v281
    %v331 = vpack.c.b16 %v284, %v283
    %v332 = vpack.c.b16 %v286, %v285
    %v333 = vpack.c.b16 %v288, %v287
    %v334 = vpack.c.b16 %v290, %v289
    %v335 = vpack.c.b16 %v292, %v291
    %v336 = vpack.c.b16 %v294, %v293
    %v337 = vpack.c.b16 %v296, %v295
    %v338 = vpack.c.b16 %v298, %v297
    %v339 = vpack.c.b16 %v300, %v299
    %v340 = vpack.c.b16 %v302, %v301
    %v341 = vpack.c.b16 %v304, %v303
    %v342 = vpack.c.b16 %v306, %v305
    %v343 = vpack.c.b16 %v308, %v307
    %v344 = vpack.c.b16 %v310, %v309
    %v345 = vpack.c.b16 %v312, %v311
    %v346 = vpack.c.b16 %v314, %v313
    %v347 = vpack.c.b16 %v316, %v315
    %v348 = vpack.c.b16 %v318, %v317
    %v349 = vpack.c.b16 %v320, %v319
    %v350 = vpack.c.b16 %v322, %v321
    %v395 = vunpack.c.l.b16 %v195
    %v396 = vunpack.c.l.b16 %v196
    %v397 = vunpack.c.l.b16 %v197
    %v398 = vunpack.c.l.b16 %v198
    %v399 = vunpack.c.l.b16 %v199
    %v400 = vunpack.c.l.b16 %v200
    %v401 = vunpack.c.l.b16 %v201
    %v402 = vunpack.c.l.b16 %v202
    %v403 = vunpack.c.l.b16 %v203
    %v404 = vunpack.c.l.b16 %v204
    %v405 = vunpack.c.l.b16 %v205
    %v406 = vunpack.c.l.b16 %v206
    %v407 = vunpack.c.l.b16 %v207
    %v408 = vunpack.c.l.b16 %v208
    %v409 = vunpack.c.l.b16 %v209
    %v410 = vunpack.c.l.b16 %v210
    %v411 = vpack.c.b16 %v396, %v395
    %v412 = vpack.c.b16 %v398, %v397
    %v413 = vpack.c.b16 %v400, %v399
    %v414 = vpack.c.b16 %v402, %v401
    %v415 = vpack.c.b16 %v404, %v403
    %v416 = vpack.c.b16 %v406, %v405
    %v417 = vpack.c.b16 %v408, %v407
    %v418 = vpack.c.b16 %v410, %v409
    %427 = vmatprep.subr.bf16.mxu0 0
    %428 = vmatpush1.bf16.msra.mxu0 %v411
    %429 = vmatprep.subr.bf16.mxu0 0
    %430 = vmatpush1.bf16.msra.mxu0 %v412
    %431 = vmatprep.subr.bf16.mxu0 0
    %432 = vmatpush1.bf16.msra.mxu0 %v413
    %433 = vmatprep.subr.bf16.mxu0 0
    %434 = vmatpush1.bf16.msra.mxu0 %v414
    %435 = vmatprep.subr.bf16.mxu0 0
    %436 = vmatpush1.bf16.msra.mxu0 %v415
    %437 = vmatprep.subr.bf16.mxu0 0
    %438 = vmatpush1.bf16.msra.mxu0 %v416
    %439 = vmatprep.subr.bf16.mxu0 0
    %440 = vmatpush1.bf16.msra.mxu0 %v417
    %441 = vmatprep.subr.bf16.mxu0 0
    %442 = vmatpush1.bf16.msra.mxu0 %v418
    %443 = vmatprep.subr.bf16.mxu0 0
    %444 = vmatpush1.bf16.msra.mxu0 0
    %445 = vmatprep.subr.bf16.mxu0 0
    %446 = vmatpush1.bf16.msra.mxu0 0
    %447 = vmatprep.subr.bf16.mxu0 0
    %448 = vmatpush1.bf16.msra.mxu0 0
    %449 = vmatprep.subr.bf16.mxu0 0
    %450 = vmatpush1.bf16.msra.mxu0 0
    %451 = vmatprep.subr.bf16.mxu0 0
    %452 = vmatpush1.bf16.msra.mxu0 0
    %453 = vmatprep.subr.bf16.mxu0 0
    %454 = vmatpush1.bf16.msra.mxu0 0
    %455 = vmatprep.subr.bf16.mxu0 0
    %456 = vmatpush1.bf16.msra.mxu0 0
    %457 = vmatprep.subr.bf16.mxu0 0
    %458 = vmatpush1.bf16.msra.mxu0 0
    %459 = vmatprep.mubr.bf16.mxu0 0
    %460 = vmatmul.mubr.bf16.gmra.mrb[0].mxu0 %v323
    %v461 = vpop.f32.mrb[0].mxu0
    %v462 = vadd.f32 0.0, %v461
    %v463 = vpop.f32.mrb[0].mxu0
    %v464 = vpop.f32.mrb[0].mxu0
    %v465 = vadd.f32 0.0, %v464
    %v466 = vpop.f32.mrb[0].mxu0
    %467 = vmatprep.mubr.bf16.mxu0 0
    %468 = vmatmul.mubr.bf16.gmra.mrb[0].mxu0 %v324
    %v469 = vpop.f32.mrb[0].mxu0
    %v470 = vadd.f32 0.0, %v469
    %v471 = vpop.f32.mrb[0].mxu0
    %v472 = vpop.f32.mrb[0].mxu0
    %v473 = vadd.f32 0.0, %v472
    %v474 = vpop.f32.mrb[0].mxu0
    %475 = vmatprep.mubr.bf16.mxu0 0
    %476 = vmatmul.mubr.bf16.gmra.mrb[0].mxu0 %v325
    %v477 = vpop.f32.mrb[0].mxu0
    %v478 = vadd.f32 0.0, %v477
    %v479 = vpop.f32.mrb[0].mxu0
    %v480 = vpop.f32.mrb[0].mxu0
    %v481 = vadd.f32 0.0, %v480
    %v482 = vpop.f32.mrb[0].mxu0
    %483 = vmatprep.mubr.bf16.mxu0 0
    %484 = vmatmul.mubr.bf16.gmra.mrb[0].mxu0 %v326
    %v485 = vpop.f32.mrb[0].mxu0
    %v486 = vadd.f32 0.0, %v485
    %v487 = vpop.f32.mrb[0].mxu0
    %v488 = vpop.f32.mrb[0].mxu0
    %v489 = vadd.f32 0.0, %v488
    %v490 = vpop.f32.mrb[0].mxu0
    %491 = vmatprep.mubr.bf16.mxu0 0
    %492 = vmatmul.mubr.bf16.gmra.mrb[0].mxu0 %v327
    %v493 = vpop.f32.mrb[0].mxu0
    %v494 = vadd.f32 0.0, %v493
    %v495 = vpop.f32.mrb[0].mxu0
    %v496 = vpop.f32.mrb[0].mxu0
    %v497 = vadd.f32 0.0, %v496
    %v498 = vpop.f32.mrb[0].mxu0
    %499 = vmatprep.mubr.bf16.mxu0 0
    %500 = vmatmul.mubr.bf16.gmra.mrb[0].mxu0 %v328
    %v501 = vpop.f32.mrb[0].mxu0
    %v502 = vadd.f32 0.0, %v501
    %v503 = vpop.f32.mrb[0].mxu0
    %v504 = vpop.f32.mrb[0].mxu0
    %v505 = vadd.f32 0.0, %v504
    %v506 = vpop.f32.mrb[0].mxu0
    %507 = vmatprep.mubr.bf16.mxu0 0
    %508 = vmatmul.mubr.bf16.gmra.mrb[0].mxu0 %v329
    %v509 = vpop.f32.mrb[0].mxu0
    %v510 = vadd.f32 0.0, %v509
    %v511 = vpop.f32.mrb[0].mxu0
    %v512 = vpop.f32.mrb[0].mxu0
    %v513 = vadd.f32 0.0, %v512
    %v514 = vpop.f32.mrb[0].mxu0
    %515 = vmatprep.mubr.bf16.mxu0 0
    %516 = vmatmul.mubr.bf16.gmra.mrb[0].mxu0 %v330
    %v517 = vpop.f32.mrb[0].mxu0
    %v518 = vadd.f32 0.0, %v517
    %v519 = vpop.f32.mrb[0].mxu0
    %v520 = vpop.f32.mrb[0].mxu0
    %v521 = vadd.f32 0.0, %v520
    %v522 = vpop.f32.mrb[0].mxu0
    %523 = vmatprep.mubr.bf16.mxu0 0
    %524 = vmatmul.mubr.bf16.gmra.mrb[0].mxu0 %v331
    %v525 = vpop.f32.mrb[0].mxu0
    %v526 = vadd.f32 0.0, %v525
    %v527 = vpop.f32.mrb[0].mxu0
    %v528 = vpop.f32.mrb[0].mxu0
    %v529 = vadd.f32 0.0, %v528
    %v530 = vpop.f32.mrb[0].mxu0
    %531 = vmatprep.mubr.bf16.mxu0 0
    %532 = vmatmul.mubr.bf16.gmra.mrb[0].mxu0 %v332
    %v533 = vpop.f32.mrb[0].mxu0
    %v534 = vadd.f32 0.0, %v533
    %v535 = vpop.f32.mrb[0].mxu0
    %v536 = vpop.f32.mrb[0].mxu0
    %v537 = vadd.f32 0.0, %v536
    %v538 = vpop.f32.mrb[0].mxu0
    %539 = vmatprep.mubr.bf16.mxu0 0
    %540 = vmatmul.mubr.bf16.gmra.mrb[0].mxu0 %v333
    %v541 = vpop.f32.mrb[0].mxu0
    %v542 = vadd.f32 0.0, %v541
    %v543 = vpop.f32.mrb[0].mxu0
    %v544 = vpop.f32.mrb[0].mxu0
    %v545 = vadd.f32 0.0, %v544
    %v546 = vpop.f32.mrb[0].mxu0
    %547 = vmatprep.mubr.bf16.mxu0 0
    %548 = vmatmul.mubr.bf16.gmra.mrb[0].mxu0 %v334
    %v549 = vpop.f32.mrb[0].mxu0
    %v550 = vadd.f32 0.0, %v549
    %v551 = vpop.f32.mrb[0].mxu0
    %v552 = vpop.f32.mrb[0].mxu0
    %v553 = vadd.f32 0.0, %v552
    %v554 = vpop.f32.mrb[0].mxu0
    %555 = vmatprep.mubr.bf16.mxu0 0
    %556 = vmatmul.mubr.bf16.gmra.mrb[0].mxu0 %v335
    %v557 = vpop.f32.mrb[0].mxu0
    %v558 = vadd.f32 0.0, %v557
    %v559 = vpop.f32.mrb[0].mxu0
    %v560 = vpop.f32.mrb[0].mxu0
    %v561 = vadd.f32 0.0, %v560
    %v562 = vpop.f32.mrb[0].mxu0
    %563 = vmatprep.mubr.bf16.mxu0 0
    %564 = vmatmul.mubr.bf16.gmra.mrb[0].mxu0 %v336
    %v565 = vpop.f32.mrb[0].mxu0
    %v566 = vadd.f32 0.0, %v565
    %v567 = vpop.f32.mrb[0].mxu0
    %v568 = vpop.f32.mrb[0].mxu0
    %v569 = vadd.f32 0.0, %v568
    %v570 = vpop.f32.mrb[0].mxu0
    %571 = vmatprep.mubr.bf16.mxu0 0
    %572 = vmatmul.mubr.bf16.gmra.mrb[0].mxu0 %v337
    %v573 = vpop.f32.mrb[0].mxu0
    %v574 = vadd.f32 0.0, %v573
    %v575 = vpop.f32.mrb[0].mxu0
    %v576 = vpop.f32.mrb[0].mxu0
    %v577 = vadd.f32 0.0, %v576
    %v578 = vpop.f32.mrb[0].mxu0
    %579 = vmatprep.mubr.bf16.mxu0 0
    %580 = vmatmul.mubr.bf16.gmra.mrb[0].mxu0 %v338
    %v581 = vpop.f32.mrb[0].mxu0
    %v582 = vadd.f32 0.0, %v581
    %v583 = vpop.f32.mrb[0].mxu0
    %v584 = vpop.f32.mrb[0].mxu0
    %v585 = vadd.f32 0.0, %v584
    %v586 = vpop.f32.mrb[0].mxu0
    %587 = vmatprep.mubr.bf16.mxu0 0
    %588 = vmatmul.mubr.bf16.gmra.mrb[0].mxu0 %v339
    %v589 = vpop.f32.mrb[0].mxu0
    %v590 = vadd.f32 0.0, %v589
    %v591 = vpop.f32.mrb[0].mxu0
    %v592 = vpop.f32.mrb[0].mxu0
    %v593 = vadd.f32 0.0, %v592
    %v594 = vpop.f32.mrb[0].mxu0
    %595 = vmatprep.mubr.bf16.mxu0 0
    %596 = vmatmul.mubr.bf16.gmra.mrb[0].mxu0 %v340
    %v597 = vpop.f32.mrb[0].mxu0
    %v598 = vadd.f32 0.0, %v597
    %v599 = vpop.f32.mrb[0].mxu0
    %v600 = vpop.f32.mrb[0].mxu0
    %v601 = vadd.f32 0.0, %v600
    %v602 = vpop.f32.mrb[0].mxu0
    %603 = vmatprep.mubr.bf16.mxu0 0
    %604 = vmatmul.mubr.bf16.gmra.mrb[0].mxu0 %v341
    %v605 = vpop.f32.mrb[0].mxu0
    %v606 = vadd.f32 0.0, %v605
    %v607 = vpop.f32.mrb[0].mxu0
    %v608 = vpop.f32.mrb[0].mxu0
    %v609 = vadd.f32 0.0, %v608
    %v610 = vpop.f32.mrb[0].mxu0
    %611 = vmatprep.mubr.bf16.mxu0 0
    %612 = vmatmul.mubr.bf16.gmra.mrb[0].mxu0 %v342
    %v613 = vpop.f32.mrb[0].mxu0
    %v614 = vadd.f32 0.0, %v613
    %v615 = vpop.f32.mrb[0].mxu0
    %v616 = vpop.f32.mrb[0].mxu0
    %v617 = vadd.f32 0.0, %v616
    %v618 = vpop.f32.mrb[0].mxu0
    %619 = vmatprep.mubr.bf16.mxu0 0
    %620 = vmatmul.mubr.bf16.gmra.mrb[0].mxu0 %v343
    %v621 = vpop.f32.mrb[0].mxu0
    %v622 = vadd.f32 0.0, %v621
    %v623 = vpop.f32.mrb[0].mxu0
    %v624 = vpop.f32.mrb[0].mxu0
    %v625 = vadd.f32 0.0, %v624
    %v626 = vpop.f32.mrb[0].mxu0
    %627 = vmatprep.mubr.bf16.mxu0 0
    %628 = vmatmul.mubr.bf16.gmra.mrb[0].mxu0 %v344
    %v629 = vpop.f32.mrb[0].mxu0
    %v630 = vadd.f32 0.0, %v629
    %v631 = vpop.f32.mrb[0].mxu0
    %v632 = vpop.f32.mrb[0].mxu0
    %v633 = vadd.f32 0.0, %v632
    %v634 = vpop.f32.mrb[0].mxu0
    %635 = vmatprep.mubr.bf16.mxu0 0
    %636 = vmatmul.mubr.bf16.gmra.mrb[0].mxu0 %v345
    %v637 = vpop.f32.mrb[0].mxu0
    %v638 = vadd.f32 0.0, %v637
    %v639 = vpop.f32.mrb[0].mxu0
    %v640 = vpop.f32.mrb[0].mxu0
    %v641 = vadd.f32 0.0, %v640
    %v642 = vpop.f32.mrb[0].mxu0
    %643 = vmatprep.mubr.bf16.mxu0 0
    %644 = vmatmul.mubr.bf16.gmra.mrb[0].mxu0 %v346
    %v645 = vpop.f32.mrb[0].mxu0
    %v646 = vadd.f32 0.0, %v645
    %v647 = vpop.f32.mrb[0].mxu0
    %v648 = vpop.f32.mrb[0].mxu0
    %v649 = vadd.f32 0.0, %v648
    %v650 = vpop.f32.mrb[0].mxu0
    %651 = vmatprep.mubr.bf16.mxu0 0
    %652 = vmatmul.mubr.bf16.gmra.mrb[0].mxu0 %v347
    %v653 = vpop.f32.mrb[0].mxu0
    %v654 = vadd.f32 0.0, %v653
    %v655 = vpop.f32.mrb[0].mxu0
    %v656 = vpop.f32.mrb[0].mxu0
    %v657 = vadd.f32 0.0, %v656
    %v658 = vpop.f32.mrb[0].mxu0
    %659 = vmatprep.mubr.bf16.mxu0 0
    %660 = vmatmul.mubr.bf16.gmra.mrb[0].mxu0 %v348
    %v661 = vpop.f32.mrb[0].mxu0
    %v662 = vadd.f32 0.0, %v661
    %v663 = vpop.f32.mrb[0].mxu0
    %v664 = vpop.f32.mrb[0].mxu0
    %v665 = vadd.f32 0.0, %v664
    %v666 = vpop.f32.mrb[0].mxu0
    %667 = vmatprep.mubr.bf16.mxu0 0
    %668 = vmatmul.mubr.bf16.gmra.mrb[0].mxu0 %v349
    %v669 = vpop.f32.mrb[0].mxu0
    %v670 = vadd.f32 0.0, %v669
    %v671 = vpop.f32.mrb[0].mxu0
    %v672 = vpop.f32.mrb[0].mxu0
    %v673 = vadd.f32 0.0, %v672
    %v674 = vpop.f32.mrb[0].mxu0
    %675 = vmatprep.mubr.bf16.mxu0 0
    %676 = vmatmul.mubr.bf16.gmra.mrb[0].mxu0 %v350
    %v677 = vpop.f32.mrb[0].mxu0
    %v678 = vadd.f32 0.0, %v677
    %v679 = vpop.f32.mrb[0].mxu0
    %v680 = vpop.f32.mrb[0].mxu0
    %v681 = vadd.f32 0.0, %v680
    %v682 = vpop.f32.mrb[0].mxu0
    %683 = vdwg.mxu0
    %v684 = vadd.f32 %v462, %v465
    %v685 = vadd.f32 %v489, %v494
    %v686 = vadd.f32 %v518, %v521
    %v687 = vadd.f32 %v545, %v550
    %v688 = vadd.f32 %v574, %v577
    %v689 = vadd.f32 %v601, %v606
    %v690 = vadd.f32 %v630, %v633
    %v691 = vadd.f32 %v657, %v662
    %v692 = vadd.f32 %v470, %v473
    %v693 = vadd.f32 %v692, %v478
    %v694 = vadd.f32 %v497, %v502
    %v695 = vadd.f32 %v694, %v505
    %v696 = vadd.f32 %v526, %v529
    %v697 = vadd.f32 %v696, %v534
    %v698 = vadd.f32 %v553, %v558
    %v699 = vadd.f32 %v698, %v561
    %v700 = vadd.f32 %v582, %v585
    %v701 = vadd.f32 %v700, %v590
    %v702 = vadd.f32 %v609, %v614
    %v703 = vadd.f32 %v702, %v617
    %v704 = vadd.f32 %v638, %v641
    %v705 = vadd.f32 %v704, %v646
    %v706 = vadd.f32 %v665, %v670
    %v707 = vadd.f32 %v706, %v673
    %v708 = vadd.f32 %v481, %v486
    %v709 = vadd.f32 %v510, %v513
    %v710 = vadd.f32 %v537, %v542
    %v711 = vadd.f32 %v566, %v569
    %v712 = vadd.f32 %v593, %v598
    %v713 = vadd.f32 %v622, %v625
    %v714 = vadd.f32 %v649, %v654
    %v715 = vadd.f32 %v678, %v681
    %v716 = vadd.f32 %v684, %v693
    %v717 = vadd.f32 %v685, %v695
    %v718 = vadd.f32 %v686, %v697
    %v719 = vadd.f32 %v687, %v699
    %v720 = vadd.f32 %v688, %v701
    %v721 = vadd.f32 %v689, %v703
    %v722 = vadd.f32 %v690, %v705
    %v723 = vadd.f32 %v691, %v707
    %v724 = vadd.f32 %v693, %v708
    %v725 = vadd.f32 %v695, %v709
    %v726 = vadd.f32 %v697, %v710
    %v727 = vadd.f32 %v699, %v711
    %v728 = vadd.f32 %v701, %v712
    %v729 = vadd.f32 %v703, %v713
    %v730 = vadd.f32 %v705, %v714
    %v731 = vadd.f32 %v707, %v715
    %v732 = vld [vmem:[%s2] sm:$0x1]
    %v733 = vmul.f32 %v732, 0.04
    %v735 = vlaneseq
    %v736 = vshrl.u32 %v735, 7
    %v737 = vsub.s32 0, %v736
    %v738 = vrot.slane %v733, %v737
    %v740 = vld [vmem:[%s3] sm:$0x1]
    %v742 = vlaneseq
    %v743 = vshrl.u32 %v742, 7
    %v744 = vsub.s32 0, %v743
    %v745 = vrot.slane %v740, %v744
    %vm747 = vcmask 1041408
    %v748 = vsel %vm747, %v716, 0.0
    %v749 = vrot.slane %v748, 4
    %v750 = vadd.f32 %v748, %v749
    %v751 = vrot.slane %v750, 2
    %v752 = vadd.f32 %v750, %v751
    %v753 = vrot.slane %v752, 1
    %v754 = vadd.f32 %v752, %v753
    %v755 = vsel %vm747, %v717, 0.0
    %v756 = vrot.slane %v755, 4
    %v757 = vadd.f32 %v755, %v756
    %v758 = vrot.slane %v757, 2
    %v759 = vadd.f32 %v757, %v758
    %v760 = vrot.slane %v759, 1
    %v761 = vadd.f32 %v759, %v760
    %v762 = vsel %vm747, %v718, 0.0
    %v763 = vrot.slane %v762, 4
    %v764 = vadd.f32 %v762, %v763
    %v765 = vrot.slane %v764, 2
    %v766 = vadd.f32 %v764, %v765
    %v767 = vrot.slane %v766, 1
    %v768 = vadd.f32 %v766, %v767
    %v769 = vsel %vm747, %v719, 0.0
    %v770 = vrot.slane %v769, 4
    %v771 = vadd.f32 %v769, %v770
    %v772 = vrot.slane %v771, 2
    %v773 = vadd.f32 %v771, %v772
    %v774 = vrot.slane %v773, 1
    %v775 = vadd.f32 %v773, %v774
    %v776 = vsel %vm747, %v720, 0.0
    %v777 = vrot.slane %v776, 4
    %v778 = vadd.f32 %v776, %v777
    %v779 = vrot.slane %v778, 2
    %v780 = vadd.f32 %v778, %v779
    %v781 = vrot.slane %v780, 1
    %v782 = vadd.f32 %v780, %v781
    %v783 = vsel %vm747, %v721, 0.0
    %v784 = vrot.slane %v783, 4
    %v785 = vadd.f32 %v783, %v784
    %v786 = vrot.slane %v785, 2
    %v787 = vadd.f32 %v785, %v786
    %v788 = vrot.slane %v787, 1
    %v789 = vadd.f32 %v787, %v788
    %v790 = vsel %vm747, %v722, 0.0
    %v791 = vrot.slane %v790, 4
    %v792 = vadd.f32 %v790, %v791
    %v793 = vrot.slane %v792, 2
    %v794 = vadd.f32 %v792, %v793
    %v795 = vrot.slane %v794, 1
    %v796 = vadd.f32 %v794, %v795
    %v797 = vsel %vm747, %v723, 0.0
    %v798 = vrot.slane %v797, 4
    %v799 = vadd.f32 %v797, %v798
    %v800 = vrot.slane %v799, 2
    %v801 = vadd.f32 %v799, %v800
    %v802 = vrot.slane %v801, 1
    %v803 = vadd.f32 %v801, %v802
    %v812 = vrot.slane %v716, 2
    %v813 = vrot.slane %v717, 2
    %v814 = vrot.slane %v718, 2
    %v815 = vrot.slane %v719, 2
    %v816 = vrot.slane %v720, 2
    %v817 = vrot.slane %v721, 2
    %v818 = vrot.slane %v722, 2
    %v819 = vrot.slane %v723, 2
    %vm828 = vcmask 1042432
    %v829 = vsel %vm828, %v812, 0.0
    %v830 = vrot.slane %v829, 4
    %v831 = vadd.f32 %v829, %v830
    %v832 = vrot.slane %v831, 2
    %v833 = vadd.f32 %v831, %v832
    %v834 = vrot.slane %v833, 1
    %v835 = vadd.f32 %v833, %v834
    %v836 = vsel %vm828, %v813, 0.0
    %v837 = vrot.slane %v836, 4
    %v838 = vadd.f32 %v836, %v837
    %v839 = vrot.slane %v838, 2
    %v840 = vadd.f32 %v838, %v839
    %v841 = vrot.slane %v840, 1
    %v842 = vadd.f32 %v840, %v841
    %v843 = vsel %vm828, %v814, 0.0
    %v844 = vrot.slane %v843, 4
    %v845 = vadd.f32 %v843, %v844
    %v846 = vrot.slane %v845, 2
    %v847 = vadd.f32 %v845, %v846
    %v848 = vrot.slane %v847, 1
    %v849 = vadd.f32 %v847, %v848
    %v850 = vsel %vm828, %v815, 0.0
    %v851 = vrot.slane %v850, 4
    %v852 = vadd.f32 %v850, %v851
    %v853 = vrot.slane %v852, 2
    %v854 = vadd.f32 %v852, %v853
    %v855 = vrot.slane %v854, 1
    %v856 = vadd.f32 %v854, %v855
    %v857 = vsel %vm828, %v816, 0.0
    %v858 = vrot.slane %v857, 4
    %v859 = vadd.f32 %v857, %v858
    %v860 = vrot.slane %v859, 2
    %v861 = vadd.f32 %v859, %v860
    %v862 = vrot.slane %v861, 1
    %v863 = vadd.f32 %v861, %v862
    %v864 = vsel %vm828, %v817, 0.0
    %v865 = vrot.slane %v864, 4
    %v866 = vadd.f32 %v864, %v865
    %v867 = vrot.slane %v866, 2
    %v868 = vadd.f32 %v866, %v867
    %v869 = vrot.slane %v868, 1
    %v870 = vadd.f32 %v868, %v869
    %v871 = vsel %vm828, %v818, 0.0
    %v872 = vrot.slane %v871, 4
    %v873 = vadd.f32 %v871, %v872
    %v874 = vrot.slane %v873, 2
    %v875 = vadd.f32 %v873, %v874
    %v876 = vrot.slane %v875, 1
    %v877 = vadd.f32 %v875, %v876
    %v878 = vsel %vm828, %v819, 0.0
    %v879 = vrot.slane %v878, 4
    %v880 = vadd.f32 %v878, %v879
    %v881 = vrot.slane %v880, 2
    %v882 = vadd.f32 %v880, %v881
    %v883 = vrot.slane %v882, 1
    %v884 = vadd.f32 %v882, %v883
    %v885 = vrot.slane %v716, 5
    %v886 = vrot.slane %v717, 5
    %v887 = vrot.slane %v718, 5
    %v888 = vrot.slane %v719, 5
    %v889 = vrot.slane %v720, 5
    %v890 = vrot.slane %v721, 5
    %v891 = vrot.slane %v722, 5
    %v892 = vrot.slane %v723, 5
    %v901 = vsel %vm747, %v885, 0.0
    %v902 = vrot.slane %v901, 4
    %v903 = vadd.f32 %v901, %v902
    %v904 = vrot.slane %v903, 2
    %v905 = vadd.f32 %v903, %v904
    %v906 = vrot.slane %v905, 1
    %v907 = vadd.f32 %v905, %v906
    %v908 = vsel %vm747, %v886, 0.0
    %v909 = vrot.slane %v908, 4
    %v910 = vadd.f32 %v908, %v909
    %v911 = vrot.slane %v910, 2
    %v912 = vadd.f32 %v910, %v911
    %v913 = vrot.slane %v912, 1
    %v914 = vadd.f32 %v912, %v913
    %v915 = vsel %vm747, %v887, 0.0
    %v916 = vrot.slane %v915, 4
    %v917 = vadd.f32 %v915, %v916
    %v918 = vrot.slane %v917, 2
    %v919 = vadd.f32 %v917, %v918
    %v920 = vrot.slane %v919, 1
    %v921 = vadd.f32 %v919, %v920
    %v922 = vsel %vm747, %v888, 0.0
    %v923 = vrot.slane %v922, 4
    %v924 = vadd.f32 %v922, %v923
    %v925 = vrot.slane %v924, 2
    %v926 = vadd.f32 %v924, %v925
    %v927 = vrot.slane %v926, 1
    %v928 = vadd.f32 %v926, %v927
    %v929 = vsel %vm747, %v889, 0.0
    %v930 = vrot.slane %v929, 4
    %v931 = vadd.f32 %v929, %v930
    %v932 = vrot.slane %v931, 2
    %v933 = vadd.f32 %v931, %v932
    %v934 = vrot.slane %v933, 1
    %v935 = vadd.f32 %v933, %v934
    %v936 = vsel %vm747, %v890, 0.0
    %v937 = vrot.slane %v936, 4
    %v938 = vadd.f32 %v936, %v937
    %v939 = vrot.slane %v938, 2
    %v940 = vadd.f32 %v938, %v939
    %v941 = vrot.slane %v940, 1
    %v942 = vadd.f32 %v940, %v941
    %v943 = vsel %vm747, %v891, 0.0
    %v944 = vrot.slane %v943, 4
    %v945 = vadd.f32 %v943, %v944
    %v946 = vrot.slane %v945, 2
    %v947 = vadd.f32 %v945, %v946
    %v948 = vrot.slane %v947, 1
    %v949 = vadd.f32 %v947, %v948
    %v950 = vsel %vm747, %v892, 0.0
    %v951 = vrot.slane %v950, 4
    %v952 = vadd.f32 %v950, %v951
    %v953 = vrot.slane %v952, 2
    %v954 = vadd.f32 %v952, %v953
    %v955 = vrot.slane %v954, 1
    %v956 = vadd.f32 %v954, %v955
    %v957 = vadd.f32 %v754, %v835
    %v958 = vadd.f32 %v761, %v842
    %v959 = vadd.f32 %v768, %v849
    %v960 = vadd.f32 %v775, %v856
    %v961 = vadd.f32 %v782, %v863
    %v962 = vadd.f32 %v789, %v870
    %v963 = vadd.f32 %v796, %v877
    %v964 = vadd.f32 %v803, %v884
    %v965 = vadd.f32 %v835, %v907
    %v966 = vadd.f32 %v842, %v914
    %v967 = vadd.f32 %v849, %v921
    %v968 = vadd.f32 %v856, %v928
    %v969 = vadd.f32 %v863, %v935
    %v970 = vadd.f32 %v870, %v942
    %v971 = vadd.f32 %v877, %v949
    %v972 = vadd.f32 %v884, %v956
    %v973 = vsel %vm747, %v724, 0.0
    %v974 = vrot.slane %v973, 4
    %v975 = vadd.f32 %v973, %v974
    %v976 = vrot.slane %v975, 2
    %v977 = vadd.f32 %v975, %v976
    %v978 = vrot.slane %v977, 1
    %v979 = vadd.f32 %v977, %v978
    %v980 = vsel %vm747, %v725, 0.0
    %v981 = vrot.slane %v980, 4
    %v982 = vadd.f32 %v980, %v981
    %v983 = vrot.slane %v982, 2
    %v984 = vadd.f32 %v982, %v983
    %v985 = vrot.slane %v984, 1
    %v986 = vadd.f32 %v984, %v985
    %v987 = vsel %vm747, %v726, 0.0
    %v988 = vrot.slane %v987, 4
    %v989 = vadd.f32 %v987, %v988
    %v990 = vrot.slane %v989, 2
    %v991 = vadd.f32 %v989, %v990
    %v992 = vrot.slane %v991, 1
    %v993 = vadd.f32 %v991, %v992
    %v994 = vsel %vm747, %v727, 0.0
    %v995 = vrot.slane %v994, 4
    %v996 = vadd.f32 %v994, %v995
    %v997 = vrot.slane %v996, 2
    %v998 = vadd.f32 %v996, %v997
    %v999 = vrot.slane %v998, 1
    %v1000 = vadd.f32 %v998, %v999
    %v1001 = vsel %vm747, %v728, 0.0
    %v1002 = vrot.slane %v1001, 4
    %v1003 = vadd.f32 %v1001, %v1002
    %v1004 = vrot.slane %v1003, 2
    %v1005 = vadd.f32 %v1003, %v1004
    %v1006 = vrot.slane %v1005, 1
    %v1007 = vadd.f32 %v1005, %v1006
    %v1008 = vsel %vm747, %v729, 0.0
    %v1009 = vrot.slane %v1008, 4
    %v1010 = vadd.f32 %v1008, %v1009
    %v1011 = vrot.slane %v1010, 2
    %v1012 = vadd.f32 %v1010, %v1011
    %v1013 = vrot.slane %v1012, 1
    %v1014 = vadd.f32 %v1012, %v1013
    %v1015 = vsel %vm747, %v730, 0.0
    %v1016 = vrot.slane %v1015, 4
    %v1017 = vadd.f32 %v1015, %v1016
    %v1018 = vrot.slane %v1017, 2
    %v1019 = vadd.f32 %v1017, %v1018
    %v1020 = vrot.slane %v1019, 1
    %v1021 = vadd.f32 %v1019, %v1020
    %v1022 = vsel %vm747, %v731, 0.0
    %v1023 = vrot.slane %v1022, 4
    %v1024 = vadd.f32 %v1022, %v1023
    %v1025 = vrot.slane %v1024, 2
    %v1026 = vadd.f32 %v1024, %v1025
    %v1027 = vrot.slane %v1026, 1
    %v1028 = vadd.f32 %v1026, %v1027
    %v1037 = vrot.slane %v724, 2
    %v1038 = vrot.slane %v725, 2
    %v1039 = vrot.slane %v726, 2
    %v1040 = vrot.slane %v727, 2
    %v1041 = vrot.slane %v728, 2
    %v1042 = vrot.slane %v729, 2
    %v1043 = vrot.slane %v730, 2
    %v1044 = vrot.slane %v731, 2
    %v1053 = vsel %vm828, %v1037, 0.0
    %v1054 = vrot.slane %v1053, 4
    %v1055 = vadd.f32 %v1053, %v1054
    %v1056 = vrot.slane %v1055, 2
    %v1057 = vadd.f32 %v1055, %v1056
    %v1058 = vrot.slane %v1057, 1
    %v1059 = vadd.f32 %v1057, %v1058
    %v1060 = vsel %vm828, %v1038, 0.0
    %v1061 = vrot.slane %v1060, 4
    %v1062 = vadd.f32 %v1060, %v1061
    %v1063 = vrot.slane %v1062, 2
    %v1064 = vadd.f32 %v1062, %v1063
    %v1065 = vrot.slane %v1064, 1
    %v1066 = vadd.f32 %v1064, %v1065
    %v1067 = vsel %vm828, %v1039, 0.0
    %v1068 = vrot.slane %v1067, 4
    %v1069 = vadd.f32 %v1067, %v1068
    %v1070 = vrot.slane %v1069, 2
    %v1071 = vadd.f32 %v1069, %v1070
    %v1072 = vrot.slane %v1071, 1
    %v1073 = vadd.f32 %v1071, %v1072
    %v1074 = vsel %vm828, %v1040, 0.0
    %v1075 = vrot.slane %v1074, 4
    %v1076 = vadd.f32 %v1074, %v1075
    %v1077 = vrot.slane %v1076, 2
    %v1078 = vadd.f32 %v1076, %v1077
    %v1079 = vrot.slane %v1078, 1
    %v1080 = vadd.f32 %v1078, %v1079
    %v1081 = vsel %vm828, %v1041, 0.0
    %v1082 = vrot.slane %v1081, 4
    %v1083 = vadd.f32 %v1081, %v1082
    %v1084 = vrot.slane %v1083, 2
    %v1085 = vadd.f32 %v1083, %v1084
    %v1086 = vrot.slane %v1085, 1
    %v1087 = vadd.f32 %v1085, %v1086
    %v1088 = vsel %vm828, %v1042, 0.0
    %v1089 = vrot.slane %v1088, 4
    %v1090 = vadd.f32 %v1088, %v1089
    %v1091 = vrot.slane %v1090, 2
    %v1092 = vadd.f32 %v1090, %v1091
    %v1093 = vrot.slane %v1092, 1
    %v1094 = vadd.f32 %v1092, %v1093
    %v1095 = vsel %vm828, %v1043, 0.0
    %v1096 = vrot.slane %v1095, 4
    %v1097 = vadd.f32 %v1095, %v1096
    %v1098 = vrot.slane %v1097, 2
    %v1099 = vadd.f32 %v1097, %v1098
    %v1100 = vrot.slane %v1099, 1
    %v1101 = vadd.f32 %v1099, %v1100
    %v1102 = vsel %vm828, %v1044, 0.0
    %v1103 = vrot.slane %v1102, 4
    %v1104 = vadd.f32 %v1102, %v1103
    %v1105 = vrot.slane %v1104, 2
    %v1106 = vadd.f32 %v1104, %v1105
    %v1107 = vrot.slane %v1106, 1
    %v1108 = vadd.f32 %v1106, %v1107
    %v1109 = vrot.slane %v724, 5
    %v1110 = vrot.slane %v725, 5
    %v1111 = vrot.slane %v726, 5
    %v1112 = vrot.slane %v727, 5
    %v1113 = vrot.slane %v728, 5
    %v1114 = vrot.slane %v729, 5
    %v1115 = vrot.slane %v730, 5
    %v1116 = vrot.slane %v731, 5
    %v1125 = vsel %vm747, %v1109, 0.0
    %v1126 = vrot.slane %v1125, 4
    %v1127 = vadd.f32 %v1125, %v1126
    %v1128 = vrot.slane %v1127, 2
    %v1129 = vadd.f32 %v1127, %v1128
    %v1130 = vrot.slane %v1129, 1
    %v1131 = vadd.f32 %v1129, %v1130
    %v1132 = vsel %vm747, %v1110, 0.0
    %v1133 = vrot.slane %v1132, 4
    %v1134 = vadd.f32 %v1132, %v1133
    %v1135 = vrot.slane %v1134, 2
    %v1136 = vadd.f32 %v1134, %v1135
    %v1137 = vrot.slane %v1136, 1
    %v1138 = vadd.f32 %v1136, %v1137
    %v1139 = vsel %vm747, %v1111, 0.0
    %v1140 = vrot.slane %v1139, 4
    %v1141 = vadd.f32 %v1139, %v1140
    %v1142 = vrot.slane %v1141, 2
    %v1143 = vadd.f32 %v1141, %v1142
    %v1144 = vrot.slane %v1143, 1
    %v1145 = vadd.f32 %v1143, %v1144
    %v1146 = vsel %vm747, %v1112, 0.0
    %v1147 = vrot.slane %v1146, 4
    %v1148 = vadd.f32 %v1146, %v1147
    %v1149 = vrot.slane %v1148, 2
    %v1150 = vadd.f32 %v1148, %v1149
    %v1151 = vrot.slane %v1150, 1
    %v1152 = vadd.f32 %v1150, %v1151
    %v1153 = vsel %vm747, %v1113, 0.0
    %v1154 = vrot.slane %v1153, 4
    %v1155 = vadd.f32 %v1153, %v1154
    %v1156 = vrot.slane %v1155, 2
    %v1157 = vadd.f32 %v1155, %v1156
    %v1158 = vrot.slane %v1157, 1
    %v1159 = vadd.f32 %v1157, %v1158
    %v1160 = vsel %vm747, %v1114, 0.0
    %v1161 = vrot.slane %v1160, 4
    %v1162 = vadd.f32 %v1160, %v1161
    %v1163 = vrot.slane %v1162, 2
    %v1164 = vadd.f32 %v1162, %v1163
    %v1165 = vrot.slane %v1164, 1
    %v1166 = vadd.f32 %v1164, %v1165
    %v1167 = vsel %vm747, %v1115, 0.0
    %v1168 = vrot.slane %v1167, 4
    %v1169 = vadd.f32 %v1167, %v1168
    %v1170 = vrot.slane %v1169, 2
    %v1171 = vadd.f32 %v1169, %v1170
    %v1172 = vrot.slane %v1171, 1
    %v1173 = vadd.f32 %v1171, %v1172
    %v1174 = vsel %vm747, %v1116, 0.0
    %v1175 = vrot.slane %v1174, 4
    %v1176 = vadd.f32 %v1174, %v1175
    %v1177 = vrot.slane %v1176, 2
    %v1178 = vadd.f32 %v1176, %v1177
    %v1179 = vrot.slane %v1178, 1
    %v1180 = vadd.f32 %v1178, %v1179
    %v1181 = vadd.f32 %v979, %v1059
    %v1182 = vadd.f32 %v986, %v1066
    %v1183 = vadd.f32 %v993, %v1073
    %v1184 = vadd.f32 %v1000, %v1080
    %v1185 = vadd.f32 %v1007, %v1087
    %v1186 = vadd.f32 %v1014, %v1094
    %v1187 = vadd.f32 %v1021, %v1101
    %v1188 = vadd.f32 %v1028, %v1108
    %v1189 = vadd.f32 %v1059, %v1131
    %v1190 = vadd.f32 %v1066, %v1138
    %v1191 = vadd.f32 %v1073, %v1145
    %v1192 = vadd.f32 %v1080, %v1152
    %v1193 = vadd.f32 %v1087, %v1159
    %v1194 = vadd.f32 %v1094, %v1166
    %v1195 = vadd.f32 %v1101, %v1173
    %v1196 = vadd.f32 %v1108, %v1180
    %v1197 = vmul.f32 %v957, %v738
    %v1198 = vmul.f32 %v958, %v738
    %v1199 = vmul.f32 %v959, %v738
    %v1200 = vmul.f32 %v960, %v738
    %v1201 = vmul.f32 %v961, %v738
    %v1202 = vmul.f32 %v962, %v738
    %v1203 = vmul.f32 %v963, %v738
    %v1204 = vmul.f32 %v964, %v738
    %v1205 = vadd.f32 %v1197, %v745
    %v1206 = vadd.f32 %v1198, %v745
    %v1207 = vadd.f32 %v1199, %v745
    %v1208 = vadd.f32 %v1200, %v745
    %v1209 = vadd.f32 %v1201, %v745
    %v1210 = vadd.f32 %v1202, %v745
    %v1211 = vadd.f32 %v1203, %v745
    %v1212 = vadd.f32 %v1204, %v745
    %v1213 = vmax.f32 %v1205, 0.0
    %v1214 = vmax.f32 %v1206, 0.0
    %v1215 = vmax.f32 %v1207, 0.0
    %v1216 = vmax.f32 %v1208, 0.0
    %v1217 = vmax.f32 %v1209, 0.0
    %v1218 = vmax.f32 %v1210, 0.0
    %v1219 = vmax.f32 %v1211, 0.0
    %v1220 = vmax.f32 %v1212, 0.0
    %v1221 = vmul.f32 %v965, %v738
    %v1222 = vmul.f32 %v966, %v738
    %v1223 = vmul.f32 %v967, %v738
    %v1224 = vmul.f32 %v968, %v738
    %v1225 = vmul.f32 %v969, %v738
    %v1226 = vmul.f32 %v970, %v738
    %v1227 = vmul.f32 %v971, %v738
    %v1228 = vmul.f32 %v972, %v738
    %v1229 = vadd.f32 %v1221, %v745
    %v1230 = vadd.f32 %v1222, %v745
    %v1231 = vadd.f32 %v1223, %v745
    %v1232 = vadd.f32 %v1224, %v745
    %v1233 = vadd.f32 %v1225, %v745
    %v1234 = vadd.f32 %v1226, %v745
    %v1235 = vadd.f32 %v1227, %v745
    %v1236 = vadd.f32 %v1228, %v745
    %v1237 = vmax.f32 %v1229, 0.0
    %v1238 = vmax.f32 %v1230, 0.0
    %v1239 = vmax.f32 %v1231, 0.0
    %v1240 = vmax.f32 %v1232, 0.0
    %v1241 = vmax.f32 %v1233, 0.0
    %v1242 = vmax.f32 %v1234, 0.0
    %v1243 = vmax.f32 %v1235, 0.0
    %v1244 = vmax.f32 %v1236, 0.0
    %v1245 = vmul.f32 %v1181, %v738
    %v1246 = vmul.f32 %v1182, %v738
    %v1247 = vmul.f32 %v1183, %v738
    %v1248 = vmul.f32 %v1184, %v738
    %v1249 = vmul.f32 %v1185, %v738
    %v1250 = vmul.f32 %v1186, %v738
    %v1251 = vmul.f32 %v1187, %v738
    %v1252 = vmul.f32 %v1188, %v738
    %v1253 = vadd.f32 %v1245, %v745
    %v1254 = vadd.f32 %v1246, %v745
    %v1255 = vadd.f32 %v1247, %v745
    %v1256 = vadd.f32 %v1248, %v745
    %v1257 = vadd.f32 %v1249, %v745
    %v1258 = vadd.f32 %v1250, %v745
    %v1259 = vadd.f32 %v1251, %v745
    %v1260 = vadd.f32 %v1252, %v745
    %v1261 = vmax.f32 %v1253, 0.0
    %v1262 = vmax.f32 %v1254, 0.0
    %v1263 = vmax.f32 %v1255, 0.0
    %v1264 = vmax.f32 %v1256, 0.0
    %v1265 = vmax.f32 %v1257, 0.0
    %v1266 = vmax.f32 %v1258, 0.0
    %v1267 = vmax.f32 %v1259, 0.0
    %v1268 = vmax.f32 %v1260, 0.0
    %v1269 = vmul.f32 %v1189, %v738
    %v1270 = vmul.f32 %v1190, %v738
    %v1271 = vmul.f32 %v1191, %v738
    %v1272 = vmul.f32 %v1192, %v738
    %v1273 = vmul.f32 %v1193, %v738
    %v1274 = vmul.f32 %v1194, %v738
    %v1275 = vmul.f32 %v1195, %v738
    %v1276 = vmul.f32 %v1196, %v738
    %v1277 = vadd.f32 %v1269, %v745
    %v1278 = vadd.f32 %v1270, %v745
    %v1279 = vadd.f32 %v1271, %v745
    %v1280 = vadd.f32 %v1272, %v745
    %v1281 = vadd.f32 %v1273, %v745
    %v1282 = vadd.f32 %v1274, %v745
    %v1283 = vadd.f32 %v1275, %v745
    %v1284 = vadd.f32 %v1276, %v745
    %v1285 = vmax.f32 %v1277, 0.0
    %v1286 = vmax.f32 %v1278, 0.0
    %v1287 = vmax.f32 %v1279, 0.0
    %v1288 = vmax.f32 %v1280, 0.0
    %v1289 = vmax.f32 %v1281, 0.0
    %v1290 = vmax.f32 %v1282, 0.0
    %v1291 = vmax.f32 %v1283, 0.0
    %v1292 = vmax.f32 %v1284, 0.0
    %v1301 = vrot.slane %v1214, 7
    %vm1302 = vcmask 1041409
    %v1303 = vsel %vm1302, %v1301, %v1213
    %v1304 = vrot.slane %v1215, 6
    %vm1305 = vcmask 1042434
    %v1306 = vsel %vm1305, %v1304, %v1303
    %v1307 = vrot.slane %v1216, 5
    %vm1308 = vcmask 1043459
    %v1309 = vsel %vm1308, %v1307, %v1306
    %v1310 = vrot.slane %v1217, 4
    %vm1311 = vcmask 1044484
    %v1312 = vsel %vm1311, %v1310, %v1309
    %v1313 = vrot.slane %v1218, 3
    %vm1314 = vcmask 1045509
    %v1315 = vsel %vm1314, %v1313, %v1312
    %v1316 = vrot.slane %v1219, 2
    %vm1317 = vcmask 1046534
    %v1318 = vsel %vm1317, %v1316, %v1315
    %v1319 = vrot.slane %v1220, 1
    %vm1320 = vcmask 1047559
    %v1321 = vsel %vm1320, %v1319, %v1318
    %v1331 = vrot.slane %v1238, 7
    %v1332 = vsel %vm1302, %v1331, %v1237
    %v1333 = vrot.slane %v1239, 6
    %v1334 = vsel %vm1305, %v1333, %v1332
    %v1335 = vrot.slane %v1240, 5
    %v1336 = vsel %vm1308, %v1335, %v1334
    %v1337 = vrot.slane %v1241, 4
    %v1338 = vsel %vm1311, %v1337, %v1336
    %v1339 = vrot.slane %v1242, 3
    %v1340 = vsel %vm1314, %v1339, %v1338
    %v1341 = vrot.slane %v1243, 2
    %v1342 = vsel %vm1317, %v1341, %v1340
    %v1343 = vrot.slane %v1244, 1
    %v1344 = vsel %vm1320, %v1343, %v1342
    %v1354 = vrot.slane %v1262, 7
    %v1355 = vsel %vm1302, %v1354, %v1261
    %v1356 = vrot.slane %v1263, 6
    %v1357 = vsel %vm1305, %v1356, %v1355
    %v1358 = vrot.slane %v1264, 5
    %v1359 = vsel %vm1308, %v1358, %v1357
    %v1360 = vrot.slane %v1265, 4
    %v1361 = vsel %vm1311, %v1360, %v1359
    %v1362 = vrot.slane %v1266, 3
    %v1363 = vsel %vm1314, %v1362, %v1361
    %v1364 = vrot.slane %v1267, 2
    %v1365 = vsel %vm1317, %v1364, %v1363
    %v1366 = vrot.slane %v1268, 1
    %v1367 = vsel %vm1320, %v1366, %v1365
    %v1377 = vrot.slane %v1286, 7
    %v1378 = vsel %vm1302, %v1377, %v1285
    %v1379 = vrot.slane %v1287, 6
    %v1380 = vsel %vm1305, %v1379, %v1378
    %v1381 = vrot.slane %v1288, 5
    %v1382 = vsel %vm1308, %v1381, %v1380
    %v1383 = vrot.slane %v1289, 4
    %v1384 = vsel %vm1311, %v1383, %v1382
    %v1385 = vrot.slane %v1290, 3
    %v1386 = vsel %vm1314, %v1385, %v1384
    %v1387 = vrot.slane %v1291, 2
    %v1388 = vsel %vm1317, %v1387, %v1386
    %v1389 = vrot.slane %v1292, 1
    %v1390 = vsel %vm1320, %v1389, %v1388
    %v1392 = vpack.c.bf16 %v1321, %v1321
    %v1393 = vpack.c.bf16 %v1344, %v1344
    %v1394 = vpack.c.bf16 %v1367, %v1367
    %v1395 = vpack.c.bf16 %v1390, %v1390
    %v1396 = vld [vmem:[#allocation7] sm:$0xff]
    %v1397 = vld [vmem:[#allocation7 + $0x8] sm:$0xff]
    %v1398 = vld [vmem:[#allocation7 + $0x10] sm:$0xff]
    %v1399 = vld [vmem:[#allocation7 + $0x18] sm:$0xff]
    %v1400 = vld [vmem:[#allocation7 + $0x20] sm:$0xff]
    %v1401 = vld [vmem:[#allocation7 + $0x28] sm:$0xff]
    %v1402 = vld [vmem:[#allocation7 + $0x30] sm:$0xff]
    %v1403 = vld [vmem:[#allocation7 + $0x38] sm:$0xff]
    %v1404 = vld [vmem:[#allocation7 + $0x40] sm:$0xff]
    %v1405 = vld [vmem:[#allocation7 + $0x48] sm:$0xff]
    %v1406 = vld [vmem:[#allocation7 + $0x50] sm:$0xff]
    %v1407 = vld [vmem:[#allocation7 + $0x58] sm:$0xff]
    %v1408 = vld [vmem:[#allocation7 + $0x60] sm:$0xff]
    %v1409 = vld [vmem:[#allocation7 + $0x68] sm:$0xff]
    %v1410 = vld [vmem:[#allocation7 + $0x70] sm:$0xff]
    %v1411 = vld [vmem:[#allocation7 + $0x78] sm:$0xff]
    %v1412 = vld [vmem:[#allocation7 + $0x80] sm:$0xff]
    %v1413 = vld [vmem:[#allocation7 + $0x88] sm:$0xff]
    %v1414 = vld [vmem:[#allocation7 + $0x90] sm:$0xff]
    %v1415 = vld [vmem:[#allocation7 + $0x98] sm:$0xff]
    %v1416 = vld [vmem:[#allocation7 + $0xa0] sm:$0xff]
    %v1417 = vld [vmem:[#allocation7 + $0xa8] sm:$0xff]
    %v1418 = vld [vmem:[#allocation7 + $0xb0] sm:$0xff]
    %v1419 = vld [vmem:[#allocation7 + $0xb8] sm:$0xff]
    %v1420 = vld [vmem:[#allocation7 + $0xc0] sm:$0xff]
    %v1421 = vld [vmem:[#allocation7 + $0xc8] sm:$0xff]
    %v1422 = vld [vmem:[#allocation7 + $0xd0] sm:$0xff]
    %v1423 = vld [vmem:[#allocation7 + $0xd8] sm:$0xff]
    %v1424 = vld [vmem:[#allocation7 + $0xe0] sm:$0xff]
    %v1425 = vld [vmem:[#allocation7 + $0xe8] sm:$0xff]
    %v1426 = vld [vmem:[#allocation7 + $0xf0] sm:$0xff]
    %v1427 = vld [vmem:[#allocation7 + $0xf8] sm:$0xff]
    %v1428 = vld [vmem:[#allocation7 + $0x100] sm:$0xff]
    %v1429 = vld [vmem:[#allocation7 + $0x108] sm:$0xff]
    %v1430 = vld [vmem:[#allocation7 + $0x110] sm:$0xff]
    %v1431 = vld [vmem:[#allocation7 + $0x118] sm:$0xff]
    %v1432 = vld [vmem:[#allocation7 + $0x120] sm:$0xff]
    %v1433 = vld [vmem:[#allocation7 + $0x128] sm:$0xff]
    %v1434 = vld [vmem:[#allocation7 + $0x130] sm:$0xff]
    %v1435 = vld [vmem:[#allocation7 + $0x138] sm:$0xff]
    %v1436 = vld [vmem:[#allocation7 + $0x140] sm:$0xff]
    %v1437 = vld [vmem:[#allocation7 + $0x148] sm:$0xff]
    %v1438 = vld [vmem:[#allocation7 + $0x150] sm:$0xff]
    %v1439 = vld [vmem:[#allocation7 + $0x158] sm:$0xff]
    %v1440 = vld [vmem:[#allocation7 + $0x160] sm:$0xff]
    %v1441 = vld [vmem:[#allocation7 + $0x168] sm:$0xff]
    %v1442 = vld [vmem:[#allocation7 + $0x170] sm:$0xff]
    %v1443 = vld [vmem:[#allocation7 + $0x178] sm:$0xff]
    %v1444 = vld [vmem:[#allocation7 + $0x180] sm:$0xff]
    %v1445 = vld [vmem:[#allocation7 + $0x188] sm:$0xff]
    %v1446 = vld [vmem:[#allocation7 + $0x190] sm:$0xff]
    %v1447 = vld [vmem:[#allocation7 + $0x198] sm:$0xff]
    %v1448 = vld [vmem:[#allocation7 + $0x1a0] sm:$0xff]
    %v1449 = vld [vmem:[#allocation7 + $0x1a8] sm:$0xff]
    %v1450 = vld [vmem:[#allocation7 + $0x1b0] sm:$0xff]
    %v1451 = vld [vmem:[#allocation7 + $0x1b8] sm:$0xff]
    %v1452 = vld [vmem:[#allocation7 + $0x1c0] sm:$0xff]
    %v1453 = vld [vmem:[#allocation7 + $0x1c8] sm:$0xff]
    %v1454 = vld [vmem:[#allocation7 + $0x1d0] sm:$0xff]
    %v1455 = vld [vmem:[#allocation7 + $0x1d8] sm:$0xff]
    %v1456 = vld [vmem:[#allocation7 + $0x1e0] sm:$0xff]
    %v1457 = vld [vmem:[#allocation7 + $0x1e8] sm:$0xff]
    %v1458 = vld [vmem:[#allocation7 + $0x1f0] sm:$0xff]
    %v1459 = vld [vmem:[#allocation7 + $0x1f8] sm:$0xff]
    %v1460 = vld [vmem:[#allocation7 + $0x200] sm:$0xff]
    %v1461 = vld [vmem:[#allocation7 + $0x208] sm:$0xff]
    %v1462 = vld [vmem:[#allocation7 + $0x210] sm:$0xff]
    %v1463 = vld [vmem:[#allocation7 + $0x218] sm:$0xff]
    %v1464 = vld [vmem:[#allocation7 + $0x220] sm:$0xff]
    %v1465 = vld [vmem:[#allocation7 + $0x228] sm:$0xff]
    %v1466 = vld [vmem:[#allocation7 + $0x230] sm:$0xff]
    %v1467 = vld [vmem:[#allocation7 + $0x238] sm:$0xff]
    %v1468 = vld [vmem:[#allocation7 + $0x240] sm:$0xff]
    %v1469 = vld [vmem:[#allocation7 + $0x248] sm:$0xff]
    %v1470 = vld [vmem:[#allocation7 + $0x250] sm:$0xff]
    %v1471 = vld [vmem:[#allocation7 + $0x258] sm:$0xff]
    %v1472 = vld [vmem:[#allocation7 + $0x260] sm:$0xff]
    %v1473 = vld [vmem:[#allocation7 + $0x268] sm:$0xff]
    %v1474 = vld [vmem:[#allocation7 + $0x270] sm:$0xff]
    %v1475 = vld [vmem:[#allocation7 + $0x278] sm:$0xff]
    %v1476 = vld [vmem:[#allocation7 + $0x280] sm:$0xff]
    %v1477 = vld [vmem:[#allocation7 + $0x288] sm:$0xff]
    %v1478 = vld [vmem:[#allocation7 + $0x290] sm:$0xff]
    %v1479 = vld [vmem:[#allocation7 + $0x298] sm:$0xff]
    %v1480 = vld [vmem:[#allocation7 + $0x2a0] sm:$0xff]
    %v1481 = vld [vmem:[#allocation7 + $0x2a8] sm:$0xff]
    %v1482 = vld [vmem:[#allocation7 + $0x2b0] sm:$0xff]
    %v1483 = vld [vmem:[#allocation7 + $0x2b8] sm:$0xff]
    %v1484 = vld [vmem:[#allocation7 + $0x2c0] sm:$0xff]
    %v1485 = vld [vmem:[#allocation7 + $0x2c8] sm:$0xff]
    %v1486 = vld [vmem:[#allocation7 + $0x2d0] sm:$0xff]
    %v1487 = vld [vmem:[#allocation7 + $0x2d8] sm:$0xff]
    %v1488 = vld [vmem:[#allocation7 + $0x2e0] sm:$0xff]
    %v1489 = vld [vmem:[#allocation7 + $0x2e8] sm:$0xff]
    %v1490 = vld [vmem:[#allocation7 + $0x2f0] sm:$0xff]
    %v1491 = vld [vmem:[#allocation7 + $0x2f8] sm:$0xff]
    %v1492 = vld [vmem:[#allocation7 + $0x300] sm:$0xff]
    %v1493 = vld [vmem:[#allocation7 + $0x308] sm:$0xff]
    %v1494 = vld [vmem:[#allocation7 + $0x310] sm:$0xff]
    %v1495 = vld [vmem:[#allocation7 + $0x318] sm:$0xff]
    %v1496 = vld [vmem:[#allocation7 + $0x320] sm:$0xff]
    %v1497 = vld [vmem:[#allocation7 + $0x328] sm:$0xff]
    %v1498 = vld [vmem:[#allocation7 + $0x330] sm:$0xff]
    %v1499 = vld [vmem:[#allocation7 + $0x338] sm:$0xff]
    %v1500 = vld [vmem:[#allocation7 + $0x340] sm:$0xff]
    %v1501 = vld [vmem:[#allocation7 + $0x348] sm:$0xff]
    %v1502 = vld [vmem:[#allocation7 + $0x350] sm:$0xff]
    %v1503 = vld [vmem:[#allocation7 + $0x358] sm:$0xff]
    %v1504 = vld [vmem:[#allocation7 + $0x360] sm:$0xff]
    %v1505 = vld [vmem:[#allocation7 + $0x368] sm:$0xff]
    %v1506 = vld [vmem:[#allocation7 + $0x370] sm:$0xff]
    %v1507 = vld [vmem:[#allocation7 + $0x378] sm:$0xff]
    %v1508 = vld [vmem:[#allocation7 + $0x380] sm:$0xff]
    %v1509 = vld [vmem:[#allocation7 + $0x388] sm:$0xff]
    %v1510 = vld [vmem:[#allocation7 + $0x390] sm:$0xff]
    %v1511 = vld [vmem:[#allocation7 + $0x398] sm:$0xff]
    %v1512 = vld [vmem:[#allocation7 + $0x3a0] sm:$0xff]
    %v1513 = vld [vmem:[#allocation7 + $0x3a8] sm:$0xff]
    %v1514 = vld [vmem:[#allocation7 + $0x3b0] sm:$0xff]
    %v1515 = vld [vmem:[#allocation7 + $0x3b8] sm:$0xff]
    %v1516 = vld [vmem:[#allocation7 + $0x3c0] sm:$0xff]
    %v1517 = vld [vmem:[#allocation7 + $0x3c8] sm:$0xff]
    %v1518 = vld [vmem:[#allocation7 + $0x3d0] sm:$0xff]
    %v1519 = vld [vmem:[#allocation7 + $0x3d8] sm:$0xff]
    %v1520 = vld [vmem:[#allocation7 + $0x3e0] sm:$0xff]
    %v1521 = vld [vmem:[#allocation7 + $0x3e8] sm:$0xff]
    %v1522 = vld [vmem:[#allocation7 + $0x3f0] sm:$0xff]
    %v1523 = vld [vmem:[#allocation7 + $0x3f8] sm:$0xff]
    %v1524 = vld [vmem:[#allocation7 + $0x400] sm:$0xff]
    %v1525 = vld [vmem:[#allocation7 + $0x408] sm:$0xff]
    %v1526 = vld [vmem:[#allocation7 + $0x410] sm:$0xff]
    %v1527 = vld [vmem:[#allocation7 + $0x418] sm:$0xff]
    %v1528 = vld [vmem:[#allocation7 + $0x420] sm:$0xff]
    %v1529 = vld [vmem:[#allocation7 + $0x428] sm:$0xff]
    %v1530 = vld [vmem:[#allocation7 + $0x430] sm:$0xff]
    %v1531 = vld [vmem:[#allocation7 + $0x438] sm:$0xff]
    %v1532 = vld [vmem:[#allocation7 + $0x440] sm:$0xff]
    %v1533 = vld [vmem:[#allocation7 + $0x448] sm:$0xff]
    %v1534 = vld [vmem:[#allocation7 + $0x450] sm:$0xff]
    %v1535 = vld [vmem:[#allocation7 + $0x458] sm:$0xff]
    %v1536 = vld [vmem:[#allocation7 + $0x460] sm:$0xff]
    %v1537 = vld [vmem:[#allocation7 + $0x468] sm:$0xff]
    %v1538 = vld [vmem:[#allocation7 + $0x470] sm:$0xff]
    %v1539 = vld [vmem:[#allocation7 + $0x478] sm:$0xff]
    %v1540 = vld [vmem:[#allocation7 + $0x480] sm:$0xff]
    %v1541 = vld [vmem:[#allocation7 + $0x488] sm:$0xff]
    %v1542 = vld [vmem:[#allocation7 + $0x490] sm:$0xff]
    %v1543 = vld [vmem:[#allocation7 + $0x498] sm:$0xff]
    %v1544 = vld [vmem:[#allocation7 + $0x4a0] sm:$0xff]
    %v1545 = vld [vmem:[#allocation7 + $0x4a8] sm:$0xff]
    %v1546 = vld [vmem:[#allocation7 + $0x4b0] sm:$0xff]
    %v1547 = vld [vmem:[#allocation7 + $0x4b8] sm:$0xff]
    %v1548 = vld [vmem:[#allocation7 + $0x4c0] sm:$0xff]
    %v1549 = vld [vmem:[#allocation7 + $0x4c8] sm:$0xff]
    %v1550 = vld [vmem:[#allocation7 + $0x4d0] sm:$0xff]
    %v1551 = vld [vmem:[#allocation7 + $0x4d8] sm:$0xff]
    %v1552 = vld [vmem:[#allocation7 + $0x4e0] sm:$0xff]
    %v1553 = vld [vmem:[#allocation7 + $0x4e8] sm:$0xff]
    %v1554 = vld [vmem:[#allocation7 + $0x4f0] sm:$0xff]
    %v1555 = vld [vmem:[#allocation7 + $0x4f8] sm:$0xff]
    %v1556 = vld [vmem:[#allocation7 + $0x500] sm:$0xff]
    %v1557 = vld [vmem:[#allocation7 + $0x508] sm:$0xff]
    %v1558 = vld [vmem:[#allocation7 + $0x510] sm:$0xff]
    %v1559 = vld [vmem:[#allocation7 + $0x518] sm:$0xff]
    %v1560 = vld [vmem:[#allocation7 + $0x520] sm:$0xff]
    %v1561 = vld [vmem:[#allocation7 + $0x528] sm:$0xff]
    %v1562 = vld [vmem:[#allocation7 + $0x530] sm:$0xff]
    %v1563 = vld [vmem:[#allocation7 + $0x538] sm:$0xff]
    %v1564 = vld [vmem:[#allocation7 + $0x540] sm:$0xff]
    %v1565 = vld [vmem:[#allocation7 + $0x548] sm:$0xff]
    %v1566 = vld [vmem:[#allocation7 + $0x550] sm:$0xff]
    %v1567 = vld [vmem:[#allocation7 + $0x558] sm:$0xff]
    %v1568 = vld [vmem:[#allocation7 + $0x560] sm:$0xff]
    %v1569 = vld [vmem:[#allocation7 + $0x568] sm:$0xff]
    %v1570 = vld [vmem:[#allocation7 + $0x570] sm:$0xff]
    %v1571 = vld [vmem:[#allocation7 + $0x578] sm:$0xff]
    %v1572 = vld [vmem:[#allocation7 + $0x580] sm:$0xff]
    %v1573 = vld [vmem:[#allocation7 + $0x588] sm:$0xff]
    %v1574 = vld [vmem:[#allocation7 + $0x590] sm:$0xff]
    %v1575 = vld [vmem:[#allocation7 + $0x598] sm:$0xff]
    %v1576 = vld [vmem:[#allocation7 + $0x5a0] sm:$0xff]
    %v1577 = vld [vmem:[#allocation7 + $0x5a8] sm:$0xff]
    %v1578 = vld [vmem:[#allocation7 + $0x5b0] sm:$0xff]
    %v1579 = vld [vmem:[#allocation7 + $0x5b8] sm:$0xff]
    %v1580 = vld [vmem:[#allocation7 + $0x5c0] sm:$0xff]
    %v1581 = vld [vmem:[#allocation7 + $0x5c8] sm:$0xff]
    %v1582 = vld [vmem:[#allocation7 + $0x5d0] sm:$0xff]
    %v1583 = vld [vmem:[#allocation7 + $0x5d8] sm:$0xff]
    %v1584 = vld [vmem:[#allocation7 + $0x5e0] sm:$0xff]
    %v1585 = vld [vmem:[#allocation7 + $0x5e8] sm:$0xff]
    %v1586 = vld [vmem:[#allocation7 + $0x5f0] sm:$0xff]
    %v1587 = vld [vmem:[#allocation7 + $0x5f8] sm:$0xff]
    %v1780 = vunpack.c.l.b16 %v1396
    %v1781 = vunpack.c.h.b16 %v1396
    %v1782 = vunpack.c.l.b16 %v1397
    %v1783 = vunpack.c.h.b16 %v1397
    %v1784 = vunpack.c.l.b16 %v1398
    %v1785 = vunpack.c.h.b16 %v1398
    %v1786 = vunpack.c.l.b16 %v1399
    %v1787 = vunpack.c.h.b16 %v1399
    %v1788 = vunpack.c.l.b16 %v1400
    %v1789 = vunpack.c.h.b16 %v1400
    %v1790 = vunpack.c.l.b16 %v1401
    %v1791 = vunpack.c.h.b16 %v1401
    %v1792 = vunpack.c.l.b16 %v1402
    %v1793 = vunpack.c.h.b16 %v1402
    %v1794 = vunpack.c.l.b16 %v1403
    %v1795 = vunpack.c.h.b16 %v1403
    %v1796 = vunpack.c.l.b16 %v1404
    %v1797 = vunpack.c.h.b16 %v1404
    %v1798 = vunpack.c.l.b16 %v1405
    %v1799 = vunpack.c.h.b16 %v1405
    %v1800 = vunpack.c.l.b16 %v1406
    %v1801 = vunpack.c.h.b16 %v1406
    %v1802 = vunpack.c.l.b16 %v1407
    %v1803 = vunpack.c.h.b16 %v1407
    %v1804 = vunpack.c.l.b16 %v1408
    %v1805 = vunpack.c.h.b16 %v1408
    %v1806 = vunpack.c.l.b16 %v1409
    %v1807 = vunpack.c.h.b16 %v1409
    %v1808 = vunpack.c.l.b16 %v1410
    %v1809 = vunpack.c.h.b16 %v1410
    %v1810 = vunpack.c.l.b16 %v1411
    %v1811 = vunpack.c.h.b16 %v1411
    %v1812 = vunpack.c.l.b16 %v1412
    %v1813 = vunpack.c.h.b16 %v1412
    %v1814 = vunpack.c.l.b16 %v1413
    %v1815 = vunpack.c.h.b16 %v1413
    %v1816 = vunpack.c.l.b16 %v1414
    %v1817 = vunpack.c.h.b16 %v1414
    %v1818 = vunpack.c.l.b16 %v1415
    %v1819 = vunpack.c.h.b16 %v1415
    %v1820 = vunpack.c.l.b16 %v1416
    %v1821 = vunpack.c.h.b16 %v1416
    %v1822 = vunpack.c.l.b16 %v1417
    %v1823 = vunpack.c.h.b16 %v1417
    %v1824 = vunpack.c.l.b16 %v1418
    %v1825 = vunpack.c.h.b16 %v1418
    %v1826 = vunpack.c.l.b16 %v1419
    %v1827 = vunpack.c.h.b16 %v1419
    %v1828 = vunpack.c.l.b16 %v1420
    %v1829 = vunpack.c.h.b16 %v1420
    %v1830 = vunpack.c.l.b16 %v1421
    %v1831 = vunpack.c.h.b16 %v1421
    %v1832 = vunpack.c.l.b16 %v1422
    %v1833 = vunpack.c.h.b16 %v1422
    %v1834 = vunpack.c.l.b16 %v1423
    %v1835 = vunpack.c.h.b16 %v1423
    %v1836 = vunpack.c.l.b16 %v1424
    %v1837 = vunpack.c.h.b16 %v1424
    %v1838 = vunpack.c.l.b16 %v1425
    %v1839 = vunpack.c.h.b16 %v1425
    %v1840 = vunpack.c.l.b16 %v1426
    %v1841 = vunpack.c.h.b16 %v1426
    %v1842 = vunpack.c.l.b16 %v1427
    %v1843 = vunpack.c.h.b16 %v1427
    %v1844 = vunpack.c.l.b16 %v1428
    %v1845 = vunpack.c.h.b16 %v1428
    %v1846 = vunpack.c.l.b16 %v1429
    %v1847 = vunpack.c.h.b16 %v1429
    %v1848 = vunpack.c.l.b16 %v1430
    %v1849 = vunpack.c.h.b16 %v1430
    %v1850 = vunpack.c.l.b16 %v1431
    %v1851 = vunpack.c.h.b16 %v1431
    %v1852 = vunpack.c.l.b16 %v1432
    %v1853 = vunpack.c.h.b16 %v1432
    %v1854 = vunpack.c.l.b16 %v1433
    %v1855 = vunpack.c.h.b16 %v1433
    %v1856 = vunpack.c.l.b16 %v1434
    %v1857 = vunpack.c.h.b16 %v1434
    %v1858 = vunpack.c.l.b16 %v1435
    %v1859 = vunpack.c.h.b16 %v1435
    %v1860 = vunpack.c.l.b16 %v1436
    %v1861 = vunpack.c.h.b16 %v1436
    %v1862 = vunpack.c.l.b16 %v1437
    %v1863 = vunpack.c.h.b16 %v1437
    %v1864 = vunpack.c.l.b16 %v1438
    %v1865 = vunpack.c.h.b16 %v1438
    %v1866 = vunpack.c.l.b16 %v1439
    %v1867 = vunpack.c.h.b16 %v1439
    %v1868 = vunpack.c.l.b16 %v1440
    %v1869 = vunpack.c.h.b16 %v1440
    %v1870 = vunpack.c.l.b16 %v1441
    %v1871 = vunpack.c.h.b16 %v1441
    %v1872 = vunpack.c.l.b16 %v1442
    %v1873 = vunpack.c.h.b16 %v1442
    %v1874 = vunpack.c.l.b16 %v1443
    %v1875 = vunpack.c.h.b16 %v1443
    %v1876 = vunpack.c.l.b16 %v1444
    %v1877 = vunpack.c.h.b16 %v1444
    %v1878 = vunpack.c.l.b16 %v1445
    %v1879 = vunpack.c.h.b16 %v1445
    %v1880 = vunpack.c.l.b16 %v1446
    %v1881 = vunpack.c.h.b16 %v1446
    %v1882 = vunpack.c.l.b16 %v1447
    %v1883 = vunpack.c.h.b16 %v1447
    %v1884 = vunpack.c.l.b16 %v1448
    %v1885 = vunpack.c.h.b16 %v1448
    %v1886 = vunpack.c.l.b16 %v1449
    %v1887 = vunpack.c.h.b16 %v1449
    %v1888 = vunpack.c.l.b16 %v1450
    %v1889 = vunpack.c.h.b16 %v1450
    %v1890 = vunpack.c.l.b16 %v1451
    %v1891 = vunpack.c.h.b16 %v1451
    %v1892 = vunpack.c.l.b16 %v1452
    %v1893 = vunpack.c.h.b16 %v1452
    %v1894 = vunpack.c.l.b16 %v1453
    %v1895 = vunpack.c.h.b16 %v1453
    %v1896 = vunpack.c.l.b16 %v1454
    %v1897 = vunpack.c.h.b16 %v1454
    %v1898 = vunpack.c.l.b16 %v1455
    %v1899 = vunpack.c.h.b16 %v1455
    %v1900 = vunpack.c.l.b16 %v1456
    %v1901 = vunpack.c.h.b16 %v1456
    %v1902 = vunpack.c.l.b16 %v1457
    %v1903 = vunpack.c.h.b16 %v1457
    %v1904 = vunpack.c.l.b16 %v1458
    %v1905 = vunpack.c.h.b16 %v1458
    %v1906 = vunpack.c.l.b16 %v1459
    %v1907 = vunpack.c.h.b16 %v1459
    %v1908 = vunpack.c.l.b16 %v1460
    %v1909 = vunpack.c.h.b16 %v1460
    %v1910 = vunpack.c.l.b16 %v1461
    %v1911 = vunpack.c.h.b16 %v1461
    %v1912 = vunpack.c.l.b16 %v1462
    %v1913 = vunpack.c.h.b16 %v1462
    %v1914 = vunpack.c.l.b16 %v1463
    %v1915 = vunpack.c.h.b16 %v1463
    %v1916 = vunpack.c.l.b16 %v1464
    %v1917 = vunpack.c.h.b16 %v1464
    %v1918 = vunpack.c.l.b16 %v1465
    %v1919 = vunpack.c.h.b16 %v1465
    %v1920 = vunpack.c.l.b16 %v1466
    %v1921 = vunpack.c.h.b16 %v1466
    %v1922 = vunpack.c.l.b16 %v1467
    %v1923 = vunpack.c.h.b16 %v1467
    %v1924 = vunpack.c.l.b16 %v1468
    %v1925 = vunpack.c.h.b16 %v1468
    %v1926 = vunpack.c.l.b16 %v1469
    %v1927 = vunpack.c.h.b16 %v1469
    %v1928 = vunpack.c.l.b16 %v1470
    %v1929 = vunpack.c.h.b16 %v1470
    %v1930 = vunpack.c.l.b16 %v1471
    %v1931 = vunpack.c.h.b16 %v1471
    %v1932 = vunpack.c.l.b16 %v1472
    %v1933 = vunpack.c.h.b16 %v1472
    %v1934 = vunpack.c.l.b16 %v1473
    %v1935 = vunpack.c.h.b16 %v1473
    %v1936 = vunpack.c.l.b16 %v1474
    %v1937 = vunpack.c.h.b16 %v1474
    %v1938 = vunpack.c.l.b16 %v1475
    %v1939 = vunpack.c.h.b16 %v1475
    %v1940 = vunpack.c.l.b16 %v1476
    %v1941 = vunpack.c.h.b16 %v1476
    %v1942 = vunpack.c.l.b16 %v1477
    %v1943 = vunpack.c.h.b16 %v1477
    %v1944 = vunpack.c.l.b16 %v1478
    %v1945 = vunpack.c.h.b16 %v1478
    %v1946 = vunpack.c.l.b16 %v1479
    %v1947 = vunpack.c.h.b16 %v1479
    %v1948 = vunpack.c.l.b16 %v1480
    %v1949 = vunpack.c.h.b16 %v1480
    %v1950 = vunpack.c.l.b16 %v1481
    %v1951 = vunpack.c.h.b16 %v1481
    %v1952 = vunpack.c.l.b16 %v1482
    %v1953 = vunpack.c.h.b16 %v1482
    %v1954 = vunpack.c.l.b16 %v1483
    %v1955 = vunpack.c.h.b16 %v1483
    %v1956 = vunpack.c.l.b16 %v1484
    %v1957 = vunpack.c.h.b16 %v1484
    %v1958 = vunpack.c.l.b16 %v1485
    %v1959 = vunpack.c.h.b16 %v1485
    %v1960 = vunpack.c.l.b16 %v1486
    %v1961 = vunpack.c.h.b16 %v1486
    %v1962 = vunpack.c.l.b16 %v1487
    %v1963 = vunpack.c.h.b16 %v1487
    %v1964 = vunpack.c.l.b16 %v1488
    %v1965 = vunpack.c.h.b16 %v1488
    %v1966 = vunpack.c.l.b16 %v1489
    %v1967 = vunpack.c.h.b16 %v1489
    %v1968 = vunpack.c.l.b16 %v1490
    %v1969 = vunpack.c.h.b16 %v1490
    %v1970 = vunpack.c.l.b16 %v1491
    %v1971 = vunpack.c.h.b16 %v1491
    %v1972 = vunpack.c.l.b16 %v1492
    %v1973 = vunpack.c.h.b16 %v1492
    %v1974 = vunpack.c.l.b16 %v1493
    %v1975 = vunpack.c.h.b16 %v1493
    %v1976 = vunpack.c.l.b16 %v1494
    %v1977 = vunpack.c.h.b16 %v1494
    %v1978 = vunpack.c.l.b16 %v1495
    %v1979 = vunpack.c.h.b16 %v1495
    %v1980 = vunpack.c.l.b16 %v1496
    %v1981 = vunpack.c.h.b16 %v1496
    %v1982 = vunpack.c.l.b16 %v1497
    %v1983 = vunpack.c.h.b16 %v1497
    %v1984 = vunpack.c.l.b16 %v1498
    %v1985 = vunpack.c.h.b16 %v1498
    %v1986 = vunpack.c.l.b16 %v1499
    %v1987 = vunpack.c.h.b16 %v1499
    %v1988 = vunpack.c.l.b16 %v1500
    %v1989 = vunpack.c.h.b16 %v1500
    %v1990 = vunpack.c.l.b16 %v1501
    %v1991 = vunpack.c.h.b16 %v1501
    %v1992 = vunpack.c.l.b16 %v1502
    %v1993 = vunpack.c.h.b16 %v1502
    %v1994 = vunpack.c.l.b16 %v1503
    %v1995 = vunpack.c.h.b16 %v1503
    %v1996 = vunpack.c.l.b16 %v1504
    %v1997 = vunpack.c.h.b16 %v1504
    %v1998 = vunpack.c.l.b16 %v1505
    %v1999 = vunpack.c.h.b16 %v1505
    %v2000 = vunpack.c.l.b16 %v1506
    %v2001 = vunpack.c.h.b16 %v1506
    %v2002 = vunpack.c.l.b16 %v1507
    %v2003 = vunpack.c.h.b16 %v1507
    %v2004 = vunpack.c.l.b16 %v1508
    %v2005 = vunpack.c.h.b16 %v1508
    %v2006 = vunpack.c.l.b16 %v1509
    %v2007 = vunpack.c.h.b16 %v1509
    %v2008 = vunpack.c.l.b16 %v1510
    %v2009 = vunpack.c.h.b16 %v1510
    %v2010 = vunpack.c.l.b16 %v1511
    %v2011 = vunpack.c.h.b16 %v1511
    %v2012 = vunpack.c.l.b16 %v1512
    %v2013 = vunpack.c.h.b16 %v1512
    %v2014 = vunpack.c.l.b16 %v1513
    %v2015 = vunpack.c.h.b16 %v1513
    %v2016 = vunpack.c.l.b16 %v1514
    %v2017 = vunpack.c.h.b16 %v1514
    %v2018 = vunpack.c.l.b16 %v1515
    %v2019 = vunpack.c.h.b16 %v1515
    %v2020 = vunpack.c.l.b16 %v1516
    %v2021 = vunpack.c.h.b16 %v1516
    %v2022 = vunpack.c.l.b16 %v1517
    %v2023 = vunpack.c.h.b16 %v1517
    %v2024 = vunpack.c.l.b16 %v1518
    %v2025 = vunpack.c.h.b16 %v1518
    %v2026 = vunpack.c.l.b16 %v1519
    %v2027 = vunpack.c.h.b16 %v1519
    %v2028 = vunpack.c.l.b16 %v1520
    %v2029 = vunpack.c.h.b16 %v1520
    %v2030 = vunpack.c.l.b16 %v1521
    %v2031 = vunpack.c.h.b16 %v1521
    %v2032 = vunpack.c.l.b16 %v1522
    %v2033 = vunpack.c.h.b16 %v1522
    %v2034 = vunpack.c.l.b16 %v1523
    %v2035 = vunpack.c.h.b16 %v1523
    %v2036 = vunpack.c.l.b16 %v1524
    %v2037 = vunpack.c.h.b16 %v1524
    %v2038 = vunpack.c.l.b16 %v1525
    %v2039 = vunpack.c.h.b16 %v1525
    %v2040 = vunpack.c.l.b16 %v1526
    %v2041 = vunpack.c.h.b16 %v1526
    %v2042 = vunpack.c.l.b16 %v1527
    %v2043 = vunpack.c.h.b16 %v1527
    %v2044 = vunpack.c.l.b16 %v1528
    %v2045 = vunpack.c.h.b16 %v1528
    %v2046 = vunpack.c.l.b16 %v1529
    %v2047 = vunpack.c.h.b16 %v1529
    %v2048 = vunpack.c.l.b16 %v1530
    %v2049 = vunpack.c.h.b16 %v1530
    %v2050 = vunpack.c.l.b16 %v1531
    %v2051 = vunpack.c.h.b16 %v1531
    %v2052 = vunpack.c.l.b16 %v1532
    %v2053 = vunpack.c.h.b16 %v1532
    %v2054 = vunpack.c.l.b16 %v1533
    %v2055 = vunpack.c.h.b16 %v1533
    %v2056 = vunpack.c.l.b16 %v1534
    %v2057 = vunpack.c.h.b16 %v1534
    %v2058 = vunpack.c.l.b16 %v1535
    %v2059 = vunpack.c.h.b16 %v1535
    %v2060 = vunpack.c.l.b16 %v1536
    %v2061 = vunpack.c.h.b16 %v1536
    %v2062 = vunpack.c.l.b16 %v1537
    %v2063 = vunpack.c.h.b16 %v1537
    %v2064 = vunpack.c.l.b16 %v1538
    %v2065 = vunpack.c.h.b16 %v1538
    %v2066 = vunpack.c.l.b16 %v1539
    %v2067 = vunpack.c.h.b16 %v1539
    %v2068 = vunpack.c.l.b16 %v1540
    %v2069 = vunpack.c.h.b16 %v1540
    %v2070 = vunpack.c.l.b16 %v1541
    %v2071 = vunpack.c.h.b16 %v1541
    %v2072 = vunpack.c.l.b16 %v1542
    %v2073 = vunpack.c.h.b16 %v1542
    %v2074 = vunpack.c.l.b16 %v1543
    %v2075 = vunpack.c.h.b16 %v1543
    %v2076 = vunpack.c.l.b16 %v1544
    %v2077 = vunpack.c.h.b16 %v1544
    %v2078 = vunpack.c.l.b16 %v1545
    %v2079 = vunpack.c.h.b16 %v1545
    %v2080 = vunpack.c.l.b16 %v1546
    %v2081 = vunpack.c.h.b16 %v1546
    %v2082 = vunpack.c.l.b16 %v1547
    %v2083 = vunpack.c.h.b16 %v1547
    %v2084 = vunpack.c.l.b16 %v1548
    %v2085 = vunpack.c.h.b16 %v1548
    %v2086 = vunpack.c.l.b16 %v1549
    %v2087 = vunpack.c.h.b16 %v1549
    %v2088 = vunpack.c.l.b16 %v1550
    %v2089 = vunpack.c.h.b16 %v1550
    %v2090 = vunpack.c.l.b16 %v1551
    %v2091 = vunpack.c.h.b16 %v1551
    %v2092 = vunpack.c.l.b16 %v1552
    %v2093 = vunpack.c.h.b16 %v1552
    %v2094 = vunpack.c.l.b16 %v1553
    %v2095 = vunpack.c.h.b16 %v1553
    %v2096 = vunpack.c.l.b16 %v1554
    %v2097 = vunpack.c.h.b16 %v1554
    %v2098 = vunpack.c.l.b16 %v1555
    %v2099 = vunpack.c.h.b16 %v1555
    %v2100 = vunpack.c.l.b16 %v1556
    %v2101 = vunpack.c.h.b16 %v1556
    %v2102 = vunpack.c.l.b16 %v1557
    %v2103 = vunpack.c.h.b16 %v1557
    %v2104 = vunpack.c.l.b16 %v1558
    %v2105 = vunpack.c.h.b16 %v1558
    %v2106 = vunpack.c.l.b16 %v1559
    %v2107 = vunpack.c.h.b16 %v1559
    %v2108 = vunpack.c.l.b16 %v1560
    %v2109 = vunpack.c.h.b16 %v1560
    %v2110 = vunpack.c.l.b16 %v1561
    %v2111 = vunpack.c.h.b16 %v1561
    %v2112 = vunpack.c.l.b16 %v1562
    %v2113 = vunpack.c.h.b16 %v1562
    %v2114 = vunpack.c.l.b16 %v1563
    %v2115 = vunpack.c.h.b16 %v1563
    %v2116 = vunpack.c.l.b16 %v1564
    %v2117 = vunpack.c.h.b16 %v1564
    %v2118 = vunpack.c.l.b16 %v1565
    %v2119 = vunpack.c.h.b16 %v1565
    %v2120 = vunpack.c.l.b16 %v1566
    %v2121 = vunpack.c.h.b16 %v1566
    %v2122 = vunpack.c.l.b16 %v1567
    %v2123 = vunpack.c.h.b16 %v1567
    %v2124 = vunpack.c.l.b16 %v1568
    %v2125 = vunpack.c.h.b16 %v1568
    %v2126 = vunpack.c.l.b16 %v1569
    %v2127 = vunpack.c.h.b16 %v1569
    %v2128 = vunpack.c.l.b16 %v1570
    %v2129 = vunpack.c.h.b16 %v1570
    %v2130 = vunpack.c.l.b16 %v1571
    %v2131 = vunpack.c.h.b16 %v1571
    %v2132 = vunpack.c.l.b16 %v1572
    %v2133 = vunpack.c.h.b16 %v1572
    %v2134 = vunpack.c.l.b16 %v1573
    %v2135 = vunpack.c.h.b16 %v1573
    %v2136 = vunpack.c.l.b16 %v1574
    %v2137 = vunpack.c.h.b16 %v1574
    %v2138 = vunpack.c.l.b16 %v1575
    %v2139 = vunpack.c.h.b16 %v1575
    %v2140 = vunpack.c.l.b16 %v1576
    %v2141 = vunpack.c.h.b16 %v1576
    %v2142 = vunpack.c.l.b16 %v1577
    %v2143 = vunpack.c.h.b16 %v1577
    %v2144 = vunpack.c.l.b16 %v1578
    %v2145 = vunpack.c.h.b16 %v1578
    %v2146 = vunpack.c.l.b16 %v1579
    %v2147 = vunpack.c.h.b16 %v1579
    %v2148 = vunpack.c.l.b16 %v1580
    %v2149 = vunpack.c.h.b16 %v1580
    %v2150 = vunpack.c.l.b16 %v1581
    %v2151 = vunpack.c.h.b16 %v1581
    %v2152 = vunpack.c.l.b16 %v1582
    %v2153 = vunpack.c.h.b16 %v1582
    %v2154 = vunpack.c.l.b16 %v1583
    %v2155 = vunpack.c.h.b16 %v1583
    %v2156 = vunpack.c.l.b16 %v1584
    %v2157 = vunpack.c.h.b16 %v1584
    %v2158 = vunpack.c.l.b16 %v1585
    %v2159 = vunpack.c.h.b16 %v1585
    %v2160 = vunpack.c.l.b16 %v1586
    %v2161 = vunpack.c.h.b16 %v1586
    %v2162 = vunpack.c.l.b16 %v1587
    %v2163 = vunpack.c.h.b16 %v1587
    %v2164 = vpack.c.b16 %v1786, %v1780
    %v2165 = vpack.c.b16 %v1787, %v1781
    %v2166 = vpack.c.b16 %v1788, %v1782
    %v2167 = vpack.c.b16 %v1789, %v1783
    %v2168 = vpack.c.b16 %v1790, %v1784
    %v2169 = vpack.c.b16 %v1791, %v1785
    %v2170 = vpack.c.b16 %v1798, %v1792
    %v2171 = vpack.c.b16 %v1799, %v1793
    %v2172 = vpack.c.b16 %v1800, %v1794
    %v2173 = vpack.c.b16 %v1801, %v1795
    %v2174 = vpack.c.b16 %v1802, %v1796
    %v2175 = vpack.c.b16 %v1803, %v1797
    %v2176 = vpack.c.b16 %v1810, %v1804
    %v2177 = vpack.c.b16 %v1811, %v1805
    %v2178 = vpack.c.b16 %v1812, %v1806
    %v2179 = vpack.c.b16 %v1813, %v1807
    %v2180 = vpack.c.b16 %v1814, %v1808
    %v2181 = vpack.c.b16 %v1815, %v1809
    %v2182 = vpack.c.b16 %v1822, %v1816
    %v2183 = vpack.c.b16 %v1823, %v1817
    %v2184 = vpack.c.b16 %v1824, %v1818
    %v2185 = vpack.c.b16 %v1825, %v1819
    %v2186 = vpack.c.b16 %v1826, %v1820
    %v2187 = vpack.c.b16 %v1827, %v1821
    %v2188 = vpack.c.b16 %v1834, %v1828
    %v2189 = vpack.c.b16 %v1835, %v1829
    %v2190 = vpack.c.b16 %v1836, %v1830
    %v2191 = vpack.c.b16 %v1837, %v1831
    %v2192 = vpack.c.b16 %v1838, %v1832
    %v2193 = vpack.c.b16 %v1839, %v1833
    %v2194 = vpack.c.b16 %v1846, %v1840
    %v2195 = vpack.c.b16 %v1847, %v1841
    %v2196 = vpack.c.b16 %v1848, %v1842
    %v2197 = vpack.c.b16 %v1849, %v1843
    %v2198 = vpack.c.b16 %v1850, %v1844
    %v2199 = vpack.c.b16 %v1851, %v1845
    %v2200 = vpack.c.b16 %v1858, %v1852
    %v2201 = vpack.c.b16 %v1859, %v1853
    %v2202 = vpack.c.b16 %v1860, %v1854
    %v2203 = vpack.c.b16 %v1861, %v1855
    %v2204 = vpack.c.b16 %v1862, %v1856
    %v2205 = vpack.c.b16 %v1863, %v1857
    %v2206 = vpack.c.b16 %v1870, %v1864
    %v2207 = vpack.c.b16 %v1871, %v1865
    %v2208 = vpack.c.b16 %v1872, %v1866
    %v2209 = vpack.c.b16 %v1873, %v1867
    %v2210 = vpack.c.b16 %v1874, %v1868
    %v2211 = vpack.c.b16 %v1875, %v1869
    %v2212 = vpack.c.b16 %v1882, %v1876
    %v2213 = vpack.c.b16 %v1883, %v1877
    %v2214 = vpack.c.b16 %v1884, %v1878
    %v2215 = vpack.c.b16 %v1885, %v1879
    %v2216 = vpack.c.b16 %v1886, %v1880
    %v2217 = vpack.c.b16 %v1887, %v1881
    %v2218 = vpack.c.b16 %v1894, %v1888
    %v2219 = vpack.c.b16 %v1895, %v1889
    %v2220 = vpack.c.b16 %v1896, %v1890
    %v2221 = vpack.c.b16 %v1897, %v1891
    %v2222 = vpack.c.b16 %v1898, %v1892
    %v2223 = vpack.c.b16 %v1899, %v1893
    %v2224 = vpack.c.b16 %v1906, %v1900
    %v2225 = vpack.c.b16 %v1907, %v1901
    %v2226 = vpack.c.b16 %v1908, %v1902
    %v2227 = vpack.c.b16 %v1909, %v1903
    %v2228 = vpack.c.b16 %v1910, %v1904
    %v2229 = vpack.c.b16 %v1911, %v1905
    %v2230 = vpack.c.b16 %v1918, %v1912
    %v2231 = vpack.c.b16 %v1919, %v1913
    %v2232 = vpack.c.b16 %v1920, %v1914
    %v2233 = vpack.c.b16 %v1921, %v1915
    %v2234 = vpack.c.b16 %v1922, %v1916
    %v2235 = vpack.c.b16 %v1923, %v1917
    %v2236 = vpack.c.b16 %v1930, %v1924
    %v2237 = vpack.c.b16 %v1931, %v1925
    %v2238 = vpack.c.b16 %v1932, %v1926
    %v2239 = vpack.c.b16 %v1933, %v1927
    %v2240 = vpack.c.b16 %v1934, %v1928
    %v2241 = vpack.c.b16 %v1935, %v1929
    %v2242 = vpack.c.b16 %v1942, %v1936
    %v2243 = vpack.c.b16 %v1943, %v1937
    %v2244 = vpack.c.b16 %v1944, %v1938
    %v2245 = vpack.c.b16 %v1945, %v1939
    %v2246 = vpack.c.b16 %v1946, %v1940
    %v2247 = vpack.c.b16 %v1947, %v1941
    %v2248 = vpack.c.b16 %v1954, %v1948
    %v2249 = vpack.c.b16 %v1955, %v1949
    %v2250 = vpack.c.b16 %v1956, %v1950
    %v2251 = vpack.c.b16 %v1957, %v1951
    %v2252 = vpack.c.b16 %v1958, %v1952
    %v2253 = vpack.c.b16 %v1959, %v1953
    %v2254 = vpack.c.b16 %v1966, %v1960
    %v2255 = vpack.c.b16 %v1967, %v1961
    %v2256 = vpack.c.b16 %v1968, %v1962
    %v2257 = vpack.c.b16 %v1969, %v1963
    %v2258 = vpack.c.b16 %v1970, %v1964
    %v2259 = vpack.c.b16 %v1971, %v1965
    %v2260 = vpack.c.b16 %v1978, %v1972
    %v2261 = vpack.c.b16 %v1979, %v1973
    %v2262 = vpack.c.b16 %v1980, %v1974
    %v2263 = vpack.c.b16 %v1981, %v1975
    %v2264 = vpack.c.b16 %v1982, %v1976
    %v2265 = vpack.c.b16 %v1983, %v1977
    %v2266 = vpack.c.b16 %v1990, %v1984
    %v2267 = vpack.c.b16 %v1991, %v1985
    %v2268 = vpack.c.b16 %v1992, %v1986
    %v2269 = vpack.c.b16 %v1993, %v1987
    %v2270 = vpack.c.b16 %v1994, %v1988
    %v2271 = vpack.c.b16 %v1995, %v1989
    %v2272 = vpack.c.b16 %v2002, %v1996
    %v2273 = vpack.c.b16 %v2003, %v1997
    %v2274 = vpack.c.b16 %v2004, %v1998
    %v2275 = vpack.c.b16 %v2005, %v1999
    %v2276 = vpack.c.b16 %v2006, %v2000
    %v2277 = vpack.c.b16 %v2007, %v2001
    %v2278 = vpack.c.b16 %v2014, %v2008
    %v2279 = vpack.c.b16 %v2015, %v2009
    %v2280 = vpack.c.b16 %v2016, %v2010
    %v2281 = vpack.c.b16 %v2017, %v2011
    %v2282 = vpack.c.b16 %v2018, %v2012
    %v2283 = vpack.c.b16 %v2019, %v2013
    %v2284 = vpack.c.b16 %v2026, %v2020
    %v2285 = vpack.c.b16 %v2027, %v2021
    %v2286 = vpack.c.b16 %v2028, %v2022
    %v2287 = vpack.c.b16 %v2029, %v2023
    %v2288 = vpack.c.b16 %v2030, %v2024
    %v2289 = vpack.c.b16 %v2031, %v2025
    %v2290 = vpack.c.b16 %v2038, %v2032
    %v2291 = vpack.c.b16 %v2039, %v2033
    %v2292 = vpack.c.b16 %v2040, %v2034
    %v2293 = vpack.c.b16 %v2041, %v2035
    %v2294 = vpack.c.b16 %v2042, %v2036
    %v2295 = vpack.c.b16 %v2043, %v2037
    %v2296 = vpack.c.b16 %v2050, %v2044
    %v2297 = vpack.c.b16 %v2051, %v2045
    %v2298 = vpack.c.b16 %v2052, %v2046
    %v2299 = vpack.c.b16 %v2053, %v2047
    %v2300 = vpack.c.b16 %v2054, %v2048
    %v2301 = vpack.c.b16 %v2055, %v2049
    %v2302 = vpack.c.b16 %v2062, %v2056
    %v2303 = vpack.c.b16 %v2063, %v2057
    %v2304 = vpack.c.b16 %v2064, %v2058
    %v2305 = vpack.c.b16 %v2065, %v2059
    %v2306 = vpack.c.b16 %v2066, %v2060
    %v2307 = vpack.c.b16 %v2067, %v2061
    %v2308 = vpack.c.b16 %v2074, %v2068
    %v2309 = vpack.c.b16 %v2075, %v2069
    %v2310 = vpack.c.b16 %v2076, %v2070
    %v2311 = vpack.c.b16 %v2077, %v2071
    %v2312 = vpack.c.b16 %v2078, %v2072
    %v2313 = vpack.c.b16 %v2079, %v2073
    %v2314 = vpack.c.b16 %v2086, %v2080
    %v2315 = vpack.c.b16 %v2087, %v2081
    %v2316 = vpack.c.b16 %v2088, %v2082
    %v2317 = vpack.c.b16 %v2089, %v2083
    %v2318 = vpack.c.b16 %v2090, %v2084
    %v2319 = vpack.c.b16 %v2091, %v2085
    %v2320 = vpack.c.b16 %v2098, %v2092
    %v2321 = vpack.c.b16 %v2099, %v2093
    %v2322 = vpack.c.b16 %v2100, %v2094
    %v2323 = vpack.c.b16 %v2101, %v2095
    %v2324 = vpack.c.b16 %v2102, %v2096
    %v2325 = vpack.c.b16 %v2103, %v2097
    %v2326 = vpack.c.b16 %v2110, %v2104
    %v2327 = vpack.c.b16 %v2111, %v2105
    %v2328 = vpack.c.b16 %v2112, %v2106
    %v2329 = vpack.c.b16 %v2113, %v2107
    %v2330 = vpack.c.b16 %v2114, %v2108
    %v2331 = vpack.c.b16 %v2115, %v2109
    %v2332 = vpack.c.b16 %v2122, %v2116
    %v2333 = vpack.c.b16 %v2123, %v2117
    %v2334 = vpack.c.b16 %v2124, %v2118
    %v2335 = vpack.c.b16 %v2125, %v2119
    %v2336 = vpack.c.b16 %v2126, %v2120
    %v2337 = vpack.c.b16 %v2127, %v2121
    %v2338 = vpack.c.b16 %v2134, %v2128
    %v2339 = vpack.c.b16 %v2135, %v2129
    %v2340 = vpack.c.b16 %v2136, %v2130
    %v2341 = vpack.c.b16 %v2137, %v2131
    %v2342 = vpack.c.b16 %v2138, %v2132
    %v2343 = vpack.c.b16 %v2139, %v2133
    %v2344 = vpack.c.b16 %v2146, %v2140
    %v2345 = vpack.c.b16 %v2147, %v2141
    %v2346 = vpack.c.b16 %v2148, %v2142
    %v2347 = vpack.c.b16 %v2149, %v2143
    %v2348 = vpack.c.b16 %v2150, %v2144
    %v2349 = vpack.c.b16 %v2151, %v2145
    %v2350 = vpack.c.b16 %v2158, %v2152
    %v2351 = vpack.c.b16 %v2159, %v2153
    %v2352 = vpack.c.b16 %v2160, %v2154
    %v2353 = vpack.c.b16 %v2161, %v2155
    %v2354 = vpack.c.b16 %v2162, %v2156
    %v2355 = vpack.c.b16 %v2163, %v2157
    %2548 = vmatprep.subr.bf16.mxu0 %v2165
    %2549 = vmatpush1.bf16.msra.mxu0 %v2164
    %2550 = vmatprep.subr.bf16.mxu0 %v2171
    %2551 = vmatpush1.bf16.msra.mxu0 %v2170
    %2552 = vmatprep.subr.bf16.mxu0 %v2177
    %2553 = vmatpush1.bf16.msra.mxu0 %v2176
    %2554 = vmatprep.subr.bf16.mxu0 %v2183
    %2555 = vmatpush1.bf16.msra.mxu0 %v2182
    %2556 = vmatprep.subr.bf16.mxu0 %v2189
    %2557 = vmatpush1.bf16.msra.mxu0 %v2188
    %2558 = vmatprep.subr.bf16.mxu0 %v2195
    %2559 = vmatpush1.bf16.msra.mxu0 %v2194
    %2560 = vmatprep.subr.bf16.mxu0 %v2201
    %2561 = vmatpush1.bf16.msra.mxu0 %v2200
    %2562 = vmatprep.subr.bf16.mxu0 %v2207
    %2563 = vmatpush1.bf16.msra.mxu0 %v2206
    %2564 = vmatprep.subr.bf16.mxu0 %v2213
    %2565 = vmatpush1.bf16.msra.mxu0 %v2212
    %2566 = vmatprep.subr.bf16.mxu0 %v2219
    %2567 = vmatpush1.bf16.msra.mxu0 %v2218
    %2568 = vmatprep.subr.bf16.mxu0 %v2225
    %2569 = vmatpush1.bf16.msra.mxu0 %v2224
    %2570 = vmatprep.subr.bf16.mxu0 %v2231
    %2571 = vmatpush1.bf16.msra.mxu0 %v2230
    %2572 = vmatprep.subr.bf16.mxu0 %v2237
    %2573 = vmatpush1.bf16.msra.mxu0 %v2236
    %2574 = vmatprep.subr.bf16.mxu0 %v2243
    %2575 = vmatpush1.bf16.msra.mxu0 %v2242
    %2576 = vmatprep.subr.bf16.mxu0 %v2249
    %2577 = vmatpush1.bf16.msra.mxu0 %v2248
    %2578 = vmatprep.subr.bf16.mxu0 %v2255
    %2579 = vmatpush1.bf16.msra.mxu0 %v2254
    %2580 = vmatprep.mubr.bf16.mxu0 %v1393
    %2581 = vmatmul.mubr.bf16.gmra.mrb[0].mxu0 %v1392
    %v2582 = vpop.f32.mrb[0].mxu0
    %v2583 = vadd.f32 0.0, %v2582
    %v2584 = vpop.f32.mrb[0].mxu0
    %v2585 = vadd.f32 0.0, %v2584
    %v2586 = vpop.f32.mrb[0].mxu0
    %v2587 = vpop.f32.mrb[0].mxu0
    %2588 = vdwg.mxu0
    %2589 = vmatprep.subr.bf16.mxu0 %v2261
    %2590 = vmatpush1.bf16.msra.mxu0 %v2260
    %2591 = vmatprep.subr.bf16.mxu0 %v2267
    %2592 = vmatpush1.bf16.msra.mxu0 %v2266
    %2593 = vmatprep.subr.bf16.mxu0 %v2273
    %2594 = vmatpush1.bf16.msra.mxu0 %v2272
    %2595 = vmatprep.subr.bf16.mxu0 %v2279
    %2596 = vmatpush1.bf16.msra.mxu0 %v2278
    %2597 = vmatprep.subr.bf16.mxu0 %v2285
    %2598 = vmatpush1.bf16.msra.mxu0 %v2284
    %2599 = vmatprep.subr.bf16.mxu0 %v2291
    %2600 = vmatpush1.bf16.msra.mxu0 %v2290
    %2601 = vmatprep.subr.bf16.mxu0 %v2297
    %2602 = vmatpush1.bf16.msra.mxu0 %v2296
    %2603 = vmatprep.subr.bf16.mxu0 %v2303
    %2604 = vmatpush1.bf16.msra.mxu0 %v2302
    %2605 = vmatprep.subr.bf16.mxu0 %v2309
    %2606 = vmatpush1.bf16.msra.mxu0 %v2308
    %2607 = vmatprep.subr.bf16.mxu0 %v2315
    %2608 = vmatpush1.bf16.msra.mxu0 %v2314
    %2609 = vmatprep.subr.bf16.mxu0 %v2321
    %2610 = vmatpush1.bf16.msra.mxu0 %v2320
    %2611 = vmatprep.subr.bf16.mxu0 %v2327
    %2612 = vmatpush1.bf16.msra.mxu0 %v2326
    %2613 = vmatprep.subr.bf16.mxu0 %v2333
    %2614 = vmatpush1.bf16.msra.mxu0 %v2332
    %2615 = vmatprep.subr.bf16.mxu0 %v2339
    %2616 = vmatpush1.bf16.msra.mxu0 %v2338
    %2617 = vmatprep.subr.bf16.mxu0 %v2345
    %2618 = vmatpush1.bf16.msra.mxu0 %v2344
    %2619 = vmatprep.subr.bf16.mxu0 %v2351
    %2620 = vmatpush1.bf16.msra.mxu0 %v2350
    %2621 = vmatprep.mubr.bf16.mxu0 %v1395
    %2622 = vmatmul.mubr.bf16.gmra.mrb[0].mxu0 %v1394
    %v2623 = vpop.f32.mrb[0].mxu0
    %v2624 = vadd.f32 %v2583, %v2623
    %v2625 = vpop.f32.mrb[0].mxu0
    %v2626 = vadd.f32 %v2585, %v2625
    %v2627 = vpop.f32.mrb[0].mxu0
    %v2628 = vpop.f32.mrb[0].mxu0
    %2629 = vdwg.mxu0
    %2630 = vmatprep.subr.bf16.mxu0 %v2167
    %2631 = vmatpush1.bf16.msra.mxu0 %v2166
    %2632 = vmatprep.subr.bf16.mxu0 %v2173
    %2633 = vmatpush1.bf16.msra.mxu0 %v2172
    %2634 = vmatprep.subr.bf16.mxu0 %v2179
    %2635 = vmatpush1.bf16.msra.mxu0 %v2178
    %2636 = vmatprep.subr.bf16.mxu0 %v2185
    %2637 = vmatpush1.bf16.msra.mxu0 %v2184
    %2638 = vmatprep.subr.bf16.mxu0 %v2191
    %2639 = vmatpush1.bf16.msra.mxu0 %v2190
    %2640 = vmatprep.subr.bf16.mxu0 %v2197
    %2641 = vmatpush1.bf16.msra.mxu0 %v2196
    %2642 = vmatprep.subr.bf16.mxu0 %v2203
    %2643 = vmatpush1.bf16.msra.mxu0 %v2202
    %2644 = vmatprep.subr.bf16.mxu0 %v2209
    %2645 = vmatpush1.bf16.msra.mxu0 %v2208
    %2646 = vmatprep.subr.bf16.mxu0 %v2215
    %2647 = vmatpush1.bf16.msra.mxu0 %v2214
    %2648 = vmatprep.subr.bf16.mxu0 %v2221
    %2649 = vmatpush1.bf16.msra.mxu0 %v2220
    %2650 = vmatprep.subr.bf16.mxu0 %v2227
    %2651 = vmatpush1.bf16.msra.mxu0 %v2226
    %2652 = vmatprep.subr.bf16.mxu0 %v2233
    %2653 = vmatpush1.bf16.msra.mxu0 %v2232
    %2654 = vmatprep.subr.bf16.mxu0 %v2239
    %2655 = vmatpush1.bf16.msra.mxu0 %v2238
    %2656 = vmatprep.subr.bf16.mxu0 %v2245
    %2657 = vmatpush1.bf16.msra.mxu0 %v2244
    %2658 = vmatprep.subr.bf16.mxu0 %v2251
    %2659 = vmatpush1.bf16.msra.mxu0 %v2250
    %2660 = vmatprep.subr.bf16.mxu0 %v2257
    %2661 = vmatpush1.bf16.msra.mxu0 %v2256
    %2662 = vmatprep.mubr.bf16.mxu0 %v1393
    %2663 = vmatmul.mubr.bf16.gmra.mrb[0].mxu0 %v1392
    %v2664 = vpop.f32.mrb[0].mxu0
    %v2665 = vadd.f32 0.0, %v2664
    %v2666 = vpop.f32.mrb[0].mxu0
    %v2667 = vadd.f32 0.0, %v2666
    %v2668 = vpop.f32.mrb[0].mxu0
    %v2669 = vpop.f32.mrb[0].mxu0
    %2670 = vdwg.mxu0
    %2671 = vmatprep.subr.bf16.mxu0 %v2263
    %2672 = vmatpush1.bf16.msra.mxu0 %v2262
    %2673 = vmatprep.subr.bf16.mxu0 %v2269
    %2674 = vmatpush1.bf16.msra.mxu0 %v2268
    %2675 = vmatprep.subr.bf16.mxu0 %v2275
    %2676 = vmatpush1.bf16.msra.mxu0 %v2274
    %2677 = vmatprep.subr.bf16.mxu0 %v2281
    %2678 = vmatpush1.bf16.msra.mxu0 %v2280
    %2679 = vmatprep.subr.bf16.mxu0 %v2287
    %2680 = vmatpush1.bf16.msra.mxu0 %v2286
    %2681 = vmatprep.subr.bf16.mxu0 %v2293
    %2682 = vmatpush1.bf16.msra.mxu0 %v2292
    %2683 = vmatprep.subr.bf16.mxu0 %v2299
    %2684 = vmatpush1.bf16.msra.mxu0 %v2298
    %2685 = vmatprep.subr.bf16.mxu0 %v2305
    %2686 = vmatpush1.bf16.msra.mxu0 %v2304
    %2687 = vmatprep.subr.bf16.mxu0 %v2311
    %2688 = vmatpush1.bf16.msra.mxu0 %v2310
    %2689 = vmatprep.subr.bf16.mxu0 %v2317
    %2690 = vmatpush1.bf16.msra.mxu0 %v2316
    %2691 = vmatprep.subr.bf16.mxu0 %v2323
    %2692 = vmatpush1.bf16.msra.mxu0 %v2322
    %2693 = vmatprep.subr.bf16.mxu0 %v2329
    %2694 = vmatpush1.bf16.msra.mxu0 %v2328
    %2695 = vmatprep.subr.bf16.mxu0 %v2335
    %2696 = vmatpush1.bf16.msra.mxu0 %v2334
    %2697 = vmatprep.subr.bf16.mxu0 %v2341
    %2698 = vmatpush1.bf16.msra.mxu0 %v2340
    %2699 = vmatprep.subr.bf16.mxu0 %v2347
    %2700 = vmatpush1.bf16.msra.mxu0 %v2346
    %2701 = vmatprep.subr.bf16.mxu0 %v2353
    %2702 = vmatpush1.bf16.msra.mxu0 %v2352
    %2703 = vmatprep.mubr.bf16.mxu0 %v1395
    %2704 = vmatmul.mubr.bf16.gmra.mrb[0].mxu0 %v1394
    %v2705 = vpop.f32.mrb[0].mxu0
    %v2706 = vadd.f32 %v2665, %v2705
    %v2707 = vpop.f32.mrb[0].mxu0
    %v2708 = vadd.f32 %v2667, %v2707
    %v2709 = vpop.f32.mrb[0].mxu0
    %v2710 = vpop.f32.mrb[0].mxu0
    %2711 = vdwg.mxu0
    %2712 = vmatprep.subr.bf16.mxu0 %v2169
    %2713 = vmatpush1.bf16.msra.mxu0 %v2168
    %2714 = vmatprep.subr.bf16.mxu0 %v2175
    %2715 = vmatpush1.bf16.msra.mxu0 %v2174
    %2716 = vmatprep.subr.bf16.mxu0 %v2181
    %2717 = vmatpush1.bf16.msra.mxu0 %v2180
    %2718 = vmatprep.subr.bf16.mxu0 %v2187
    %2719 = vmatpush1.bf16.msra.mxu0 %v2186
    %2720 = vmatprep.subr.bf16.mxu0 %v2193
    %2721 = vmatpush1.bf16.msra.mxu0 %v2192
    %2722 = vmatprep.subr.bf16.mxu0 %v2199
    %2723 = vmatpush1.bf16.msra.mxu0 %v2198
    %2724 = vmatprep.subr.bf16.mxu0 %v2205
    %2725 = vmatpush1.bf16.msra.mxu0 %v2204
    %2726 = vmatprep.subr.bf16.mxu0 %v2211
    %2727 = vmatpush1.bf16.msra.mxu0 %v2210
    %2728 = vmatprep.subr.bf16.mxu0 %v2217
    %2729 = vmatpush1.bf16.msra.mxu0 %v2216
    %2730 = vmatprep.subr.bf16.mxu0 %v2223
    %2731 = vmatpush1.bf16.msra.mxu0 %v2222
    %2732 = vmatprep.subr.bf16.mxu0 %v2229
    %2733 = vmatpush1.bf16.msra.mxu0 %v2228
    %2734 = vmatprep.subr.bf16.mxu0 %v2235
    %2735 = vmatpush1.bf16.msra.mxu0 %v2234
    %2736 = vmatprep.subr.bf16.mxu0 %v2241
    %2737 = vmatpush1.bf16.msra.mxu0 %v2240
    %2738 = vmatprep.subr.bf16.mxu0 %v2247
    %2739 = vmatpush1.bf16.msra.mxu0 %v2246
    %2740 = vmatprep.subr.bf16.mxu0 %v2253
    %2741 = vmatpush1.bf16.msra.mxu0 %v2252
    %2742 = vmatprep.subr.bf16.mxu0 %v2259
    %2743 = vmatpush1.bf16.msra.mxu0 %v2258
    %2744 = vmatprep.mubr.bf16.mxu0 %v1393
    %2745 = vmatmul.mubr.bf16.gmra.mrb[0].mxu0 %v1392
    %v2746 = vpop.f32.mrb[0].mxu0
    %v2747 = vadd.f32 0.0, %v2746
    %v2748 = vpop.f32.mrb[0].mxu0
    %v2749 = vadd.f32 0.0, %v2748
    %v2750 = vpop.f32.mrb[0].mxu0
    %v2751 = vpop.f32.mrb[0].mxu0
    %2752 = vdwg.mxu0
    %2753 = vmatprep.subr.bf16.mxu0 %v2265
    %2754 = vmatpush1.bf16.msra.mxu0 %v2264
    %2755 = vmatprep.subr.bf16.mxu0 %v2271
    %2756 = vmatpush1.bf16.msra.mxu0 %v2270
    %2757 = vmatprep.subr.bf16.mxu0 %v2277
    %2758 = vmatpush1.bf16.msra.mxu0 %v2276
    %2759 = vmatprep.subr.bf16.mxu0 %v2283
    %2760 = vmatpush1.bf16.msra.mxu0 %v2282
    %2761 = vmatprep.subr.bf16.mxu0 %v2289
    %2762 = vmatpush1.bf16.msra.mxu0 %v2288
    %2763 = vmatprep.subr.bf16.mxu0 %v2295
    %2764 = vmatpush1.bf16.msra.mxu0 %v2294
    %2765 = vmatprep.subr.bf16.mxu0 %v2301
    %2766 = vmatpush1.bf16.msra.mxu0 %v2300
    %2767 = vmatprep.subr.bf16.mxu0 %v2307
    %2768 = vmatpush1.bf16.msra.mxu0 %v2306
    %2769 = vmatprep.subr.bf16.mxu0 %v2313
    %2770 = vmatpush1.bf16.msra.mxu0 %v2312
    %2771 = vmatprep.subr.bf16.mxu0 %v2319
    %2772 = vmatpush1.bf16.msra.mxu0 %v2318
    %2773 = vmatprep.subr.bf16.mxu0 %v2325
    %2774 = vmatpush1.bf16.msra.mxu0 %v2324
    %2775 = vmatprep.subr.bf16.mxu0 %v2331
    %2776 = vmatpush1.bf16.msra.mxu0 %v2330
    %2777 = vmatprep.subr.bf16.mxu0 %v2337
    %2778 = vmatpush1.bf16.msra.mxu0 %v2336
    %2779 = vmatprep.subr.bf16.mxu0 %v2343
    %2780 = vmatpush1.bf16.msra.mxu0 %v2342
    %2781 = vmatprep.subr.bf16.mxu0 %v2349
    %2782 = vmatpush1.bf16.msra.mxu0 %v2348
    %2783 = vmatprep.subr.bf16.mxu0 %v2355
    %2784 = vmatpush1.bf16.msra.mxu0 %v2354
    %2785 = vmatprep.mubr.bf16.mxu0 %v1395
    %2786 = vmatmul.mubr.bf16.gmra.mrb[0].mxu0 %v1394
    %v2787 = vpop.f32.mrb[0].mxu0
    %v2788 = vadd.f32 %v2747, %v2787
    %v2789 = vpop.f32.mrb[0].mxu0
    %v2790 = vadd.f32 %v2749, %v2789
    %v2791 = vpop.f32.mrb[0].mxu0
    %v2792 = vpop.f32.mrb[0].mxu0
    %2793 = vdwg.mxu0
    %v2794 = vmax.f32 %v2624, 0.0
    %v2795 = vmax.f32 %v2626, 0.0
    %v2796 = vmax.f32 %v2706, 0.0
    %v2797 = vmax.f32 %v2708, 0.0
    %v2798 = vmax.f32 %v2788, 0.0
    %v2799 = vmax.f32 %v2790, 0.0
    %v2800 = vpack.c.bf16 %v2794, %v2794
    %v2801 = vpack.c.bf16 %v2795, %v2795
    %v2802 = vpack.c.bf16 %v2796, %v2796
    %v2803 = vpack.c.bf16 %v2797, %v2797
    %v2804 = vpack.c.bf16 %v2798, %v2798
    %v2805 = vpack.c.bf16 %v2799, %v2799
    %v2806 = vld [vmem:[#allocation8] sm:$0xf]
    %v2807 = vld [vmem:[#allocation8 + $0x4] sm:$0xf]
    %v2808 = vld [vmem:[#allocation8 + $0x8] sm:$0xf]
    %v2809 = vld [vmem:[#allocation8 + $0xc] sm:$0xf]
    %v2810 = vld [vmem:[#allocation8 + $0x10] sm:$0xf]
    %v2811 = vld [vmem:[#allocation8 + $0x14] sm:$0xf]
    %v2812 = vld [vmem:[#allocation8 + $0x18] sm:$0xf]
    %v2813 = vld [vmem:[#allocation8 + $0x1c] sm:$0xf]
    %v2814 = vld [vmem:[#allocation8 + $0x20] sm:$0xf]
    %v2815 = vld [vmem:[#allocation8 + $0x24] sm:$0xf]
    %v2816 = vld [vmem:[#allocation8 + $0x28] sm:$0xf]
    %v2817 = vld [vmem:[#allocation8 + $0x2c] sm:$0xf]
    %v2818 = vld [vmem:[#allocation8 + $0x30] sm:$0xf]
    %v2819 = vld [vmem:[#allocation8 + $0x34] sm:$0xf]
    %v2820 = vld [vmem:[#allocation8 + $0x38] sm:$0xf]
    %v2821 = vld [vmem:[#allocation8 + $0x3c] sm:$0xf]
    %v2822 = vld [vmem:[#allocation8 + $0x40] sm:$0xf]
    %v2823 = vld [vmem:[#allocation8 + $0x44] sm:$0xf]
    %v2824 = vld [vmem:[#allocation8 + $0x48] sm:$0xf]
    %v2825 = vld [vmem:[#allocation8 + $0x4c] sm:$0xf]
    %v2826 = vld [vmem:[#allocation8 + $0x50] sm:$0xf]
    %v2827 = vld [vmem:[#allocation8 + $0x54] sm:$0xf]
    %v2828 = vld [vmem:[#allocation8 + $0x58] sm:$0xf]
    %v2829 = vld [vmem:[#allocation8 + $0x5c] sm:$0xf]
    %v2830 = vld [vmem:[#allocation8 + $0x60] sm:$0xf]
    %v2831 = vld [vmem:[#allocation8 + $0x64] sm:$0xf]
    %v2832 = vld [vmem:[#allocation8 + $0x68] sm:$0xf]
    %v2833 = vld [vmem:[#allocation8 + $0x6c] sm:$0xf]
    %v2834 = vld [vmem:[#allocation8 + $0x70] sm:$0xf]
    %v2835 = vld [vmem:[#allocation8 + $0x74] sm:$0xf]
    %v2836 = vld [vmem:[#allocation8 + $0x78] sm:$0xf]
    %v2837 = vld [vmem:[#allocation8 + $0x7c] sm:$0xf]
    %v2838 = vld [vmem:[#allocation8 + $0x80] sm:$0xf]
    %v2839 = vld [vmem:[#allocation8 + $0x84] sm:$0xf]
    %v2840 = vld [vmem:[#allocation8 + $0x88] sm:$0xf]
    %v2841 = vld [vmem:[#allocation8 + $0x8c] sm:$0xf]
    %v2842 = vld [vmem:[#allocation8 + $0x90] sm:$0xf]
    %v2843 = vld [vmem:[#allocation8 + $0x94] sm:$0xf]
    %v2844 = vld [vmem:[#allocation8 + $0x98] sm:$0xf]
    %v2845 = vld [vmem:[#allocation8 + $0x9c] sm:$0xf]
    %v2846 = vld [vmem:[#allocation8 + $0xa0] sm:$0xf]
    %v2847 = vld [vmem:[#allocation8 + $0xa4] sm:$0xf]
    %v2848 = vld [vmem:[#allocation8 + $0xa8] sm:$0xf]
    %v2849 = vld [vmem:[#allocation8 + $0xac] sm:$0xf]
    %v2850 = vld [vmem:[#allocation8 + $0xb0] sm:$0xf]
    %v2851 = vld [vmem:[#allocation8 + $0xb4] sm:$0xf]
    %v2852 = vld [vmem:[#allocation8 + $0xb8] sm:$0xf]
    %v2853 = vld [vmem:[#allocation8 + $0xbc] sm:$0xf]
    %v2854 = vld [vmem:[#allocation8 + $0xc0] sm:$0xf]
    %v2855 = vld [vmem:[#allocation8 + $0xc4] sm:$0xf]
    %v2856 = vld [vmem:[#allocation8 + $0xc8] sm:$0xf]
    %v2857 = vld [vmem:[#allocation8 + $0xcc] sm:$0xf]
    %v2858 = vld [vmem:[#allocation8 + $0xd0] sm:$0xf]
    %v2859 = vld [vmem:[#allocation8 + $0xd4] sm:$0xf]
    %v2860 = vld [vmem:[#allocation8 + $0xd8] sm:$0xf]
    %v2861 = vld [vmem:[#allocation8 + $0xdc] sm:$0xf]
    %v2862 = vld [vmem:[#allocation8 + $0xe0] sm:$0xf]
    %v2863 = vld [vmem:[#allocation8 + $0xe4] sm:$0xf]
    %v2864 = vld [vmem:[#allocation8 + $0xe8] sm:$0xf]
    %v2865 = vld [vmem:[#allocation8 + $0xec] sm:$0xf]
    %v2866 = vld [vmem:[#allocation8 + $0xf0] sm:$0xf]
    %v2867 = vld [vmem:[#allocation8 + $0xf4] sm:$0xf]
    %v2868 = vld [vmem:[#allocation8 + $0xf8] sm:$0xf]
    %v2869 = vld [vmem:[#allocation8 + $0xfc] sm:$0xf]
    %v2870 = vld [vmem:[#allocation8 + $0x100] sm:$0xf]
    %v2871 = vld [vmem:[#allocation8 + $0x104] sm:$0xf]
    %v2872 = vld [vmem:[#allocation8 + $0x108] sm:$0xf]
    %v2873 = vld [vmem:[#allocation8 + $0x10c] sm:$0xf]
    %v2874 = vld [vmem:[#allocation8 + $0x110] sm:$0xf]
    %v2875 = vld [vmem:[#allocation8 + $0x114] sm:$0xf]
    %v2876 = vld [vmem:[#allocation8 + $0x118] sm:$0xf]
    %v2877 = vld [vmem:[#allocation8 + $0x11c] sm:$0xf]
    %v2878 = vld [vmem:[#allocation8 + $0x120] sm:$0xf]
    %v2879 = vld [vmem:[#allocation8 + $0x124] sm:$0xf]
    %v2880 = vld [vmem:[#allocation8 + $0x128] sm:$0xf]
    %v2881 = vld [vmem:[#allocation8 + $0x12c] sm:$0xf]
    %v2882 = vld [vmem:[#allocation8 + $0x130] sm:$0xf]
    %v2883 = vld [vmem:[#allocation8 + $0x134] sm:$0xf]
    %v2884 = vld [vmem:[#allocation8 + $0x138] sm:$0xf]
    %v2885 = vld [vmem:[#allocation8 + $0x13c] sm:$0xf]
    %v2886 = vld [vmem:[#allocation8 + $0x140] sm:$0xf]
    %v2887 = vld [vmem:[#allocation8 + $0x144] sm:$0xf]
    %v2888 = vld [vmem:[#allocation8 + $0x148] sm:$0xf]
    %v2889 = vld [vmem:[#allocation8 + $0x14c] sm:$0xf]
    %v2890 = vld [vmem:[#allocation8 + $0x150] sm:$0xf]
    %v2891 = vld [vmem:[#allocation8 + $0x154] sm:$0xf]
    %v2892 = vld [vmem:[#allocation8 + $0x158] sm:$0xf]
    %v2893 = vld [vmem:[#allocation8 + $0x15c] sm:$0xf]
    %v2894 = vld [vmem:[#allocation8 + $0x160] sm:$0xf]
    %v2895 = vld [vmem:[#allocation8 + $0x164] sm:$0xf]
    %v2896 = vld [vmem:[#allocation8 + $0x168] sm:$0xf]
    %v2897 = vld [vmem:[#allocation8 + $0x16c] sm:$0xf]
    %v2898 = vld [vmem:[#allocation8 + $0x170] sm:$0xf]
    %v2899 = vld [vmem:[#allocation8 + $0x174] sm:$0xf]
    %v2900 = vld [vmem:[#allocation8 + $0x178] sm:$0xf]
    %v2901 = vld [vmem:[#allocation8 + $0x17c] sm:$0xf]
    %v2902 = vld [vmem:[%s6] sm:$0x1]
    %v2904 = vlaneseq
    %v2905 = vshrl.u32 %v2904, 7
    %v2906 = vsub.s32 0, %v2905
    %v2907 = vrot.slane %v2902, %v2906
    %v3005 = vunpack.c.l.b16 %v2806
    %v3006 = vunpack.c.l.b16 %v2807
    %v3007 = vunpack.c.l.b16 %v2808
    %v3008 = vunpack.c.l.b16 %v2809
    %v3009 = vunpack.c.l.b16 %v2810
    %v3010 = vunpack.c.l.b16 %v2811
    %v3011 = vunpack.c.l.b16 %v2812
    %v3012 = vunpack.c.l.b16 %v2813
    %v3013 = vunpack.c.l.b16 %v2814
    %v3014 = vunpack.c.l.b16 %v2815
    %v3015 = vunpack.c.l.b16 %v2816
    %v3016 = vunpack.c.l.b16 %v2817
    %v3017 = vunpack.c.l.b16 %v2818
    %v3018 = vunpack.c.l.b16 %v2819
    %v3019 = vunpack.c.l.b16 %v2820
    %v3020 = vunpack.c.l.b16 %v2821
    %v3021 = vunpack.c.l.b16 %v2822
    %v3022 = vunpack.c.l.b16 %v2823
    %v3023 = vunpack.c.l.b16 %v2824
    %v3024 = vunpack.c.l.b16 %v2825
    %v3025 = vunpack.c.l.b16 %v2826
    %v3026 = vunpack.c.l.b16 %v2827
    %v3027 = vunpack.c.l.b16 %v2828
    %v3028 = vunpack.c.l.b16 %v2829
    %v3029 = vunpack.c.l.b16 %v2830
    %v3030 = vunpack.c.l.b16 %v2831
    %v3031 = vunpack.c.l.b16 %v2832
    %v3032 = vunpack.c.l.b16 %v2833
    %v3033 = vunpack.c.l.b16 %v2834
    %v3034 = vunpack.c.l.b16 %v2835
    %v3035 = vunpack.c.l.b16 %v2836
    %v3036 = vunpack.c.l.b16 %v2837
    %v3037 = vunpack.c.l.b16 %v2838
    %v3038 = vunpack.c.l.b16 %v2839
    %v3039 = vunpack.c.l.b16 %v2840
    %v3040 = vunpack.c.l.b16 %v2841
    %v3041 = vunpack.c.l.b16 %v2842
    %v3042 = vunpack.c.l.b16 %v2843
    %v3043 = vunpack.c.l.b16 %v2844
    %v3044 = vunpack.c.l.b16 %v2845
    %v3045 = vunpack.c.l.b16 %v2846
    %v3046 = vunpack.c.l.b16 %v2847
    %v3047 = vunpack.c.l.b16 %v2848
    %v3048 = vunpack.c.l.b16 %v2849
    %v3049 = vunpack.c.l.b16 %v2850
    %v3050 = vunpack.c.l.b16 %v2851
    %v3051 = vunpack.c.l.b16 %v2852
    %v3052 = vunpack.c.l.b16 %v2853
    %v3053 = vunpack.c.l.b16 %v2854
    %v3054 = vunpack.c.l.b16 %v2855
    %v3055 = vunpack.c.l.b16 %v2856
    %v3056 = vunpack.c.l.b16 %v2857
    %v3057 = vunpack.c.l.b16 %v2858
    %v3058 = vunpack.c.l.b16 %v2859
    %v3059 = vunpack.c.l.b16 %v2860
    %v3060 = vunpack.c.l.b16 %v2861
    %v3061 = vunpack.c.l.b16 %v2862
    %v3062 = vunpack.c.l.b16 %v2863
    %v3063 = vunpack.c.l.b16 %v2864
    %v3064 = vunpack.c.l.b16 %v2865
    %v3065 = vunpack.c.l.b16 %v2866
    %v3066 = vunpack.c.l.b16 %v2867
    %v3067 = vunpack.c.l.b16 %v2868
    %v3068 = vunpack.c.l.b16 %v2869
    %v3069 = vunpack.c.l.b16 %v2870
    %v3070 = vunpack.c.l.b16 %v2871
    %v3071 = vunpack.c.l.b16 %v2872
    %v3072 = vunpack.c.l.b16 %v2873
    %v3073 = vunpack.c.l.b16 %v2874
    %v3074 = vunpack.c.l.b16 %v2875
    %v3075 = vunpack.c.l.b16 %v2876
    %v3076 = vunpack.c.l.b16 %v2877
    %v3077 = vunpack.c.l.b16 %v2878
    %v3078 = vunpack.c.l.b16 %v2879
    %v3079 = vunpack.c.l.b16 %v2880
    %v3080 = vunpack.c.l.b16 %v2881
    %v3081 = vunpack.c.l.b16 %v2882
    %v3082 = vunpack.c.l.b16 %v2883
    %v3083 = vunpack.c.l.b16 %v2884
    %v3084 = vunpack.c.l.b16 %v2885
    %v3085 = vunpack.c.l.b16 %v2886
    %v3086 = vunpack.c.l.b16 %v2887
    %v3087 = vunpack.c.l.b16 %v2888
    %v3088 = vunpack.c.l.b16 %v2889
    %v3089 = vunpack.c.l.b16 %v2890
    %v3090 = vunpack.c.l.b16 %v2891
    %v3091 = vunpack.c.l.b16 %v2892
    %v3092 = vunpack.c.l.b16 %v2893
    %v3093 = vunpack.c.l.b16 %v2894
    %v3094 = vunpack.c.l.b16 %v2895
    %v3095 = vunpack.c.l.b16 %v2896
    %v3096 = vunpack.c.l.b16 %v2897
    %v3097 = vunpack.c.l.b16 %v2898
    %v3098 = vunpack.c.l.b16 %v2899
    %v3099 = vunpack.c.l.b16 %v2900
    %v3100 = vunpack.c.l.b16 %v2901
    %v3101 = vpack.c.b16 %v3006, %v3005
    %v3102 = vpack.c.b16 %v3008, %v3007
    %v3103 = vpack.c.b16 %v3010, %v3009
    %v3104 = vpack.c.b16 %v3012, %v3011
    %v3105 = vpack.c.b16 %v3014, %v3013
    %v3106 = vpack.c.b16 %v3016, %v3015
    %v3107 = vpack.c.b16 %v3018, %v3017
    %v3108 = vpack.c.b16 %v3020, %v3019
    %v3109 = vpack.c.b16 %v3022, %v3021
    %v3110 = vpack.c.b16 %v3024, %v3023
    %v3111 = vpack.c.b16 %v3026, %v3025
    %v3112 = vpack.c.b16 %v3028, %v3027
    %v3113 = vpack.c.b16 %v3030, %v3029
    %v3114 = vpack.c.b16 %v3032, %v3031
    %v3115 = vpack.c.b16 %v3034, %v3033
    %v3116 = vpack.c.b16 %v3036, %v3035
    %v3117 = vpack.c.b16 %v3038, %v3037
    %v3118 = vpack.c.b16 %v3040, %v3039
    %v3119 = vpack.c.b16 %v3042, %v3041
    %v3120 = vpack.c.b16 %v3044, %v3043
    %v3121 = vpack.c.b16 %v3046, %v3045
    %v3122 = vpack.c.b16 %v3048, %v3047
    %v3123 = vpack.c.b16 %v3050, %v3049
    %v3124 = vpack.c.b16 %v3052, %v3051
    %v3125 = vpack.c.b16 %v3054, %v3053
    %v3126 = vpack.c.b16 %v3056, %v3055
    %v3127 = vpack.c.b16 %v3058, %v3057
    %v3128 = vpack.c.b16 %v3060, %v3059
    %v3129 = vpack.c.b16 %v3062, %v3061
    %v3130 = vpack.c.b16 %v3064, %v3063
    %v3131 = vpack.c.b16 %v3066, %v3065
    %v3132 = vpack.c.b16 %v3068, %v3067
    %v3133 = vpack.c.b16 %v3070, %v3069
    %v3134 = vpack.c.b16 %v3072, %v3071
    %v3135 = vpack.c.b16 %v3074, %v3073
    %v3136 = vpack.c.b16 %v3076, %v3075
    %v3137 = vpack.c.b16 %v3078, %v3077
    %v3138 = vpack.c.b16 %v3080, %v3079
    %v3139 = vpack.c.b16 %v3082, %v3081
    %v3140 = vpack.c.b16 %v3084, %v3083
    %v3141 = vpack.c.b16 %v3086, %v3085
    %v3142 = vpack.c.b16 %v3088, %v3087
    %v3143 = vpack.c.b16 %v3090, %v3089
    %v3144 = vpack.c.b16 %v3092, %v3091
    %v3145 = vpack.c.b16 %v3094, %v3093
    %v3146 = vpack.c.b16 %v3096, %v3095
    %v3147 = vpack.c.b16 %v3098, %v3097
    %v3148 = vpack.c.b16 %v3100, %v3099
    %3197 = vmatprep.subr.bf16.mxu0 0
    %3198 = vmatpush1.bf16.msra.mxu0 %v3101
    %3199 = vmatprep.subr.bf16.mxu0 0
    %3200 = vmatpush1.bf16.msra.mxu0 %v3102
    %3201 = vmatprep.subr.bf16.mxu0 0
    %3202 = vmatpush1.bf16.msra.mxu0 %v3103
    %3203 = vmatprep.subr.bf16.mxu0 0
    %3204 = vmatpush1.bf16.msra.mxu0 %v3104
    %3205 = vmatprep.subr.bf16.mxu0 0
    %3206 = vmatpush1.bf16.msra.mxu0 %v3105
    %3207 = vmatprep.subr.bf16.mxu0 0
    %3208 = vmatpush1.bf16.msra.mxu0 %v3106
    %3209 = vmatprep.subr.bf16.mxu0 0
    %3210 = vmatpush1.bf16.msra.mxu0 %v3107
    %3211 = vmatprep.subr.bf16.mxu0 0
    %3212 = vmatpush1.bf16.msra.mxu0 %v3108
    %3213 = vmatprep.subr.bf16.mxu0 0
    %3214 = vmatpush1.bf16.msra.mxu0 %v3109
    %3215 = vmatprep.subr.bf16.mxu0 0
    %3216 = vmatpush1.bf16.msra.mxu0 %v3110
    %3217 = vmatprep.subr.bf16.mxu0 0
    %3218 = vmatpush1.bf16.msra.mxu0 %v3111
    %3219 = vmatprep.subr.bf16.mxu0 0
    %3220 = vmatpush1.bf16.msra.mxu0 %v3112
    %3221 = vmatprep.subr.bf16.mxu0 0
    %3222 = vmatpush1.bf16.msra.mxu0 %v3113
    %3223 = vmatprep.subr.bf16.mxu0 0
    %3224 = vmatpush1.bf16.msra.mxu0 %v3114
    %3225 = vmatprep.subr.bf16.mxu0 0
    %3226 = vmatpush1.bf16.msra.mxu0 %v3115
    %3227 = vmatprep.subr.bf16.mxu0 0
    %3228 = vmatpush1.bf16.msra.mxu0 %v3116
    %3229 = vmatprep.mubr.bf16.mxu0 %v2801
    %3230 = vmatmul.mubr.bf16.gmra.mrb[0].mxu0 %v2800
    %v3231 = vpop.f32.mrb[0].mxu0
    %v3232 = vadd.f32 %v2907, %v3231
    %v3233 = vpop.f32.mrb[0].mxu0
    %v3234 = vpop.f32.mrb[0].mxu0
    %v3235 = vpop.f32.mrb[0].mxu0
    %3236 = vdwg.mxu0
    %3237 = vmatprep.subr.bf16.mxu0 0
    %3238 = vmatpush1.bf16.msra.mxu0 %v3117
    %3239 = vmatprep.subr.bf16.mxu0 0
    %3240 = vmatpush1.bf16.msra.mxu0 %v3118
    %3241 = vmatprep.subr.bf16.mxu0 0
    %3242 = vmatpush1.bf16.msra.mxu0 %v3119
    %3243 = vmatprep.subr.bf16.mxu0 0
    %3244 = vmatpush1.bf16.msra.mxu0 %v3120
    %3245 = vmatprep.subr.bf16.mxu0 0
    %3246 = vmatpush1.bf16.msra.mxu0 %v3121
    %3247 = vmatprep.subr.bf16.mxu0 0
    %3248 = vmatpush1.bf16.msra.mxu0 %v3122
    %3249 = vmatprep.subr.bf16.mxu0 0
    %3250 = vmatpush1.bf16.msra.mxu0 %v3123
    %3251 = vmatprep.subr.bf16.mxu0 0
    %3252 = vmatpush1.bf16.msra.mxu0 %v3124
    %3253 = vmatprep.subr.bf16.mxu0 0
    %3254 = vmatpush1.bf16.msra.mxu0 %v3125
    %3255 = vmatprep.subr.bf16.mxu0 0
    %3256 = vmatpush1.bf16.msra.mxu0 %v3126
    %3257 = vmatprep.subr.bf16.mxu0 0
    %3258 = vmatpush1.bf16.msra.mxu0 %v3127
    %3259 = vmatprep.subr.bf16.mxu0 0
    %3260 = vmatpush1.bf16.msra.mxu0 %v3128
    %3261 = vmatprep.subr.bf16.mxu0 0
    %3262 = vmatpush1.bf16.msra.mxu0 %v3129
    %3263 = vmatprep.subr.bf16.mxu0 0
    %3264 = vmatpush1.bf16.msra.mxu0 %v3130
    %3265 = vmatprep.subr.bf16.mxu0 0
    %3266 = vmatpush1.bf16.msra.mxu0 %v3131
    %3267 = vmatprep.subr.bf16.mxu0 0
    %3268 = vmatpush1.bf16.msra.mxu0 %v3132
    %3269 = vmatprep.mubr.bf16.mxu0 %v2803
    %3270 = vmatmul.mubr.bf16.gmra.mrb[0].mxu0 %v2802
    %v3271 = vpop.f32.mrb[0].mxu0
    %v3272 = vadd.f32 %v3232, %v3271
    %v3273 = vpop.f32.mrb[0].mxu0
    %v3274 = vpop.f32.mrb[0].mxu0
    %v3275 = vpop.f32.mrb[0].mxu0
    %3276 = vdwg.mxu0
    %3277 = vmatprep.subr.bf16.mxu0 0
    %3278 = vmatpush1.bf16.msra.mxu0 %v3133
    %3279 = vmatprep.subr.bf16.mxu0 0
    %3280 = vmatpush1.bf16.msra.mxu0 %v3134
    %3281 = vmatprep.subr.bf16.mxu0 0
    %3282 = vmatpush1.bf16.msra.mxu0 %v3135
    %3283 = vmatprep.subr.bf16.mxu0 0
    %3284 = vmatpush1.bf16.msra.mxu0 %v3136
    %3285 = vmatprep.subr.bf16.mxu0 0
    %3286 = vmatpush1.bf16.msra.mxu0 %v3137
    %3287 = vmatprep.subr.bf16.mxu0 0
    %3288 = vmatpush1.bf16.msra.mxu0 %v3138
    %3289 = vmatprep.subr.bf16.mxu0 0
    %3290 = vmatpush1.bf16.msra.mxu0 %v3139
    %3291 = vmatprep.subr.bf16.mxu0 0
    %3292 = vmatpush1.bf16.msra.mxu0 %v3140
    %3293 = vmatprep.subr.bf16.mxu0 0
    %3294 = vmatpush1.bf16.msra.mxu0 %v3141
    %3295 = vmatprep.subr.bf16.mxu0 0
    %3296 = vmatpush1.bf16.msra.mxu0 %v3142
    %3297 = vmatprep.subr.bf16.mxu0 0
    %3298 = vmatpush1.bf16.msra.mxu0 %v3143
    %3299 = vmatprep.subr.bf16.mxu0 0
    %3300 = vmatpush1.bf16.msra.mxu0 %v3144
    %3301 = vmatprep.subr.bf16.mxu0 0
    %3302 = vmatpush1.bf16.msra.mxu0 %v3145
    %3303 = vmatprep.subr.bf16.mxu0 0
    %3304 = vmatpush1.bf16.msra.mxu0 %v3146
    %3305 = vmatprep.subr.bf16.mxu0 0
    %3306 = vmatpush1.bf16.msra.mxu0 %v3147
    %3307 = vmatprep.subr.bf16.mxu0 0
    %3308 = vmatpush1.bf16.msra.mxu0 %v3148
    %3309 = vmatprep.mubr.bf16.mxu0 %v2805
    %3310 = vmatmul.mubr.bf16.gmra.mrb[0].mxu0 %v2804
    %v3311 = vpop.f32.mrb[0].mxu0
    %v3312 = vadd.f32 %v3272, %v3311
    %v3313 = vpop.f32.mrb[0].mxu0
    %v3314 = vpop.f32.mrb[0].mxu0
    %v3315 = vpop.f32.mrb[0].mxu0
    %3316 = vdwg.mxu0
    %3317 = vst [vmem:[#allocation10] sm:$0xff] %v3312
    // Predicated region
    $region46: #{tpu_custom_call.1} parent=1 // pred_check
      _
    $region47: #{tpu_custom_call.1} parent=1 // pred_check_branch
      %3319 = sbr.rel (0) target = $region49
    $region48: #{tpu_custom_call.1} parent=1 // pred_region
      %s3321 = ssub.s32 128, 128
      %3322 = vsyncadd [#allocation4], %s3321
      %s3324 = sshll.u32 [#allocation10], 4
      %s3325 = int_to_ptr.vmem [resolvable:$true] %s3324
      %3327 = dma.vmem_to_hbm [thread:$0]  %s3325, 128, %s7, [#allocation4]
    $region49: #{tpu_custom_call.1} parent=1 // pred_fallthru
      _
    // Predicated region
    $region50: #{tpu_custom_call.1} parent=1 // pred_check
      _
    $region51: #{tpu_custom_call.1} parent=1 // pred_check_branch
      %3329 = sbr.rel (0) target = $region53
    $region52: #{tpu_custom_call.1} parent=1 // pred_region
      %3330 = dma.done [#allocation4], 128
    $region53: #{tpu_custom_call.1} parent=1 // pred_fallthru
      _
    %3331 = vsyncpa [#allocation3], 1
    %3332 = vsyncpa [#allocation6], 1
    %3333 = vsyncpa [#allocation9], 1
    %3334 = vsyncpa [#allocation4], 1

// kernel: tpu_custom_call.1
$region0: #{tpu_custom_call.1}
  #allocation0 [shape = 'u32[]', space=smem, size = 0x4, offset = 0x4, fixed_abs, tag = 'smem constant byte address 0x4 - core index']
  #allocation1 [shape = 'u32[144,128]{1,0:T(1,128)}', space=vmem, size = 0x12000, scoped, tag = 'internal scratch']
  %s0 = inlined_call_operand.hbm [shape: bf16[448,128], index: 0, kind: input, shape index: {}]
  %s1 = inlined_call_operand.hbm [shape: bf16[128,128], index: 1, kind: input, shape index: {}]
  %s2 = inlined_call_operand.vmem [shape: f32[1,128], index: 2, kind: input, shape index: {}]
  %s3 = inlined_call_operand.vmem [shape: f32[1,128], index: 3, kind: input, shape index: {}]
  %s4 = inlined_call_operand.hbm [shape: bf16[512,768], index: 4, kind: input, shape index: {}]
  %s5 = inlined_call_operand.hbm [shape: bf16[768,128], index: 5, kind: input, shape index: {}]
  %s6 = inlined_call_operand.vmem [shape: f32[1,128], index: 6, kind: input, shape index: {}]
  %s7 = inlined_call_operand.hbm [shape: f32[8,128], index: 7, kind: output, shape index: {}]
  %s8 = sld [smem:[#allocation0]]
  $region54: #{tpu_custom_call.1} parent=0
    _
  %s10 = ssub.s32 1, %s8
  %s11 = scalar_select 0, %s10, %s8
  $region1: #{tpu_custom_call.1} parent=0
    #allocation2 [shape = 'u8[114688]{0}', space=vmem, size = 0x1c000, scoped, tag = 'input window, operand 0, single buffered']
    #allocation3 [shape = 's32[1]{0}', space=sflag, size = 0x4, scoped, tag = 'scoped memory for tpu_custom_call.1']
    #allocation4 [shape = 's32[1]{0}', space=sflag, size = 0x4, scoped, tag = 'scoped memory for tpu_custom_call.1']
    #allocation5 [shape = 'u8[32768]{0}', space=vmem, size = 0x8000, scoped, tag = 'input window, operand 1, single buffered']
    #allocation6 [shape = 's32[1]{0}', space=sflag, size = 0x4, scoped, tag = 'scoped memory for tpu_custom_call.1']
    #allocation7 [shape = 'u8[786432]{0}', space=vmem, size = 0xc0000, scoped, tag = 'input window, operand 4, single buffered']
    #allocation8 [shape = 'u8[196608]{0}', space=vmem, size = 0x30000, scoped, tag = 'input window, operand 5, single buffered']
    #allocation9 [shape = 's32[1]{0}', space=sflag, size = 0x4, scoped, tag = 'scoped memory for tpu_custom_call.1']
    #allocation10 [shape = 'u8[4096]{0}', space=vmem, size = 0x1000, scoped, tag = 'output window, operand 0, single buffered']
    %12 = vsyncpa [#allocation3], 0
    %13 = vsyncpa [#allocation6], 0
    %14 = vsyncpa [#allocation9], 0
    %15 = vsyncpa [#allocation4], 0
    // Predicated region
    $region2: #{tpu_custom_call.1} parent=1 // pred_check
      _
    $region3: #{tpu_custom_call.1} parent=1 // pred_check_branch
      %17 = sbr.rel (0) target = $region5
    $region4: #{tpu_custom_call.1} parent=1 // pred_region
      %s19 = ssub.s32 3584, 3584
      %20 = vsyncadd [#allocation3], %s19
      %s21 = sshll.u32 [#allocation2], 4
      %s22 = int_to_ptr.vmem [resolvable:$true] %s21
      %27 = dma.hbm_to_vmem [thread:$0]  %s0, 3584, %s22, [#allocation3], 64, 64, 4
    $region5: #{tpu_custom_call.1} parent=1 // pred_fallthru
      _
    // Predicated region
    $region6: #{tpu_custom_call.1} parent=1 // pred_check
      _
    $region7: #{tpu_custom_call.1} parent=1 // pred_check_branch
      %29 = sbr.rel (0) target = $region9
    $region8: #{tpu_custom_call.1} parent=1 // pred_region
      %s31 = ssub.s32 1024, 1024
      %32 = vsyncadd [#allocation6], %s31
      %s33 = sshll.u32 [#allocation5], 4
      %s34 = int_to_ptr.vmem [resolvable:$true] %s33
      %39 = dma.hbm_to_vmem [thread:$0]  %s1, 1024, %s34, [#allocation6], 64, 64, 4
    $region9: #{tpu_custom_call.1} parent=1 // pred_fallthru
      _
    // Predicated region
    $region10: #{tpu_custom_call.1} parent=1 // pred_check
      _
    $region11: #{tpu_custom_call.1} parent=1 // pred_check_branch
      %41 = sbr.rel (0) target = $region13
    $region12: #{tpu_custom_call.1} parent=1 // pred_region
      _
    $region13: #{tpu_custom_call.1} parent=1 // pred_fallthru
      _
    // Predicated region
    $region14: #{tpu_custom_call.1} parent=1 // pred_check
      _
    $region15: #{tpu_custom_call.1} parent=1 // pred_check_branch
      %43 = sbr.rel (0) target = $region17
    $region16: #{tpu_custom_call.1} parent=1 // pred_region
      _
    $region17: #{tpu_custom_call.1} parent=1 // pred_fallthru
      _
    // Predicated region
    $region18: #{tpu_custom_call.1} parent=1 // pred_check
      _
    $region19: #{tpu_custom_call.1} parent=1 // pred_check_branch
      %45 = sbr.rel (0) target = $region21
    $region20: #{tpu_custom_call.1} parent=1 // pred_region
      %s47 = ssub.s32 24576, 24576
      %48 = vsyncadd [#allocation6], %s47
      %s49 = sshll.u32 [#allocation7], 4
      %s50 = int_to_ptr.vmem [resolvable:$true] %s49
      %55 = dma.hbm_to_vmem [thread:$0]  %s4, 24576, %s50, [#allocation6], 384, 384, 24
    $region21: #{tpu_custom_call.1} parent=1 // pred_fallthru
      _
    // Predicated region
    $region22: #{tpu_custom_call.1} parent=1 // pred_check
      _
    $region23: #{tpu_custom_call.1} parent=1 // pred_check_branch
      %57 = sbr.rel (0) target = $region25
    $region24: #{tpu_custom_call.1} parent=1 // pred_region
      %s59 = ssub.s32 6144, 6144
      %60 = vsyncadd [#allocation9], %s59
      %s61 = sshll.u32 [#allocation8], 4
      %s62 = int_to_ptr.vmem [resolvable:$true] %s61
      %67 = dma.hbm_to_vmem [thread:$0]  %s5, 6144, %s62, [#allocation9], 64, 64, 4
    $region25: #{tpu_custom_call.1} parent=1 // pred_fallthru
      _
    // Predicated region
    $region26: #{tpu_custom_call.1} parent=1 // pred_check
      _
    $region27: #{tpu_custom_call.1} parent=1 // pred_check_branch
      %69 = sbr.rel (0) target = $region29
    $region28: #{tpu_custom_call.1} parent=1 // pred_region
      _
    $region29: #{tpu_custom_call.1} parent=1 // pred_fallthru
      _
    // Predicated region
    $region30: #{tpu_custom_call.1} parent=1 // pred_check
      _
    $region31: #{tpu_custom_call.1} parent=1 // pred_check_branch
      %71 = sbr.rel (0) target = $region33
    $region32: #{tpu_custom_call.1} parent=1 // pred_region
      %72 = dma.done [#allocation3], 3584
    $region33: #{tpu_custom_call.1} parent=1 // pred_fallthru
      _
    // Predicated region
    $region34: #{tpu_custom_call.1} parent=1 // pred_check
      _
    $region35: #{tpu_custom_call.1} parent=1 // pred_check_branch
      %74 = sbr.rel (0) target = $region37
    $region36: #{tpu_custom_call.1} parent=1 // pred_region
      %75 = dma.done [#allocation6], 1024
    $region37: #{tpu_custom_call.1} parent=1 // pred_fallthru
      _
    // Predicated region
    $region38: #{tpu_custom_call.1} parent=1 // pred_check
      _
    $region39: #{tpu_custom_call.1} parent=1 // pred_check_branch
      %77 = sbr.rel (0) target = $region41
    $region40: #{tpu_custom_call.1} parent=1 // pred_region
      %78 = dma.done [#allocation6], 24576
    $region41: #{tpu_custom_call.1} parent=1 // pred_fallthru
      _
    // Predicated region
    $region42: #{tpu_custom_call.1} parent=1 // pred_check
      _
    $region43: #{tpu_custom_call.1} parent=1 // pred_check_branch
      %80 = sbr.rel (0) target = $region45
    $region44: #{tpu_custom_call.1} parent=1 // pred_region
      %81 = dma.done [#allocation9], 6144
    $region45: #{tpu_custom_call.1} parent=1 // pred_fallthru
      _
    %v83 = vld [vmem:[#allocation2] sm:$0xf]
    %v84 = vld [vmem:[#allocation2 + $0x4] sm:$0xf]
    %v85 = vld [vmem:[#allocation2 + $0x8] sm:$0xf]
    %v86 = vld [vmem:[#allocation2 + $0xc] sm:$0xf]
    %v87 = vld [vmem:[#allocation2 + $0x10] sm:$0xf]
    %v88 = vld [vmem:[#allocation2 + $0x14] sm:$0xf]
    %v89 = vld [vmem:[#allocation2 + $0x18] sm:$0xf]
    %v90 = vld [vmem:[#allocation2 + $0x1c] sm:$0xf]
    %v91 = vld [vmem:[#allocation2 + $0x20] sm:$0xf]
    %v92 = vld [vmem:[#allocation2 + $0x24] sm:$0xf]
    %v93 = vld [vmem:[#allocation2 + $0x28] sm:$0xf]
    %v94 = vld [vmem:[#allocation2 + $0x2c] sm:$0xf]
    %v95 = vld [vmem:[#allocation2 + $0x30] sm:$0xf]
    %v96 = vld [vmem:[#allocation2 + $0x34] sm:$0xf]
    %v97 = vld [vmem:[#allocation2 + $0x38] sm:$0xf]
    %v98 = vld [vmem:[#allocation2 + $0x3c] sm:$0xf]
    %v99 = vld [vmem:[#allocation2 + $0x40] sm:$0xf]
    %v100 = vld [vmem:[#allocation2 + $0x44] sm:$0xf]
    %v101 = vld [vmem:[#allocation2 + $0x48] sm:$0xf]
    %v102 = vld [vmem:[#allocation2 + $0x4c] sm:$0xf]
    %v103 = vld [vmem:[#allocation2 + $0x50] sm:$0xf]
    %v104 = vld [vmem:[#allocation2 + $0x54] sm:$0xf]
    %v105 = vld [vmem:[#allocation2 + $0x58] sm:$0xf]
    %v106 = vld [vmem:[#allocation2 + $0x5c] sm:$0xf]
    %v107 = vld [vmem:[#allocation2 + $0x60] sm:$0xf]
    %v108 = vld [vmem:[#allocation2 + $0x64] sm:$0xf]
    %v109 = vld [vmem:[#allocation2 + $0x68] sm:$0xf]
    %v110 = vld [vmem:[#allocation2 + $0x6c] sm:$0xf]
    %v111 = vld [vmem:[#allocation2 + $0x70] sm:$0xf]
    %v112 = vld [vmem:[#allocation2 + $0x74] sm:$0xf]
    %v113 = vld [vmem:[#allocation2 + $0x78] sm:$0xf]
    %v114 = vld [vmem:[#allocation2 + $0x7c] sm:$0xf]
    %v115 = vld [vmem:[#allocation2 + $0x80] sm:$0xf]
    %v116 = vld [vmem:[#allocation2 + $0x84] sm:$0xf]
    %v117 = vld [vmem:[#allocation2 + $0x88] sm:$0xf]
    %v118 = vld [vmem:[#allocation2 + $0x8c] sm:$0xf]
    %v119 = vld [vmem:[#allocation2 + $0x90] sm:$0xf]
    %v120 = vld [vmem:[#allocation2 + $0x94] sm:$0xf]
    %v121 = vld [vmem:[#allocation2 + $0x98] sm:$0xf]
    %v122 = vld [vmem:[#allocation2 + $0x9c] sm:$0xf]
    %v123 = vld [vmem:[#allocation2 + $0xa0] sm:$0xf]
    %v124 = vld [vmem:[#allocation2 + $0xa4] sm:$0xf]
    %v125 = vld [vmem:[#allocation2 + $0xa8] sm:$0xf]
    %v126 = vld [vmem:[#allocation2 + $0xac] sm:$0xf]
    %v127 = vld [vmem:[#allocation2 + $0xb0] sm:$0xf]
    %v128 = vld [vmem:[#allocation2 + $0xb4] sm:$0xf]
    %v129 = vld [vmem:[#allocation2 + $0xb8] sm:$0xf]
    %v130 = vld [vmem:[#allocation2 + $0xbc] sm:$0xf]
    %v131 = vld [vmem:[#allocation2 + $0xc0] sm:$0xf]
    %v132 = vld [vmem:[#allocation2 + $0xc4] sm:$0xf]
    %v133 = vld [vmem:[#allocation2 + $0xc8] sm:$0xf]
    %v134 = vld [vmem:[#allocation2 + $0xcc] sm:$0xf]
    %v135 = vld [vmem:[#allocation2 + $0xd0] sm:$0xf]
    %v136 = vld [vmem:[#allocation2 + $0xd4] sm:$0xf]
    %v137 = vld [vmem:[#allocation2 + $0xd8] sm:$0xf]
    %v138 = vld [vmem:[#allocation2 + $0xdc] sm:$0xf]
    %v139 = vmax.bf16 %v83, 0
    %v140 = vmax.bf16 %v84, 0
    %v141 = vmax.bf16 %v85, 0
    %v142 = vmax.bf16 %v86, 0
    %v143 = vmax.bf16 %v87, 0
    %v144 = vmax.bf16 %v88, 0
    %v145 = vmax.bf16 %v89, 0
    %v146 = vmax.bf16 %v90, 0
    %v147 = vmax.bf16 %v91, 0
    %v148 = vmax.bf16 %v92, 0
    %v149 = vmax.bf16 %v93, 0
    %v150 = vmax.bf16 %v94, 0
    %v151 = vmax.bf16 %v95, 0
    %v152 = vmax.bf16 %v96, 0
    %v153 = vmax.bf16 %v97, 0
    %v154 = vmax.bf16 %v98, 0
    %v155 = vmax.bf16 %v99, 0
    %v156 = vmax.bf16 %v100, 0
    %v157 = vmax.bf16 %v101, 0
    %v158 = vmax.bf16 %v102, 0
    %v159 = vmax.bf16 %v103, 0
    %v160 = vmax.bf16 %v104, 0
    %v161 = vmax.bf16 %v105, 0
    %v162 = vmax.bf16 %v106, 0
    %v163 = vmax.bf16 %v107, 0
    %v164 = vmax.bf16 %v108, 0
    %v165 = vmax.bf16 %v109, 0
    %v166 = vmax.bf16 %v110, 0
    %v167 = vmax.bf16 %v111, 0
    %v168 = vmax.bf16 %v112, 0
    %v169 = vmax.bf16 %v113, 0
    %v170 = vmax.bf16 %v114, 0
    %v171 = vmax.bf16 %v115, 0
    %v172 = vmax.bf16 %v116, 0
    %v173 = vmax.bf16 %v117, 0
    %v174 = vmax.bf16 %v118, 0
    %v175 = vmax.bf16 %v119, 0
    %v176 = vmax.bf16 %v120, 0
    %v177 = vmax.bf16 %v121, 0
    %v178 = vmax.bf16 %v122, 0
    %v179 = vmax.bf16 %v123, 0
    %v180 = vmax.bf16 %v124, 0
    %v181 = vmax.bf16 %v125, 0
    %v182 = vmax.bf16 %v126, 0
    %v183 = vmax.bf16 %v127, 0
    %v184 = vmax.bf16 %v128, 0
    %v185 = vmax.bf16 %v129, 0
    %v186 = vmax.bf16 %v130, 0
    %v187 = vmax.bf16 %v131, 0
    %v188 = vmax.bf16 %v132, 0
    %v189 = vmax.bf16 %v133, 0
    %v190 = vmax.bf16 %v134, 0
    %v191 = vmax.bf16 %v135, 0
    %v192 = vmax.bf16 %v136, 0
    %v193 = vmax.bf16 %v137, 0
    %v194 = vmax.bf16 %v138, 0
    %v195 = vld [vmem:[#allocation5] sm:$0xf]
    %v196 = vld [vmem:[#allocation5 + $0x4] sm:$0xf]
    %v197 = vld [vmem:[#allocation5 + $0x8] sm:$0xf]
    %v198 = vld [vmem:[#allocation5 + $0xc] sm:$0xf]
    %v199 = vld [vmem:[#allocation5 + $0x10] sm:$0xf]
    %v200 = vld [vmem:[#allocation5 + $0x14] sm:$0xf]
    %v201 = vld [vmem:[#allocation5 + $0x18] sm:$0xf]
    %v202 = vld [vmem:[#allocation5 + $0x1c] sm:$0xf]
    %v203 = vld [vmem:[#allocation5 + $0x20] sm:$0xf]
    %v204 = vld [vmem:[#allocation5 + $0x24] sm:$0xf]
    %v205 = vld [vmem:[#allocation5 + $0x28] sm:$0xf]
    %v206 = vld [vmem:[#allocation5 + $0x2c] sm:$0xf]
    %v207 = vld [vmem:[#allocation5 + $0x30] sm:$0xf]
    %v208 = vld [vmem:[#allocation5 + $0x34] sm:$0xf]
    %v209 = vld [vmem:[#allocation5 + $0x38] sm:$0xf]
    %v210 = vld [vmem:[#allocation5 + $0x3c] sm:$0xf]
    %v267 = vunpack.c.l.b16 %v139
    %v268 = vunpack.c.l.b16 %v140
    %v269 = vunpack.c.l.b16 %v141
    %v270 = vunpack.c.l.b16 %v142
    %v271 = vunpack.c.l.b16 %v143
    %v272 = vunpack.c.l.b16 %v144
    %v273 = vunpack.c.l.b16 %v145
    %v274 = vunpack.c.l.b16 %v146
    %v275 = vunpack.c.l.b16 %v147
    %v276 = vunpack.c.l.b16 %v148
    %v277 = vunpack.c.l.b16 %v149
    %v278 = vunpack.c.l.b16 %v150
    %v279 = vunpack.c.l.b16 %v151
    %v280 = vunpack.c.l.b16 %v152
    %v281 = vunpack.c.l.b16 %v153
    %v282 = vunpack.c.l.b16 %v154
    %v283 = vunpack.c.l.b16 %v155
    %v284 = vunpack.c.l.b16 %v156
    %v285 = vunpack.c.l.b16 %v157
    %v286 = vunpack.c.l.b16 %v158
    %v287 = vunpack.c.l.b16 %v159
    %v288 = vunpack.c.l.b16 %v160
    %v289 = vunpack.c.l.b16 %v161
    %v290 = vunpack.c.l.b16 %v162
    %v291 = vunpack.c.l.b16 %v163
    %v292 = vunpack.c.l.b16 %v164
    %v293 = vunpack.c.l.b16 %v165
    %v294 = vunpack.c.l.b16 %v166
    %v295 = vunpack.c.l.b16 %v167
    %v296 = vunpack.c.l.b16 %v168
    %v297 = vunpack.c.l.b16 %v169
    %v298 = vunpack.c.l.b16 %v170
    %v299 = vunpack.c.l.b16 %v171
    %v300 = vunpack.c.l.b16 %v172
    %v301 = vunpack.c.l.b16 %v173
    %v302 = vunpack.c.l.b16 %v174
    %v303 = vunpack.c.l.b16 %v175
    %v304 = vunpack.c.l.b16 %v176
    %v305 = vunpack.c.l.b16 %v177
    %v306 = vunpack.c.l.b16 %v178
    %v307 = vunpack.c.l.b16 %v179
    %v308 = vunpack.c.l.b16 %v180
    %v309 = vunpack.c.l.b16 %v181
    %v310 = vunpack.c.l.b16 %v182
    %v311 = vunpack.c.l.b16 %v183
    %v312 = vunpack.c.l.b16 %v184
    %v313 = vunpack.c.l.b16 %v185
    %v314 = vunpack.c.l.b16 %v186
    %v315 = vunpack.c.l.b16 %v187
    %v316 = vunpack.c.l.b16 %v188
    %v317 = vunpack.c.l.b16 %v189
    %v318 = vunpack.c.l.b16 %v190
    %v319 = vunpack.c.l.b16 %v191
    %v320 = vunpack.c.l.b16 %v192
    %v321 = vunpack.c.l.b16 %v193
    %v322 = vunpack.c.l.b16 %v194
    %v323 = vpack.c.b16 %v268, %v267
    %v324 = vpack.c.b16 %v270, %v269
    %v325 = vpack.c.b16 %v272, %v271
    %v326 = vpack.c.b16 %v274, %v273
    %v327 = vpack.c.b16 %v276, %v275
    %v328 = vpack.c.b16 %v278, %v277
    %v329 = vpack.c.b16 %v280, %v279
    %v330 = vpack.c.b16 %v282, %v281
    %v331 = vpack.c.b16 %v284, %v283
    %v332 = vpack.c.b16 %v286, %v285
    %v333 = vpack.c.b16 %v288, %v287
    %v334 = vpack.c.b16 %v290, %v289
    %v335 = vpack.c.b16 %v292, %v291
    %v336 = vpack.c.b16 %v294, %v293
    %v337 = vpack.c.b16 %v296, %v295
    %v338 = vpack.c.b16 %v298, %v297
    %v339 = vpack.c.b16 %v300, %v299
    %v340 = vpack.c.b16 %v302, %v301
    %v341 = vpack.c.b16 %v304, %v303
    %v342 = vpack.c.b16 %v306, %v305
    %v343 = vpack.c.b16 %v308, %v307
    %v344 = vpack.c.b16 %v310, %v309
    %v345 = vpack.c.b16 %v312, %v311
    %v346 = vpack.c.b16 %v314, %v313
    %v347 = vpack.c.b16 %v316, %v315
    %v348 = vpack.c.b16 %v318, %v317
    %v349 = vpack.c.b16 %v320, %v319
    %v350 = vpack.c.b16 %v322, %v321
    %v395 = vunpack.c.l.b16 %v195
    %v396 = vunpack.c.l.b16 %v196
    %v397 = vunpack.c.l.b16 %v197
    %v398 = vunpack.c.l.b16 %v198
    %v399 = vunpack.c.l.b16 %v199
    %v400 = vunpack.c.l.b16 %v200
    %v401 = vunpack.c.l.b16 %v201
    %v402 = vunpack.c.l.b16 %v202
    %v403 = vunpack.c.l.b16 %v203
    %v404 = vunpack.c.l.b16 %v204
    %v405 = vunpack.c.l.b16 %v205
    %v406 = vunpack.c.l.b16 %v206
    %v407 = vunpack.c.l.b16 %v207
    %v408 = vunpack.c.l.b16 %v208
    %v409 = vunpack.c.l.b16 %v209
    %v410 = vunpack.c.l.b16 %v210
    %v411 = vpack.c.b16 %v396, %v395
    %v412 = vpack.c.b16 %v398, %v397
    %v413 = vpack.c.b16 %v400, %v399
    %v414 = vpack.c.b16 %v402, %v401
    %v415 = vpack.c.b16 %v404, %v403
    %v416 = vpack.c.b16 %v406, %v405
    %v417 = vpack.c.b16 %v408, %v407
    %v418 = vpack.c.b16 %v410, %v409
    %427 = vmatprep.subr.bf16.mxu0 0
    %428 = vmatpush1.bf16.msra.mxu0 %v411
    %429 = vmatprep.subr.bf16.mxu0 0
    %430 = vmatpush1.bf16.msra.mxu0 %v412
    %431 = vmatprep.subr.bf16.mxu0 0
    %432 = vmatpush1.bf16.msra.mxu0 %v413
    %433 = vmatprep.subr.bf16.mxu0 0
    %434 = vmatpush1.bf16.msra.mxu0 %v414
    %435 = vmatprep.subr.bf16.mxu0 0
    %436 = vmatpush1.bf16.msra.mxu0 %v415
    %437 = vmatprep.subr.bf16.mxu0 0
    %438 = vmatpush1.bf16.msra.mxu0 %v416
    %439 = vmatprep.subr.bf16.mxu0 0
    %440 = vmatpush1.bf16.msra.mxu0 %v417
    %441 = vmatprep.subr.bf16.mxu0 0
    %442 = vmatpush1.bf16.msra.mxu0 %v418
    %443 = vmatprep.subr.bf16.mxu0 0
    %444 = vmatpush1.bf16.msra.mxu0 0
    %445 = vmatprep.subr.bf16.mxu0 0
    %446 = vmatpush1.bf16.msra.mxu0 0
    %447 = vmatprep.subr.bf16.mxu0 0
    %448 = vmatpush1.bf16.msra.mxu0 0
    %449 = vmatprep.subr.bf16.mxu0 0
    %450 = vmatpush1.bf16.msra.mxu0 0
    %451 = vmatprep.subr.bf16.mxu0 0
    %452 = vmatpush1.bf16.msra.mxu0 0
    %453 = vmatprep.subr.bf16.mxu0 0
    %454 = vmatpush1.bf16.msra.mxu0 0
    %455 = vmatprep.subr.bf16.mxu0 0
    %456 = vmatpush1.bf16.msra.mxu0 0
    %457 = vmatprep.subr.bf16.mxu0 0
    %458 = vmatpush1.bf16.msra.mxu0 0
    %459 = vmatprep.mubr.bf16.mxu0 0
    %460 = vmatmul.mubr.bf16.gmra.mrb[0].mxu0 %v323
    %v461 = vpop.f32.mrb[0].mxu0
    %v462 = vadd.f32 0.0, %v461
    %v463 = vpop.f32.mrb[0].mxu0
    %v464 = vpop.f32.mrb[0].mxu0
    %v465 = vadd.f32 0.0, %v464
    %v466 = vpop.f32.mrb[0].mxu0
    %467 = vmatprep.mubr.bf16.mxu0 0
    %468 = vmatmul.mubr.bf16.gmra.mrb[0].mxu0 %v324
    %v469 = vpop.f32.mrb[0].mxu0
    %v470 = vadd.f32 0.0, %v469
    %v471 = vpop.f32.mrb[0].mxu0
    %v472 = vpop.f32.mrb[0].mxu0
    %v473 = vadd.f32 0.0, %v472
    %v474 = vpop.f32.mrb[0].mxu0
    %475 = vmatprep.mubr.bf16.mxu0 0
    %476 = vmatmul.mubr.bf16.gmra.mrb[0].mxu0 %v325
    %v477 = vpop.f32.mrb[0].mxu0
    %v478 = vadd.f32 0.0, %v477
    %v479 = vpop.f32.mrb[0].mxu0
    %v480 = vpop.f32.mrb[0].mxu0
    %v481 = vadd.f32 0.0, %v480
    %v482 = vpop.f32.mrb[0].mxu0
    %483 = vmatprep.mubr.bf16.mxu0 0
    %484 = vmatmul.mubr.bf16.gmra.mrb[0].mxu0 %v326
    %v485 = vpop.f32.mrb[0].mxu0
    %v486 = vadd.f32 0.0, %v485
    %v487 = vpop.f32.mrb[0].mxu0
    %v488 = vpop.f32.mrb[0].mxu0
    %v489 = vadd.f32 0.0, %v488
    %v490 = vpop.f32.mrb[0].mxu0
    %491 = vmatprep.mubr.bf16.mxu0 0
    %492 = vmatmul.mubr.bf16.gmra.mrb[0].mxu0 %v327
    %v493 = vpop.f32.mrb[0].mxu0
    %v494 = vadd.f32 0.0, %v493
    %v495 = vpop.f32.mrb[0].mxu0
    %v496 = vpop.f32.mrb[0].mxu0
    %v497 = vadd.f32 0.0, %v496
    %v498 = vpop.f32.mrb[0].mxu0
    %499 = vmatprep.mubr.bf16.mxu0 0
    %500 = vmatmul.mubr.bf16.gmra.mrb[0].mxu0 %v328
    %v501 = vpop.f32.mrb[0].mxu0
    %v502 = vadd.f32 0.0, %v501
    %v503 = vpop.f32.mrb[0].mxu0
    %v504 = vpop.f32.mrb[0].mxu0
    %v505 = vadd.f32 0.0, %v504
    %v506 = vpop.f32.mrb[0].mxu0
    %507 = vmatprep.mubr.bf16.mxu0 0
    %508 = vmatmul.mubr.bf16.gmra.mrb[0].mxu0 %v329
    %v509 = vpop.f32.mrb[0].mxu0
    %v510 = vadd.f32 0.0, %v509
    %v511 = vpop.f32.mrb[0].mxu0
    %v512 = vpop.f32.mrb[0].mxu0
    %v513 = vadd.f32 0.0, %v512
    %v514 = vpop.f32.mrb[0].mxu0
    %515 = vmatprep.mubr.bf16.mxu0 0
    %516 = vmatmul.mubr.bf16.gmra.mrb[0].mxu0 %v330
    %v517 = vpop.f32.mrb[0].mxu0
    %v518 = vadd.f32 0.0, %v517
    %v519 = vpop.f32.mrb[0].mxu0
    %v520 = vpop.f32.mrb[0].mxu0
    %v521 = vadd.f32 0.0, %v520
    %v522 = vpop.f32.mrb[0].mxu0
    %523 = vmatprep.mubr.bf16.mxu0 0
    %524 = vmatmul.mubr.bf16.gmra.mrb[0].mxu0 %v331
    %v525 = vpop.f32.mrb[0].mxu0
    %v526 = vadd.f32 0.0, %v525
    %v527 = vpop.f32.mrb[0].mxu0
    %v528 = vpop.f32.mrb[0].mxu0
    %v529 = vadd.f32 0.0, %v528
    %v530 = vpop.f32.mrb[0].mxu0
    %531 = vmatprep.mubr.bf16.mxu0 0
    %532 = vmatmul.mubr.bf16.gmra.mrb[0].mxu0 %v332
    %v533 = vpop.f32.mrb[0].mxu0
    %v534 = vadd.f32 0.0, %v533
    %v535 = vpop.f32.mrb[0].mxu0
    %v536 = vpop.f32.mrb[0].mxu0
    %v537 = vadd.f32 0.0, %v536
    %v538 = vpop.f32.mrb[0].mxu0
    %539 = vmatprep.mubr.bf16.mxu0 0
    %540 = vmatmul.mubr.bf16.gmra.mrb[0].mxu0 %v333
    %v541 = vpop.f32.mrb[0].mxu0
    %v542 = vadd.f32 0.0, %v541
    %v543 = vpop.f32.mrb[0].mxu0
    %v544 = vpop.f32.mrb[0].mxu0
    %v545 = vadd.f32 0.0, %v544
    %v546 = vpop.f32.mrb[0].mxu0
    %547 = vmatprep.mubr.bf16.mxu0 0
    %548 = vmatmul.mubr.bf16.gmra.mrb[0].mxu0 %v334
    %v549 = vpop.f32.mrb[0].mxu0
    %v550 = vadd.f32 0.0, %v549
    %v551 = vpop.f32.mrb[0].mxu0
    %v552 = vpop.f32.mrb[0].mxu0
    %v553 = vadd.f32 0.0, %v552
    %v554 = vpop.f32.mrb[0].mxu0
    %555 = vmatprep.mubr.bf16.mxu0 0
    %556 = vmatmul.mubr.bf16.gmra.mrb[0].mxu0 %v335
    %v557 = vpop.f32.mrb[0].mxu0
    %v558 = vadd.f32 0.0, %v557
    %v559 = vpop.f32.mrb[0].mxu0
    %v560 = vpop.f32.mrb[0].mxu0
    %v561 = vadd.f32 0.0, %v560
    %v562 = vpop.f32.mrb[0].mxu0
    %563 = vmatprep.mubr.bf16.mxu0 0
    %564 = vmatmul.mubr.bf16.gmra.mrb[0].mxu0 %v336
    %v565 = vpop.f32.mrb[0].mxu0
    %v566 = vadd.f32 0.0, %v565
    %v567 = vpop.f32.mrb[0].mxu0
    %v568 = vpop.f32.mrb[0].mxu0
    %v569 = vadd.f32 0.0, %v568
    %v570 = vpop.f32.mrb[0].mxu0
    %571 = vmatprep.mubr.bf16.mxu0 0
    %572 = vmatmul.mubr.bf16.gmra.mrb[0].mxu0 %v337
    %v573 = vpop.f32.mrb[0].mxu0
    %v574 = vadd.f32 0.0, %v573
    %v575 = vpop.f32.mrb[0].mxu0
    %v576 = vpop.f32.mrb[0].mxu0
    %v577 = vadd.f32 0.0, %v576
    %v578 = vpop.f32.mrb[0].mxu0
    %579 = vmatprep.mubr.bf16.mxu0 0
    %580 = vmatmul.mubr.bf16.gmra.mrb[0].mxu0 %v338
    %v581 = vpop.f32.mrb[0].mxu0
    %v582 = vadd.f32 0.0, %v581
    %v583 = vpop.f32.mrb[0].mxu0
    %v584 = vpop.f32.mrb[0].mxu0
    %v585 = vadd.f32 0.0, %v584
    %v586 = vpop.f32.mrb[0].mxu0
    %587 = vmatprep.mubr.bf16.mxu0 0
    %588 = vmatmul.mubr.bf16.gmra.mrb[0].mxu0 %v339
    %v589 = vpop.f32.mrb[0].mxu0
    %v590 = vadd.f32 0.0, %v589
    %v591 = vpop.f32.mrb[0].mxu0
    %v592 = vpop.f32.mrb[0].mxu0
    %v593 = vadd.f32 0.0, %v592
    %v594 = vpop.f32.mrb[0].mxu0
    %595 = vmatprep.mubr.bf16.mxu0 0
    %596 = vmatmul.mubr.bf16.gmra.mrb[0].mxu0 %v340
    %v597 = vpop.f32.mrb[0].mxu0
    %v598 = vadd.f32 0.0, %v597
    %v599 = vpop.f32.mrb[0].mxu0
    %v600 = vpop.f32.mrb[0].mxu0
    %v601 = vadd.f32 0.0, %v600
    %v602 = vpop.f32.mrb[0].mxu0
    %603 = vmatprep.mubr.bf16.mxu0 0
    %604 = vmatmul.mubr.bf16.gmra.mrb[0].mxu0 %v341
    %v605 = vpop.f32.mrb[0].mxu0
    %v606 = vadd.f32 0.0, %v605
    %v607 = vpop.f32.mrb[0].mxu0
    %v608 = vpop.f32.mrb[0].mxu0
    %v609 = vadd.f32 0.0, %v608
    %v610 = vpop.f32.mrb[0].mxu0
    %611 = vmatprep.mubr.bf16.mxu0 0
    %612 = vmatmul.mubr.bf16.gmra.mrb[0].mxu0 %v342
    %v613 = vpop.f32.mrb[0].mxu0
    %v614 = vadd.f32 0.0, %v613
    %v615 = vpop.f32.mrb[0].mxu0
    %v616 = vpop.f32.mrb[0].mxu0
    %v617 = vadd.f32 0.0, %v616
    %v618 = vpop.f32.mrb[0].mxu0
    %619 = vmatprep.mubr.bf16.mxu0 0
    %620 = vmatmul.mubr.bf16.gmra.mrb[0].mxu0 %v343
    %v621 = vpop.f32.mrb[0].mxu0
    %v622 = vadd.f32 0.0, %v621
    %v623 = vpop.f32.mrb[0].mxu0
    %v624 = vpop.f32.mrb[0].mxu0
    %v625 = vadd.f32 0.0, %v624
    %v626 = vpop.f32.mrb[0].mxu0
    %627 = vmatprep.mubr.bf16.mxu0 0
    %628 = vmatmul.mubr.bf16.gmra.mrb[0].mxu0 %v344
    %v629 = vpop.f32.mrb[0].mxu0
    %v630 = vadd.f32 0.0, %v629
    %v631 = vpop.f32.mrb[0].mxu0
    %v632 = vpop.f32.mrb[0].mxu0
    %v633 = vadd.f32 0.0, %v632
    %v634 = vpop.f32.mrb[0].mxu0
    %635 = vmatprep.mubr.bf16.mxu0 0
    %636 = vmatmul.mubr.bf16.gmra.mrb[0].mxu0 %v345
    %v637 = vpop.f32.mrb[0].mxu0
    %v638 = vadd.f32 0.0, %v637
    %v639 = vpop.f32.mrb[0].mxu0
    %v640 = vpop.f32.mrb[0].mxu0
    %v641 = vadd.f32 0.0, %v640
    %v642 = vpop.f32.mrb[0].mxu0
    %643 = vmatprep.mubr.bf16.mxu0 0
    %644 = vmatmul.mubr.bf16.gmra.mrb[0].mxu0 %v346
    %v645 = vpop.f32.mrb[0].mxu0
    %v646 = vadd.f32 0.0, %v645
    %v647 = vpop.f32.mrb[0].mxu0
    %v648 = vpop.f32.mrb[0].mxu0
    %v649 = vadd.f32 0.0, %v648
    %v650 = vpop.f32.mrb[0].mxu0
    %651 = vmatprep.mubr.bf16.mxu0 0
    %652 = vmatmul.mubr.bf16.gmra.mrb[0].mxu0 %v347
    %v653 = vpop.f32.mrb[0].mxu0
    %v654 = vadd.f32 0.0, %v653
    %v655 = vpop.f32.mrb[0].mxu0
    %v656 = vpop.f32.mrb[0].mxu0
    %v657 = vadd.f32 0.0, %v656
    %v658 = vpop.f32.mrb[0].mxu0
    %659 = vmatprep.mubr.bf16.mxu0 0
    %660 = vmatmul.mubr.bf16.gmra.mrb[0].mxu0 %v348
    %v661 = vpop.f32.mrb[0].mxu0
    %v662 = vadd.f32 0.0, %v661
    %v663 = vpop.f32.mrb[0].mxu0
    %v664 = vpop.f32.mrb[0].mxu0
    %v665 = vadd.f32 0.0, %v664
    %v666 = vpop.f32.mrb[0].mxu0
    %667 = vmatprep.mubr.bf16.mxu0 0
    %668 = vmatmul.mubr.bf16.gmra.mrb[0].mxu0 %v349
    %v669 = vpop.f32.mrb[0].mxu0
    %v670 = vadd.f32 0.0, %v669
    %v671 = vpop.f32.mrb[0].mxu0
    %v672 = vpop.f32.mrb[0].mxu0
    %v673 = vadd.f32 0.0, %v672
    %v674 = vpop.f32.mrb[0].mxu0
    %675 = vmatprep.mubr.bf16.mxu0 0
    %676 = vmatmul.mubr.bf16.gmra.mrb[0].mxu0 %v350
    %v677 = vpop.f32.mrb[0].mxu0
    %v678 = vadd.f32 0.0, %v677
    %v679 = vpop.f32.mrb[0].mxu0
    %v680 = vpop.f32.mrb[0].mxu0
    %v681 = vadd.f32 0.0, %v680
    %v682 = vpop.f32.mrb[0].mxu0
    %683 = vdwg.mxu0
    %v684 = vadd.f32 %v462, %v465
    %v685 = vadd.f32 %v489, %v494
    %v686 = vadd.f32 %v518, %v521
    %v687 = vadd.f32 %v545, %v550
    %v688 = vadd.f32 %v574, %v577
    %v689 = vadd.f32 %v601, %v606
    %v690 = vadd.f32 %v630, %v633
    %v691 = vadd.f32 %v657, %v662
    %v692 = vadd.f32 %v470, %v473
    %v693 = vadd.f32 %v692, %v478
    %v694 = vadd.f32 %v497, %v502
    %v695 = vadd.f32 %v694, %v505
    %v696 = vadd.f32 %v526, %v529
    %v697 = vadd.f32 %v696, %v534
    %v698 = vadd.f32 %v553, %v558
    %v699 = vadd.f32 %v698, %v561
    %v700 = vadd.f32 %v582, %v585
    %v701 = vadd.f32 %v700, %v590
    %v702 = vadd.f32 %v609, %v614
    %v703 = vadd.f32 %v702, %v617
    %v704 = vadd.f32 %v638, %v641
    %v705 = vadd.f32 %v704, %v646
    %v706 = vadd.f32 %v665, %v670
    %v707 = vadd.f32 %v706, %v673
    %v708 = vadd.f32 %v481, %v486
    %v709 = vadd.f32 %v510, %v513
    %v710 = vadd.f32 %v537, %v542
    %v711 = vadd.f32 %v566, %v569
    %v712 = vadd.f32 %v593, %v598
    %v713 = vadd.f32 %v622, %v625
    %v714 = vadd.f32 %v649, %v654
    %v715 = vadd.f32 %v678, %v681
    %v716 = vadd.f32 %v684, %v693
    %v717 = vadd.f32 %v685, %v695
    %v718 = vadd.f32 %v686, %v697
    %v719 = vadd.f32 %v687, %v699
    %v720 = vadd.f32 %v688, %v701
    %v721 = vadd.f32 %v689, %v703
    %v722 = vadd.f32 %v690, %v705
    %v723 = vadd.f32 %v691, %v707
    %v724 = vadd.f32 %v693, %v708
    %v725 = vadd.f32 %v695, %v709
    %v726 = vadd.f32 %v697, %v710
    %v727 = vadd.f32 %v699, %v711
    %v728 = vadd.f32 %v701, %v712
    %v729 = vadd.f32 %v703, %v713
    %v730 = vadd.f32 %v705, %v714
    %v731 = vadd.f32 %v707, %v715
    %v732 = vld [vmem:[%s2] sm:$0x1]
    %v733 = vmul.f32 %v732, 0.04
    %v735 = vlaneseq
    %v736 = vshrl.u32 %v735, 7
    %v737 = vsub.s32 0, %v736
    %v738 = vrot.slane %v733, %v737
    %v740 = vld [vmem:[%s3] sm:$0x1]
    %v742 = vlaneseq
    %v743 = vshrl.u32 %v742, 7
    %v744 = vsub.s32 0, %v743
    %v745 = vrot.slane %v740, %v744
    %vm747 = vcmask 1041408
    %v748 = vsel %vm747, %v716, 0.0
    %v749 = vrot.slane %v748, 4
    %v750 = vadd.f32 %v748, %v749
    %v751 = vrot.slane %v750, 2
    %v752 = vadd.f32 %v750, %v751
    %v753 = vrot.slane %v752, 1
    %v754 = vadd.f32 %v752, %v753
    %v755 = vsel %vm747, %v717, 0.0
    %v756 = vrot.slane %v755, 4
    %v757 = vadd.f32 %v755, %v756
    %v758 = vrot.slane %v757, 2
    %v759 = vadd.f32 %v757, %v758
    %v760 = vrot.slane %v759, 1
    %v761 = vadd.f32 %v759, %v760
    %v762 = vsel %vm747, %v718, 0.0
    %v763 = vrot.slane %v762, 4
    %v764 = vadd.f32 %v762, %v763
    %v765 = vrot.slane %v764, 2
    %v766 = vadd.f32 %v764, %v765
    %v767 = vrot.slane %v766, 1
    %v768 = vadd.f32 %v766, %v767
    %v769 = vsel %vm747, %v719, 0.0
    %v770 = vrot.slane %v769, 4
    %v771 = vadd.f32 %v769, %v770
    %v772 = vrot.slane %v771, 2
    %v773 = vadd.f32 %v771, %v772
    %v774 = vrot.slane %v773, 1
    %v775 = vadd.f32 %v773, %v774
    %v776 = vsel %vm747, %v720, 0.0
    %v777 = vrot.slane %v776, 4
    %v778 = vadd.f32 %v776, %v777
    %v779 = vrot.slane %v778, 2
    %v780 = vadd.f32 %v778, %v779
    %v781 = vrot.slane %v780, 1
    %v782 = vadd.f32 %v780, %v781
    %v783 = vsel %vm747, %v721, 0.0
    %v784 = vrot.slane %v783, 4
    %v785 = vadd.f32 %v783, %v784
    %v786 = vrot.slane %v785, 2
    %v787 = vadd.f32 %v785, %v786
    %v788 = vrot.slane %v787, 1
    %v789 = vadd.f32 %v787, %v788
    %v790 = vsel %vm747, %v722, 0.0
    %v791 = vrot.slane %v790, 4
    %v792 = vadd.f32 %v790, %v791
    %v793 = vrot.slane %v792, 2
    %v794 = vadd.f32 %v792, %v793
    %v795 = vrot.slane %v794, 1
    %v796 = vadd.f32 %v794, %v795
    %v797 = vsel %vm747, %v723, 0.0
    %v798 = vrot.slane %v797, 4
    %v799 = vadd.f32 %v797, %v798
    %v800 = vrot.slane %v799, 2
    %v801 = vadd.f32 %v799, %v800
    %v802 = vrot.slane %v801, 1
    %v803 = vadd.f32 %v801, %v802
    %v812 = vrot.slane %v716, 2
    %v813 = vrot.slane %v717, 2
    %v814 = vrot.slane %v718, 2
    %v815 = vrot.slane %v719, 2
    %v816 = vrot.slane %v720, 2
    %v817 = vrot.slane %v721, 2
    %v818 = vrot.slane %v722, 2
    %v819 = vrot.slane %v723, 2
    %vm828 = vcmask 1042432
    %v829 = vsel %vm828, %v812, 0.0
    %v830 = vrot.slane %v829, 4
    %v831 = vadd.f32 %v829, %v830
    %v832 = vrot.slane %v831, 2
    %v833 = vadd.f32 %v831, %v832
    %v834 = vrot.slane %v833, 1
    %v835 = vadd.f32 %v833, %v834
    %v836 = vsel %vm828, %v813, 0.0
    %v837 = vrot.slane %v836, 4
    %v838 = vadd.f32 %v836, %v837
    %v839 = vrot.slane %v838, 2
    %v840 = vadd.f32 %v838, %v839
    %v841 = vrot.slane %v840, 1
    %v842 = vadd.f32 %v840, %v841
    %v843 = vsel %vm828, %v814, 0.0
    %v844 = vrot.slane %v843, 4
    %v845 = vadd.f32 %v843, %v844
    %v846 = vrot.slane %v845, 2
    %v847 = vadd.f32 %v845, %v846
    %v848 = vrot.slane %v847, 1
    %v849 = vadd.f32 %v847, %v848
    %v850 = vsel %vm828, %v815, 0.0
    %v851 = vrot.slane %v850, 4
    %v852 = vadd.f32 %v850, %v851
    %v853 = vrot.slane %v852, 2
    %v854 = vadd.f32 %v852, %v853
    %v855 = vrot.slane %v854, 1
    %v856 = vadd.f32 %v854, %v855
    %v857 = vsel %vm828, %v816, 0.0
    %v858 = vrot.slane %v857, 4
    %v859 = vadd.f32 %v857, %v858
    %v860 = vrot.slane %v859, 2
    %v861 = vadd.f32 %v859, %v860
    %v862 = vrot.slane %v861, 1
    %v863 = vadd.f32 %v861, %v862
    %v864 = vsel %vm828, %v817, 0.0
    %v865 = vrot.slane %v864, 4
    %v866 = vadd.f32 %v864, %v865
    %v867 = vrot.slane %v866, 2
    %v868 = vadd.f32 %v866, %v867
    %v869 = vrot.slane %v868, 1
    %v870 = vadd.f32 %v868, %v869
    %v871 = vsel %vm828, %v818, 0.0
    %v872 = vrot.slane %v871, 4
    %v873 = vadd.f32 %v871, %v872
    %v874 = vrot.slane %v873, 2
    %v875 = vadd.f32 %v873, %v874
    %v876 = vrot.slane %v875, 1
    %v877 = vadd.f32 %v875, %v876
    %v878 = vsel %vm828, %v819, 0.0
    %v879 = vrot.slane %v878, 4
    %v880 = vadd.f32 %v878, %v879
    %v881 = vrot.slane %v880, 2
    %v882 = vadd.f32 %v880, %v881
    %v883 = vrot.slane %v882, 1
    %v884 = vadd.f32 %v882, %v883
    %v885 = vrot.slane %v716, 5
    %v886 = vrot.slane %v717, 5
    %v887 = vrot.slane %v718, 5
    %v888 = vrot.slane %v719, 5
    %v889 = vrot.slane %v720, 5
    %v890 = vrot.slane %v721, 5
    %v891 = vrot.slane %v722, 5
    %v892 = vrot.slane %v723, 5
    %v901 = vsel %vm747, %v885, 0.0
    %v902 = vrot.slane %v901, 4
    %v903 = vadd.f32 %v901, %v902
    %v904 = vrot.slane %v903, 2
    %v905 = vadd.f32 %v903, %v904
    %v906 = vrot.slane %v905, 1
    %v907 = vadd.f32 %v905, %v906
    %v908 = vsel %vm747, %v886, 0.0
    %v909 = vrot.slane %v908, 4
    %v910 = vadd.f32 %v908, %v909
    %v911 = vrot.slane %v910, 2
    %v912 = vadd.f32 %v910, %v911
    %v913 = vrot.slane %v912, 1
    %v914 = vadd.f32 %v912, %v913
    %v915 = vsel %vm747, %v887, 0.0
    %v916 = vrot.slane %v915, 4
    %v917 = vadd.f32 %v915, %v916
    %v918 = vrot.slane %v917, 2
    %v919 = vadd.f32 %v917, %v918
    %v920 = vrot.slane %v919, 1
    %v921 = vadd.f32 %v919, %v920
    %v922 = vsel %vm747, %v888, 0.0
    %v923 = vrot.slane %v922, 4
    %v924 = vadd.f32 %v922, %v923
    %v925 = vrot.slane %v924, 2
    %v926 = vadd.f32 %v924, %v925
    %v927 = vrot.slane %v926, 1
    %v928 = vadd.f32 %v926, %v927
    %v929 = vsel %vm747, %v889, 0.0
    %v930 = vrot.slane %v929, 4
    %v931 = vadd.f32 %v929, %v930
    %v932 = vrot.slane %v931, 2
    %v933 = vadd.f32 %v931, %v932
    %v934 = vrot.slane %v933, 1
    %v935 = vadd.f32 %v933, %v934
    %v936 = vsel %vm747, %v890, 0.0
    %v937 = vrot.slane %v936, 4
    %v938 = vadd.f32 %v936, %v937
    %v939 = vrot.slane %v938, 2
    %v940 = vadd.f32 %v938, %v939
    %v941 = vrot.slane %v940, 1
    %v942 = vadd.f32 %v940, %v941
    %v943 = vsel %vm747, %v891, 0.0
    %v944 = vrot.slane %v943, 4
    %v945 = vadd.f32 %v943, %v944
    %v946 = vrot.slane %v945, 2
    %v947 = vadd.f32 %v945, %v946
    %v948 = vrot.slane %v947, 1
    %v949 = vadd.f32 %v947, %v948
    %v950 = vsel %vm747, %v892, 0.0
    %v951 = vrot.slane %v950, 4
    %v952 = vadd.f32 %v950, %v951
    %v953 = vrot.slane %v952, 2
    %v954 = vadd.f32 %v952, %v953
    %v955 = vrot.slane %v954, 1
    %v956 = vadd.f32 %v954, %v955
    %v957 = vadd.f32 %v754, %v835
    %v958 = vadd.f32 %v761, %v842
    %v959 = vadd.f32 %v768, %v849
    %v960 = vadd.f32 %v775, %v856
    %v961 = vadd.f32 %v782, %v863
    %v962 = vadd.f32 %v789, %v870
    %v963 = vadd.f32 %v796, %v877
    %v964 = vadd.f32 %v803, %v884
    %v965 = vadd.f32 %v835, %v907
    %v966 = vadd.f32 %v842, %v914
    %v967 = vadd.f32 %v849, %v921
    %v968 = vadd.f32 %v856, %v928
    %v969 = vadd.f32 %v863, %v935
    %v970 = vadd.f32 %v870, %v942
    %v971 = vadd.f32 %v877, %v949
    %v972 = vadd.f32 %v884, %v956
    %v973 = vsel %vm747, %v724, 0.0
    %v974 = vrot.slane %v973, 4
    %v975 = vadd.f32 %v973, %v974
    %v976 = vrot.slane %v975, 2
    %v977 = vadd.f32 %v975, %v976
    %v978 = vrot.slane %v977, 1
    %v979 = vadd.f32 %v977, %v978
    %v980 = vsel %vm747, %v725, 0.0
    %v981 = vrot.slane %v980, 4
    %v982 = vadd.f32 %v980, %v981
    %v983 = vrot.slane %v982, 2
    %v984 = vadd.f32 %v982, %v983
    %v985 = vrot.slane %v984, 1
    %v986 = vadd.f32 %v984, %v985
    %v987 = vsel %vm747, %v726, 0.0
    %v988 = vrot.slane %v987, 4
    %v989 = vadd.f32 %v987, %v988
    %v990 = vrot.slane %v989, 2
    %v991 = vadd.f32 %v989, %v990
    %v992 = vrot.slane %v991, 1
    %v993 = vadd.f32 %v991, %v992
    %v994 = vsel %vm747, %v727, 0.0
    %v995 = vrot.slane %v994, 4
    %v996 = vadd.f32 %v994, %v995
    %v997 = vrot.slane %v996, 2
    %v998 = vadd.f32 %v996, %v997
    %v999 = vrot.slane %v998, 1
    %v1000 = vadd.f32 %v998, %v999
    %v1001 = vsel %vm747, %v728, 0.0
    %v1002 = vrot.slane %v1001, 4
    %v1003 = vadd.f32 %v1001, %v1002
    %v1004 = vrot.slane %v1003, 2
    %v1005 = vadd.f32 %v1003, %v1004
    %v1006 = vrot.slane %v1005, 1
    %v1007 = vadd.f32 %v1005, %v1006
    %v1008 = vsel %vm747, %v729, 0.0
    %v1009 = vrot.slane %v1008, 4
    %v1010 = vadd.f32 %v1008, %v1009
    %v1011 = vrot.slane %v1010, 2
    %v1012 = vadd.f32 %v1010, %v1011
    %v1013 = vrot.slane %v1012, 1
    %v1014 = vadd.f32 %v1012, %v1013
    %v1015 = vsel %vm747, %v730, 0.0
    %v1016 = vrot.slane %v1015, 4
    %v1017 = vadd.f32 %v1015, %v1016
    %v1018 = vrot.slane %v1017, 2
    %v1019 = vadd.f32 %v1017, %v1018
    %v1020 = vrot.slane %v1019, 1
    %v1021 = vadd.f32 %v1019, %v1020
    %v1022 = vsel %vm747, %v731, 0.0
    %v1023 = vrot.slane %v1022, 4
    %v1024 = vadd.f32 %v1022, %v1023
    %v1025 = vrot.slane %v1024, 2
    %v1026 = vadd.f32 %v1024, %v1025
    %v1027 = vrot.slane %v1026, 1
    %v1028 = vadd.f32 %v1026, %v1027
    %v1037 = vrot.slane %v724, 2
    %v1038 = vrot.slane %v725, 2
    %v1039 = vrot.slane %v726, 2
    %v1040 = vrot.slane %v727, 2
    %v1041 = vrot.slane %v728, 2
    %v1042 = vrot.slane %v729, 2
    %v1043 = vrot.slane %v730, 2
    %v1044 = vrot.slane %v731, 2
    %v1053 = vsel %vm828, %v1037, 0.0
    %v1054 = vrot.slane %v1053, 4
    %v1055 = vadd.f32 %v1053, %v1054
    %v1056 = vrot.slane %v1055, 2
    %v1057 = vadd.f32 %v1055, %v1056
    %v1058 = vrot.slane %v1057, 1
    %v1059 = vadd.f32 %v1057, %v1058
    %v1060 = vsel %vm828, %v1038, 0.0
    %v1061 = vrot.slane %v1060, 4
    %v1062 = vadd.f32 %v1060, %v1061
    %v1063 = vrot.slane %v1062, 2
    %v1064 = vadd.f32 %v1062, %v1063
    %v1065 = vrot.slane %v1064, 1
    %v1066 = vadd.f32 %v1064, %v1065
    %v1067 = vsel %vm828, %v1039, 0.0
    %v1068 = vrot.slane %v1067, 4
    %v1069 = vadd.f32 %v1067, %v1068
    %v1070 = vrot.slane %v1069, 2
    %v1071 = vadd.f32 %v1069, %v1070
    %v1072 = vrot.slane %v1071, 1
    %v1073 = vadd.f32 %v1071, %v1072
    %v1074 = vsel %vm828, %v1040, 0.0
    %v1075 = vrot.slane %v1074, 4
    %v1076 = vadd.f32 %v1074, %v1075
    %v1077 = vrot.slane %v1076, 2
    %v1078 = vadd.f32 %v1076, %v1077
    %v1079 = vrot.slane %v1078, 1
    %v1080 = vadd.f32 %v1078, %v1079
    %v1081 = vsel %vm828, %v1041, 0.0
    %v1082 = vrot.slane %v1081, 4
    %v1083 = vadd.f32 %v1081, %v1082
    %v1084 = vrot.slane %v1083, 2
    %v1085 = vadd.f32 %v1083, %v1084
    %v1086 = vrot.slane %v1085, 1
    %v1087 = vadd.f32 %v1085, %v1086
    %v1088 = vsel %vm828, %v1042, 0.0
    %v1089 = vrot.slane %v1088, 4
    %v1090 = vadd.f32 %v1088, %v1089
    %v1091 = vrot.slane %v1090, 2
    %v1092 = vadd.f32 %v1090, %v1091
    %v1093 = vrot.slane %v1092, 1
    %v1094 = vadd.f32 %v1092, %v1093
    %v1095 = vsel %vm828, %v1043, 0.0
    %v1096 = vrot.slane %v1095, 4
    %v1097 = vadd.f32 %v1095, %v1096
    %v1098 = vrot.slane %v1097, 2
    %v1099 = vadd.f32 %v1097, %v1098
    %v1100 = vrot.slane %v1099, 1
    %v1101 = vadd.f32 %v1099, %v1100
    %v1102 = vsel %vm828, %v1044, 0.0
    %v1103 = vrot.slane %v1102, 4
    %v1104 = vadd.f32 %v1102, %v1103
    %v1105 = vrot.slane %v1104, 2
    %v1106 = vadd.f32 %v1104, %v1105
    %v1107 = vrot.slane %v1106, 1
    %v1108 = vadd.f32 %v1106, %v1107
    %v1109 = vrot.slane %v724, 5
    %v1110 = vrot.slane %v725, 5
    %v1111 = vrot.slane %v726, 5
    %v1112 = vrot.slane %v727, 5
    %v1113 = vrot.slane %v728, 5
    %v1114 = vrot.slane %v729, 5
    %v1115 = vrot.slane %v730, 5
    %v1116 = vrot.slane %v731, 5
    %v1125 = vsel %vm747, %v1109, 0.0
    %v1126 = vrot.slane %v1125, 4
    %v1127 = vadd.f32 %v1125, %v1126
    %v1128 = vrot.slane %v1127, 2
    %v1129 = vadd.f32 %v1127, %v1128
    %v1130 = vrot.slane %v1129, 1
    %v1131 = vadd.f32 %v1129, %v1130
    %v1132 = vsel %vm747, %v1110, 0.0
    %v1133 = vrot.slane %v1132, 4
    %v1134 = vadd.f32 %v1132, %v1133
    %v1135 = vrot.slane %v1134, 2
    %v1136 = vadd.f32 %v1134, %v1135
    %v1137 = vrot.slane %v1136, 1
    %v1138 = vadd.f32 %v1136, %v1137
    %v1139 = vsel %vm747, %v1111, 0.0
    %v1140 = vrot.slane %v1139, 4
    %v1141 = vadd.f32 %v1139, %v1140
    %v1142 = vrot.slane %v1141, 2
    %v1143 = vadd.f32 %v1141, %v1142
    %v1144 = vrot.slane %v1143, 1
    %v1145 = vadd.f32 %v1143, %v1144
    %v1146 = vsel %vm747, %v1112, 0.0
    %v1147 = vrot.slane %v1146, 4
    %v1148 = vadd.f32 %v1146, %v1147
    %v1149 = vrot.slane %v1148, 2
    %v1150 = vadd.f32 %v1148, %v1149
    %v1151 = vrot.slane %v1150, 1
    %v1152 = vadd.f32 %v1150, %v1151
    %v1153 = vsel %vm747, %v1113, 0.0
    %v1154 = vrot.slane %v1153, 4
    %v1155 = vadd.f32 %v1153, %v1154
    %v1156 = vrot.slane %v1155, 2
    %v1157 = vadd.f32 %v1155, %v1156
    %v1158 = vrot.slane %v1157, 1
    %v1159 = vadd.f32 %v1157, %v1158
    %v1160 = vsel %vm747, %v1114, 0.0
    %v1161 = vrot.slane %v1160, 4
    %v1162 = vadd.f32 %v1160, %v1161
    %v1163 = vrot.slane %v1162, 2
    %v1164 = vadd.f32 %v1162, %v1163
    %v1165 = vrot.slane %v1164, 1
    %v1166 = vadd.f32 %v1164, %v1165
    %v1167 = vsel %vm747, %v1115, 0.0
    %v1168 = vrot.slane %v1167, 4
    %v1169 = vadd.f32 %v1167, %v1168
    %v1170 = vrot.slane %v1169, 2
    %v1171 = vadd.f32 %v1169, %v1170
    %v1172 = vrot.slane %v1171, 1
    %v1173 = vadd.f32 %v1171, %v1172
    %v1174 = vsel %vm747, %v1116, 0.0
    %v1175 = vrot.slane %v1174, 4
    %v1176 = vadd.f32 %v1174, %v1175
    %v1177 = vrot.slane %v1176, 2
    %v1178 = vadd.f32 %v1176, %v1177
    %v1179 = vrot.slane %v1178, 1
    %v1180 = vadd.f32 %v1178, %v1179
    %v1181 = vadd.f32 %v979, %v1059
    %v1182 = vadd.f32 %v986, %v1066
    %v1183 = vadd.f32 %v993, %v1073
    %v1184 = vadd.f32 %v1000, %v1080
    %v1185 = vadd.f32 %v1007, %v1087
    %v1186 = vadd.f32 %v1014, %v1094
    %v1187 = vadd.f32 %v1021, %v1101
    %v1188 = vadd.f32 %v1028, %v1108
    %v1189 = vadd.f32 %v1059, %v1131
    %v1190 = vadd.f32 %v1066, %v1138
    %v1191 = vadd.f32 %v1073, %v1145
    %v1192 = vadd.f32 %v1080, %v1152
    %v1193 = vadd.f32 %v1087, %v1159
    %v1194 = vadd.f32 %v1094, %v1166
    %v1195 = vadd.f32 %v1101, %v1173
    %v1196 = vadd.f32 %v1108, %v1180
    %v1197 = vmul.f32 %v957, %v738
    %v1198 = vmul.f32 %v958, %v738
    %v1199 = vmul.f32 %v959, %v738
    %v1200 = vmul.f32 %v960, %v738
    %v1201 = vmul.f32 %v961, %v738
    %v1202 = vmul.f32 %v962, %v738
    %v1203 = vmul.f32 %v963, %v738
    %v1204 = vmul.f32 %v964, %v738
    %v1205 = vadd.f32 %v1197, %v745
    %v1206 = vadd.f32 %v1198, %v745
    %v1207 = vadd.f32 %v1199, %v745
    %v1208 = vadd.f32 %v1200, %v745
    %v1209 = vadd.f32 %v1201, %v745
    %v1210 = vadd.f32 %v1202, %v745
    %v1211 = vadd.f32 %v1203, %v745
    %v1212 = vadd.f32 %v1204, %v745
    %v1213 = vmax.f32 %v1205, 0.0
    %v1214 = vmax.f32 %v1206, 0.0
    %v1215 = vmax.f32 %v1207, 0.0
    %v1216 = vmax.f32 %v1208, 0.0
    %v1217 = vmax.f32 %v1209, 0.0
    %v1218 = vmax.f32 %v1210, 0.0
    %v1219 = vmax.f32 %v1211, 0.0
    %v1220 = vmax.f32 %v1212, 0.0
    %v1221 = vmul.f32 %v965, %v738
    %v1222 = vmul.f32 %v966, %v738
    %v1223 = vmul.f32 %v967, %v738
    %v1224 = vmul.f32 %v968, %v738
    %v1225 = vmul.f32 %v969, %v738
    %v1226 = vmul.f32 %v970, %v738
    %v1227 = vmul.f32 %v971, %v738
    %v1228 = vmul.f32 %v972, %v738
    %v1229 = vadd.f32 %v1221, %v745
    %v1230 = vadd.f32 %v1222, %v745
    %v1231 = vadd.f32 %v1223, %v745
    %v1232 = vadd.f32 %v1224, %v745
    %v1233 = vadd.f32 %v1225, %v745
    %v1234 = vadd.f32 %v1226, %v745
    %v1235 = vadd.f32 %v1227, %v745
    %v1236 = vadd.f32 %v1228, %v745
    %v1237 = vmax.f32 %v1229, 0.0
    %v1238 = vmax.f32 %v1230, 0.0
    %v1239 = vmax.f32 %v1231, 0.0
    %v1240 = vmax.f32 %v1232, 0.0
    %v1241 = vmax.f32 %v1233, 0.0
    %v1242 = vmax.f32 %v1234, 0.0
    %v1243 = vmax.f32 %v1235, 0.0
    %v1244 = vmax.f32 %v1236, 0.0
    %v1245 = vmul.f32 %v1181, %v738
    %v1246 = vmul.f32 %v1182, %v738
    %v1247 = vmul.f32 %v1183, %v738
    %v1248 = vmul.f32 %v1184, %v738
    %v1249 = vmul.f32 %v1185, %v738
    %v1250 = vmul.f32 %v1186, %v738
    %v1251 = vmul.f32 %v1187, %v738
    %v1252 = vmul.f32 %v1188, %v738
    %v1253 = vadd.f32 %v1245, %v745
    %v1254 = vadd.f32 %v1246, %v745
    %v1255 = vadd.f32 %v1247, %v745
    %v1256 = vadd.f32 %v1248, %v745
    %v1257 = vadd.f32 %v1249, %v745
    %v1258 = vadd.f32 %v1250, %v745
    %v1259 = vadd.f32 %v1251, %v745
    %v1260 = vadd.f32 %v1252, %v745
    %v1261 = vmax.f32 %v1253, 0.0
    %v1262 = vmax.f32 %v1254, 0.0
    %v1263 = vmax.f32 %v1255, 0.0
    %v1264 = vmax.f32 %v1256, 0.0
    %v1265 = vmax.f32 %v1257, 0.0
    %v1266 = vmax.f32 %v1258, 0.0
    %v1267 = vmax.f32 %v1259, 0.0
    %v1268 = vmax.f32 %v1260, 0.0
    %v1269 = vmul.f32 %v1189, %v738
    %v1270 = vmul.f32 %v1190, %v738
    %v1271 = vmul.f32 %v1191, %v738
    %v1272 = vmul.f32 %v1192, %v738
    %v1273 = vmul.f32 %v1193, %v738
    %v1274 = vmul.f32 %v1194, %v738
    %v1275 = vmul.f32 %v1195, %v738
    %v1276 = vmul.f32 %v1196, %v738
    %v1277 = vadd.f32 %v1269, %v745
    %v1278 = vadd.f32 %v1270, %v745
    %v1279 = vadd.f32 %v1271, %v745
    %v1280 = vadd.f32 %v1272, %v745
    %v1281 = vadd.f32 %v1273, %v745
    %v1282 = vadd.f32 %v1274, %v745
    %v1283 = vadd.f32 %v1275, %v745
    %v1284 = vadd.f32 %v1276, %v745
    %v1285 = vmax.f32 %v1277, 0.0
    %v1286 = vmax.f32 %v1278, 0.0
    %v1287 = vmax.f32 %v1279, 0.0
    %v1288 = vmax.f32 %v1280, 0.0
    %v1289 = vmax.f32 %v1281, 0.0
    %v1290 = vmax.f32 %v1282, 0.0
    %v1291 = vmax.f32 %v1283, 0.0
    %v1292 = vmax.f32 %v1284, 0.0
    %v1301 = vrot.slane %v1214, 7
    %vm1302 = vcmask 1041409
    %v1303 = vsel %vm1302, %v1301, %v1213
    %v1304 = vrot.slane %v1215, 6
    %vm1305 = vcmask 1042434
    %v1306 = vsel %vm1305, %v1304, %v1303
    %v1307 = vrot.slane %v1216, 5
    %vm1308 = vcmask 1043459
    %v1309 = vsel %vm1308, %v1307, %v1306
    %v1310 = vrot.slane %v1217, 4
    %vm1311 = vcmask 1044484
    %v1312 = vsel %vm1311, %v1310, %v1309
    %v1313 = vrot.slane %v1218, 3
    %vm1314 = vcmask 1045509
    %v1315 = vsel %vm1314, %v1313, %v1312
    %v1316 = vrot.slane %v1219, 2
    %vm1317 = vcmask 1046534
    %v1318 = vsel %vm1317, %v1316, %v1315
    %v1319 = vrot.slane %v1220, 1
    %vm1320 = vcmask 1047559
    %v1321 = vsel %vm1320, %v1319, %v1318
    %v1331 = vrot.slane %v1238, 7
    %v1332 = vsel %vm1302, %v1331, %v1237
    %v1333 = vrot.slane %v1239, 6
    %v1334 = vsel %vm1305, %v1333, %v1332
    %v1335 = vrot.slane %v1240, 5
    %v1336 = vsel %vm1308, %v1335, %v1334
    %v1337 = vrot.slane %v1241, 4
    %v1338 = vsel %vm1311, %v1337, %v1336
    %v1339 = vrot.slane %v1242, 3
    %v1340 = vsel %vm1314, %v1339, %v1338
    %v1341 = vrot.slane %v1243, 2
    %v1342 = vsel %vm1317, %v1341, %v1340
    %v1343 = vrot.slane %v1244, 1
    %v1344 = vsel %vm1320, %v1343, %v1342
    %v1354 = vrot.slane %v1262, 7
    %v1355 = vsel %vm1302, %v1354, %v1261
    %v1356 = vrot.slane %v1263, 6
    %v1357 = vsel %vm1305, %v1356, %v1355
    %v1358 = vrot.slane %v1264, 5
    %v1359 = vsel %vm1308, %v1358, %v1357
    %v1360 = vrot.slane %v1265, 4
    %v1361 = vsel %vm1311, %v1360, %v1359
    %v1362 = vrot.slane %v1266, 3
    %v1363 = vsel %vm1314, %v1362, %v1361
    %v1364 = vrot.slane %v1267, 2
    %v1365 = vsel %vm1317, %v1364, %v1363
    %v1366 = vrot.slane %v1268, 1
    %v1367 = vsel %vm1320, %v1366, %v1365
    %v1377 = vrot.slane %v1286, 7
    %v1378 = vsel %vm1302, %v1377, %v1285
    %v1379 = vrot.slane %v1287, 6
    %v1380 = vsel %vm1305, %v1379, %v1378
    %v1381 = vrot.slane %v1288, 5
    %v1382 = vsel %vm1308, %v1381, %v1380
    %v1383 = vrot.slane %v1289, 4
    %v1384 = vsel %vm1311, %v1383, %v1382
    %v1385 = vrot.slane %v1290, 3
    %v1386 = vsel %vm1314, %v1385, %v1384
    %v1387 = vrot.slane %v1291, 2
    %v1388 = vsel %vm1317, %v1387, %v1386
    %v1389 = vrot.slane %v1292, 1
    %v1390 = vsel %vm1320, %v1389, %v1388
    %v1392 = vpack.c.bf16 %v1321, %v1321
    %v1393 = vpack.c.bf16 %v1344, %v1344
    %v1394 = vpack.c.bf16 %v1367, %v1367
    %v1395 = vpack.c.bf16 %v1390, %v1390
    %v1396 = vld [vmem:[#allocation7] sm:$0xff]
    %v1397 = vld [vmem:[#allocation7 + $0x8] sm:$0xff]
    %v1398 = vld [vmem:[#allocation7 + $0x10] sm:$0xff]
    %v1399 = vld [vmem:[#allocation7 + $0x18] sm:$0xff]
    %v1400 = vld [vmem:[#allocation7 + $0x20] sm:$0xff]
    %v1401 = vld [vmem:[#allocation7 + $0x28] sm:$0xff]
    %v1402 = vld [vmem:[#allocation7 + $0x30] sm:$0xff]
    %v1403 = vld [vmem:[#allocation7 + $0x38] sm:$0xff]
    %v1404 = vld [vmem:[#allocation7 + $0x40] sm:$0xff]
    %v1405 = vld [vmem:[#allocation7 + $0x48] sm:$0xff]
    %v1406 = vld [vmem:[#allocation7 + $0x50] sm:$0xff]
    %v1407 = vld [vmem:[#allocation7 + $0x58] sm:$0xff]
    %v1408 = vld [vmem:[#allocation7 + $0x60] sm:$0xff]
    %v1409 = vld [vmem:[#allocation7 + $0x68] sm:$0xff]
    %v1410 = vld [vmem:[#allocation7 + $0x70] sm:$0xff]
    %v1411 = vld [vmem:[#allocation7 + $0x78] sm:$0xff]
    %v1412 = vld [vmem:[#allocation7 + $0x80] sm:$0xff]
    %v1413 = vld [vmem:[#allocation7 + $0x88] sm:$0xff]
    %v1414 = vld [vmem:[#allocation7 + $0x90] sm:$0xff]
    %v1415 = vld [vmem:[#allocation7 + $0x98] sm:$0xff]
    %v1416 = vld [vmem:[#allocation7 + $0xa0] sm:$0xff]
    %v1417 = vld [vmem:[#allocation7 + $0xa8] sm:$0xff]
    %v1418 = vld [vmem:[#allocation7 + $0xb0] sm:$0xff]
    %v1419 = vld [vmem:[#allocation7 + $0xb8] sm:$0xff]
    %v1420 = vld [vmem:[#allocation7 + $0xc0] sm:$0xff]
    %v1421 = vld [vmem:[#allocation7 + $0xc8] sm:$0xff]
    %v1422 = vld [vmem:[#allocation7 + $0xd0] sm:$0xff]
    %v1423 = vld [vmem:[#allocation7 + $0xd8] sm:$0xff]
    %v1424 = vld [vmem:[#allocation7 + $0xe0] sm:$0xff]
    %v1425 = vld [vmem:[#allocation7 + $0xe8] sm:$0xff]
    %v1426 = vld [vmem:[#allocation7 + $0xf0] sm:$0xff]
    %v1427 = vld [vmem:[#allocation7 + $0xf8] sm:$0xff]
    %v1428 = vld [vmem:[#allocation7 + $0x100] sm:$0xff]
    %v1429 = vld [vmem:[#allocation7 + $0x108] sm:$0xff]
    %v1430 = vld [vmem:[#allocation7 + $0x110] sm:$0xff]
    %v1431 = vld [vmem:[#allocation7 + $0x118] sm:$0xff]
    %v1432 = vld [vmem:[#allocation7 + $0x120] sm:$0xff]
    %v1433 = vld [vmem:[#allocation7 + $0x128] sm:$0xff]
    %v1434 = vld [vmem:[#allocation7 + $0x130] sm:$0xff]
    %v1435 = vld [vmem:[#allocation7 + $0x138] sm:$0xff]
    %v1436 = vld [vmem:[#allocation7 + $0x140] sm:$0xff]
    %v1437 = vld [vmem:[#allocation7 + $0x148] sm:$0xff]
    %v1438 = vld [vmem:[#allocation7 + $0x150] sm:$0xff]
    %v1439 = vld [vmem:[#allocation7 + $0x158] sm:$0xff]
    %v1440 = vld [vmem:[#allocation7 + $0x160] sm:$0xff]
    %v1441 = vld [vmem:[#allocation7 + $0x168] sm:$0xff]
    %v1442 = vld [vmem:[#allocation7 + $0x170] sm:$0xff]
    %v1443 = vld [vmem:[#allocation7 + $0x178] sm:$0xff]
    %v1444 = vld [vmem:[#allocation7 + $0x180] sm:$0xff]
    %v1445 = vld [vmem:[#allocation7 + $0x188] sm:$0xff]
    %v1446 = vld [vmem:[#allocation7 + $0x190] sm:$0xff]
    %v1447 = vld [vmem:[#allocation7 + $0x198] sm:$0xff]
    %v1448 = vld [vmem:[#allocation7 + $0x1a0] sm:$0xff]
    %v1449 = vld [vmem:[#allocation7 + $0x1a8] sm:$0xff]
    %v1450 = vld [vmem:[#allocation7 + $0x1b0] sm:$0xff]
    %v1451 = vld [vmem:[#allocation7 + $0x1b8] sm:$0xff]
    %v1452 = vld [vmem:[#allocation7 + $0x1c0] sm:$0xff]
    %v1453 = vld [vmem:[#allocation7 + $0x1c8] sm:$0xff]
    %v1454 = vld [vmem:[#allocation7 + $0x1d0] sm:$0xff]
    %v1455 = vld [vmem:[#allocation7 + $0x1d8] sm:$0xff]
    %v1456 = vld [vmem:[#allocation7 + $0x1e0] sm:$0xff]
    %v1457 = vld [vmem:[#allocation7 + $0x1e8] sm:$0xff]
    %v1458 = vld [vmem:[#allocation7 + $0x1f0] sm:$0xff]
    %v1459 = vld [vmem:[#allocation7 + $0x1f8] sm:$0xff]
    %v1460 = vld [vmem:[#allocation7 + $0x200] sm:$0xff]
    %v1461 = vld [vmem:[#allocation7 + $0x208] sm:$0xff]
    %v1462 = vld [vmem:[#allocation7 + $0x210] sm:$0xff]
    %v1463 = vld [vmem:[#allocation7 + $0x218] sm:$0xff]
    %v1464 = vld [vmem:[#allocation7 + $0x220] sm:$0xff]
    %v1465 = vld [vmem:[#allocation7 + $0x228] sm:$0xff]
    %v1466 = vld [vmem:[#allocation7 + $0x230] sm:$0xff]
    %v1467 = vld [vmem:[#allocation7 + $0x238] sm:$0xff]
    %v1468 = vld [vmem:[#allocation7 + $0x240] sm:$0xff]
    %v1469 = vld [vmem:[#allocation7 + $0x248] sm:$0xff]
    %v1470 = vld [vmem:[#allocation7 + $0x250] sm:$0xff]
    %v1471 = vld [vmem:[#allocation7 + $0x258] sm:$0xff]
    %v1472 = vld [vmem:[#allocation7 + $0x260] sm:$0xff]
    %v1473 = vld [vmem:[#allocation7 + $0x268] sm:$0xff]
    %v1474 = vld [vmem:[#allocation7 + $0x270] sm:$0xff]
    %v1475 = vld [vmem:[#allocation7 + $0x278] sm:$0xff]
    %v1476 = vld [vmem:[#allocation7 + $0x280] sm:$0xff]
    %v1477 = vld [vmem:[#allocation7 + $0x288] sm:$0xff]
    %v1478 = vld [vmem:[#allocation7 + $0x290] sm:$0xff]
    %v1479 = vld [vmem:[#allocation7 + $0x298] sm:$0xff]
    %v1480 = vld [vmem:[#allocation7 + $0x2a0] sm:$0xff]
    %v1481 = vld [vmem:[#allocation7 + $0x2a8] sm:$0xff]
    %v1482 = vld [vmem:[#allocation7 + $0x2b0] sm:$0xff]
    %v1483 = vld [vmem:[#allocation7 + $0x2b8] sm:$0xff]
    %v1484 = vld [vmem:[#allocation7 + $0x2c0] sm:$0xff]
    %v1485 = vld [vmem:[#allocation7 + $0x2c8] sm:$0xff]
    %v1486 = vld [vmem:[#allocation7 + $0x2d0] sm:$0xff]
    %v1487 = vld [vmem:[#allocation7 + $0x2d8] sm:$0xff]
    %v1488 = vld [vmem:[#allocation7 + $0x2e0] sm:$0xff]
    %v1489 = vld [vmem:[#allocation7 + $0x2e8] sm:$0xff]
    %v1490 = vld [vmem:[#allocation7 + $0x2f0] sm:$0xff]
    %v1491 = vld [vmem:[#allocation7 + $0x2f8] sm:$0xff]
    %v1492 = vld [vmem:[#allocation7 + $0x300] sm:$0xff]
    %v1493 = vld [vmem:[#allocation7 + $0x308] sm:$0xff]
    %v1494 = vld [vmem:[#allocation7 + $0x310] sm:$0xff]
    %v1495 = vld [vmem:[#allocation7 + $0x318] sm:$0xff]
    %v1496 = vld [vmem:[#allocation7 + $0x320] sm:$0xff]
    %v1497 = vld [vmem:[#allocation7 + $0x328] sm:$0xff]
    %v1498 = vld [vmem:[#allocation7 + $0x330] sm:$0xff]
    %v1499 = vld [vmem:[#allocation7 + $0x338] sm:$0xff]
    %v1500 = vld [vmem:[#allocation7 + $0x340] sm:$0xff]
    %v1501 = vld [vmem:[#allocation7 + $0x348] sm:$0xff]
    %v1502 = vld [vmem:[#allocation7 + $0x350] sm:$0xff]
    %v1503 = vld [vmem:[#allocation7 + $0x358] sm:$0xff]
    %v1504 = vld [vmem:[#allocation7 + $0x360] sm:$0xff]
    %v1505 = vld [vmem:[#allocation7 + $0x368] sm:$0xff]
    %v1506 = vld [vmem:[#allocation7 + $0x370] sm:$0xff]
    %v1507 = vld [vmem:[#allocation7 + $0x378] sm:$0xff]
    %v1508 = vld [vmem:[#allocation7 + $0x380] sm:$0xff]
    %v1509 = vld [vmem:[#allocation7 + $0x388] sm:$0xff]
    %v1510 = vld [vmem:[#allocation7 + $0x390] sm:$0xff]
    %v1511 = vld [vmem:[#allocation7 + $0x398] sm:$0xff]
    %v1512 = vld [vmem:[#allocation7 + $0x3a0] sm:$0xff]
    %v1513 = vld [vmem:[#allocation7 + $0x3a8] sm:$0xff]
    %v1514 = vld [vmem:[#allocation7 + $0x3b0] sm:$0xff]
    %v1515 = vld [vmem:[#allocation7 + $0x3b8] sm:$0xff]
    %v1516 = vld [vmem:[#allocation7 + $0x3c0] sm:$0xff]
    %v1517 = vld [vmem:[#allocation7 + $0x3c8] sm:$0xff]
    %v1518 = vld [vmem:[#allocation7 + $0x3d0] sm:$0xff]
    %v1519 = vld [vmem:[#allocation7 + $0x3d8] sm:$0xff]
    %v1520 = vld [vmem:[#allocation7 + $0x3e0] sm:$0xff]
    %v1521 = vld [vmem:[#allocation7 + $0x3e8] sm:$0xff]
    %v1522 = vld [vmem:[#allocation7 + $0x3f0] sm:$0xff]
    %v1523 = vld [vmem:[#allocation7 + $0x3f8] sm:$0xff]
    %v1524 = vld [vmem:[#allocation7 + $0x400] sm:$0xff]
    %v1525 = vld [vmem:[#allocation7 + $0x408] sm:$0xff]
    %v1526 = vld [vmem:[#allocation7 + $0x410] sm:$0xff]
    %v1527 = vld [vmem:[#allocation7 + $0x418] sm:$0xff]
    %v1528 = vld [vmem:[#allocation7 + $0x420] sm:$0xff]
    %v1529 = vld [vmem:[#allocation7 + $0x428] sm:$0xff]
    %v1530 = vld [vmem:[#allocation7 + $0x430] sm:$0xff]
    %v1531 = vld [vmem:[#allocation7 + $0x438] sm:$0xff]
    %v1532 = vld [vmem:[#allocation7 + $0x440] sm:$0xff]
    %v1533 = vld [vmem:[#allocation7 + $0x448] sm:$0xff]
    %v1534 = vld [vmem:[#allocation7 + $0x450] sm:$0xff]
    %v1535 = vld [vmem:[#allocation7 + $0x458] sm:$0xff]
    %v1536 = vld [vmem:[#allocation7 + $0x460] sm:$0xff]
    %v1537 = vld [vmem:[#allocation7 + $0x468] sm:$0xff]
    %v1538 = vld [vmem:[#allocation7 + $0x470] sm:$0xff]
    %v1539 = vld [vmem:[#allocation7 + $0x478] sm:$0xff]
    %v1540 = vld [vmem:[#allocation7 + $0x480] sm:$0xff]
    %v1541 = vld [vmem:[#allocation7 + $0x488] sm:$0xff]
    %v1542 = vld [vmem:[#allocation7 + $0x490] sm:$0xff]
    %v1543 = vld [vmem:[#allocation7 + $0x498] sm:$0xff]
    %v1544 = vld [vmem:[#allocation7 + $0x4a0] sm:$0xff]
    %v1545 = vld [vmem:[#allocation7 + $0x4a8] sm:$0xff]
    %v1546 = vld [vmem:[#allocation7 + $0x4b0] sm:$0xff]
    %v1547 = vld [vmem:[#allocation7 + $0x4b8] sm:$0xff]
    %v1548 = vld [vmem:[#allocation7 + $0x4c0] sm:$0xff]
    %v1549 = vld [vmem:[#allocation7 + $0x4c8] sm:$0xff]
    %v1550 = vld [vmem:[#allocation7 + $0x4d0] sm:$0xff]
    %v1551 = vld [vmem:[#allocation7 + $0x4d8] sm:$0xff]
    %v1552 = vld [vmem:[#allocation7 + $0x4e0] sm:$0xff]
    %v1553 = vld [vmem:[#allocation7 + $0x4e8] sm:$0xff]
    %v1554 = vld [vmem:[#allocation7 + $0x4f0] sm:$0xff]
    %v1555 = vld [vmem:[#allocation7 + $0x4f8] sm:$0xff]
    %v1556 = vld [vmem:[#allocation7 + $0x500] sm:$0xff]
    %v1557 = vld [vmem:[#allocation7 + $0x508] sm:$0xff]
    %v1558 = vld [vmem:[#allocation7 + $0x510] sm:$0xff]
    %v1559 = vld [vmem:[#allocation7 + $0x518] sm:$0xff]
    %v1560 = vld [vmem:[#allocation7 + $0x520] sm:$0xff]
    %v1561 = vld [vmem:[#allocation7 + $0x528] sm:$0xff]
    %v1562 = vld [vmem:[#allocation7 + $0x530] sm:$0xff]
    %v1563 = vld [vmem:[#allocation7 + $0x538] sm:$0xff]
    %v1564 = vld [vmem:[#allocation7 + $0x540] sm:$0xff]
    %v1565 = vld [vmem:[#allocation7 + $0x548] sm:$0xff]
    %v1566 = vld [vmem:[#allocation7 + $0x550] sm:$0xff]
    %v1567 = vld [vmem:[#allocation7 + $0x558] sm:$0xff]
    %v1568 = vld [vmem:[#allocation7 + $0x560] sm:$0xff]
    %v1569 = vld [vmem:[#allocation7 + $0x568] sm:$0xff]
    %v1570 = vld [vmem:[#allocation7 + $0x570] sm:$0xff]
    %v1571 = vld [vmem:[#allocation7 + $0x578] sm:$0xff]
    %v1572 = vld [vmem:[#allocation7 + $0x580] sm:$0xff]
    %v1573 = vld [vmem:[#allocation7 + $0x588] sm:$0xff]
    %v1574 = vld [vmem:[#allocation7 + $0x590] sm:$0xff]
    %v1575 = vld [vmem:[#allocation7 + $0x598] sm:$0xff]
    %v1576 = vld [vmem:[#allocation7 + $0x5a0] sm:$0xff]
    %v1577 = vld [vmem:[#allocation7 + $0x5a8] sm:$0xff]
    %v1578 = vld [vmem:[#allocation7 + $0x5b0] sm:$0xff]
    %v1579 = vld [vmem:[#allocation7 + $0x5b8] sm:$0xff]
    %v1580 = vld [vmem:[#allocation7 + $0x5c0] sm:$0xff]
    %v1581 = vld [vmem:[#allocation7 + $0x5c8] sm:$0xff]
    %v1582 = vld [vmem:[#allocation7 + $0x5d0] sm:$0xff]
    %v1583 = vld [vmem:[#allocation7 + $0x5d8] sm:$0xff]
    %v1584 = vld [vmem:[#allocation7 + $0x5e0] sm:$0xff]
    %v1585 = vld [vmem:[#allocation7 + $0x5e8] sm:$0xff]
    %v1586 = vld [vmem:[#allocation7 + $0x5f0] sm:$0xff]
    %v1587 = vld [vmem:[#allocation7 + $0x5f8] sm:$0xff]
    %v1780 = vunpack.c.l.b16 %v1396
    %v1781 = vunpack.c.h.b16 %v1396
    %v1782 = vunpack.c.l.b16 %v1397
    %v1783 = vunpack.c.h.b16 %v1397
    %v1784 = vunpack.c.l.b16 %v1398
    %v1785 = vunpack.c.h.b16 %v1398
    %v1786 = vunpack.c.l.b16 %v1399
    %v1787 = vunpack.c.h.b16 %v1399
    %v1788 = vunpack.c.l.b16 %v1400
    %v1789 = vunpack.c.h.b16 %v1400
    %v1790 = vunpack.c.l.b16 %v1401
    %v1791 = vunpack.c.h.b16 %v1401
    %v1792 = vunpack.c.l.b16 %v1402
    %v1793 = vunpack.c.h.b16 %v1402
    %v1794 = vunpack.c.l.b16 %v1403
    %v1795 = vunpack.c.h.b16 %v1403
    %v1796 = vunpack.c.l.b16 %v1404
    %v1797 = vunpack.c.h.b16 %v1404
    %v1798 = vunpack.c.l.b16 %v1405
    %v1799 = vunpack.c.h.b16 %v1405
    %v1800 = vunpack.c.l.b16 %v1406
    %v1801 = vunpack.c.h.b16 %v1406
    %v1802 = vunpack.c.l.b16 %v1407
    %v1803 = vunpack.c.h.b16 %v1407
    %v1804 = vunpack.c.l.b16 %v1408
    %v1805 = vunpack.c.h.b16 %v1408
    %v1806 = vunpack.c.l.b16 %v1409
    %v1807 = vunpack.c.h.b16 %v1409
    %v1808 = vunpack.c.l.b16 %v1410
    %v1809 = vunpack.c.h.b16 %v1410
    %v1810 = vunpack.c.l.b16 %v1411
    %v1811 = vunpack.c.h.b16 %v1411
    %v1812 = vunpack.c.l.b16 %v1412
    %v1813 = vunpack.c.h.b16 %v1412
    %v1814 = vunpack.c.l.b16 %v1413
    %v1815 = vunpack.c.h.b16 %v1413
    %v1816 = vunpack.c.l.b16 %v1414
    %v1817 = vunpack.c.h.b16 %v1414
    %v1818 = vunpack.c.l.b16 %v1415
    %v1819 = vunpack.c.h.b16 %v1415
    %v1820 = vunpack.c.l.b16 %v1416
    %v1821 = vunpack.c.h.b16 %v1416
    %v1822 = vunpack.c.l.b16 %v1417
    %v1823 = vunpack.c.h.b16 %v1417
    %v1824 = vunpack.c.l.b16 %v1418
    %v1825 = vunpack.c.h.b16 %v1418
    %v1826 = vunpack.c.l.b16 %v1419
    %v1827 = vunpack.c.h.b16 %v1419
    %v1828 = vunpack.c.l.b16 %v1420
    %v1829 = vunpack.c.h.b16 %v1420
    %v1830 = vunpack.c.l.b16 %v1421
    %v1831 = vunpack.c.h.b16 %v1421
    %v1832 = vunpack.c.l.b16 %v1422
    %v1833 = vunpack.c.h.b16 %v1422
    %v1834 = vunpack.c.l.b16 %v1423
    %v1835 = vunpack.c.h.b16 %v1423
    %v1836 = vunpack.c.l.b16 %v1424
    %v1837 = vunpack.c.h.b16 %v1424
    %v1838 = vunpack.c.l.b16 %v1425
    %v1839 = vunpack.c.h.b16 %v1425
    %v1840 = vunpack.c.l.b16 %v1426
    %v1841 = vunpack.c.h.b16 %v1426
    %v1842 = vunpack.c.l.b16 %v1427
    %v1843 = vunpack.c.h.b16 %v1427
    %v1844 = vunpack.c.l.b16 %v1428
    %v1845 = vunpack.c.h.b16 %v1428
    %v1846 = vunpack.c.l.b16 %v1429
    %v1847 = vunpack.c.h.b16 %v1429
    %v1848 = vunpack.c.l.b16 %v1430
    %v1849 = vunpack.c.h.b16 %v1430
    %v1850 = vunpack.c.l.b16 %v1431
    %v1851 = vunpack.c.h.b16 %v1431
    %v1852 = vunpack.c.l.b16 %v1432
    %v1853 = vunpack.c.h.b16 %v1432
    %v1854 = vunpack.c.l.b16 %v1433
    %v1855 = vunpack.c.h.b16 %v1433
    %v1856 = vunpack.c.l.b16 %v1434
    %v1857 = vunpack.c.h.b16 %v1434
    %v1858 = vunpack.c.l.b16 %v1435
    %v1859 = vunpack.c.h.b16 %v1435
    %v1860 = vunpack.c.l.b16 %v1436
    %v1861 = vunpack.c.h.b16 %v1436
    %v1862 = vunpack.c.l.b16 %v1437
    %v1863 = vunpack.c.h.b16 %v1437
    %v1864 = vunpack.c.l.b16 %v1438
    %v1865 = vunpack.c.h.b16 %v1438
    %v1866 = vunpack.c.l.b16 %v1439
    %v1867 = vunpack.c.h.b16 %v1439
    %v1868 = vunpack.c.l.b16 %v1440
    %v1869 = vunpack.c.h.b16 %v1440
    %v1870 = vunpack.c.l.b16 %v1441
    %v1871 = vunpack.c.h.b16 %v1441
    %v1872 = vunpack.c.l.b16 %v1442
    %v1873 = vunpack.c.h.b16 %v1442
    %v1874 = vunpack.c.l.b16 %v1443
    %v1875 = vunpack.c.h.b16 %v1443
    %v1876 = vunpack.c.l.b16 %v1444
    %v1877 = vunpack.c.h.b16 %v1444
    %v1878 = vunpack.c.l.b16 %v1445
    %v1879 = vunpack.c.h.b16 %v1445
    %v1880 = vunpack.c.l.b16 %v1446
    %v1881 = vunpack.c.h.b16 %v1446
    %v1882 = vunpack.c.l.b16 %v1447
    %v1883 = vunpack.c.h.b16 %v1447
    %v1884 = vunpack.c.l.b16 %v1448
    %v1885 = vunpack.c.h.b16 %v1448
    %v1886 = vunpack.c.l.b16 %v1449
    %v1887 = vunpack.c.h.b16 %v1449
    %v1888 = vunpack.c.l.b16 %v1450
    %v1889 = vunpack.c.h.b16 %v1450
    %v1890 = vunpack.c.l.b16 %v1451
    %v1891 = vunpack.c.h.b16 %v1451
    %v1892 = vunpack.c.l.b16 %v1452
    %v1893 = vunpack.c.h.b16 %v1452
    %v1894 = vunpack.c.l.b16 %v1453
    %v1895 = vunpack.c.h.b16 %v1453
    %v1896 = vunpack.c.l.b16 %v1454
    %v1897 = vunpack.c.h.b16 %v1454
    %v1898 = vunpack.c.l.b16 %v1455
    %v1899 = vunpack.c.h.b16 %v1455
    %v1900 = vunpack.c.l.b16 %v1456
    %v1901 = vunpack.c.h.b16 %v1456
    %v1902 = vunpack.c.l.b16 %v1457
    %v1903 = vunpack.c.h.b16 %v1457
    %v1904 = vunpack.c.l.b16 %v1458
    %v1905 = vunpack.c.h.b16 %v1458
    %v1906 = vunpack.c.l.b16 %v1459
    %v1907 = vunpack.c.h.b16 %v1459
    %v1908 = vunpack.c.l.b16 %v1460
    %v1909 = vunpack.c.h.b16 %v1460
    %v1910 = vunpack.c.l.b16 %v1461
    %v1911 = vunpack.c.h.b16 %v1461
    %v1912 = vunpack.c.l.b16 %v1462
    %v1913 = vunpack.c.h.b16 %v1462
    %v1914 = vunpack.c.l.b16 %v1463
    %v1915 = vunpack.c.h.b16 %v1463
    %v1916 = vunpack.c.l.b16 %v1464
    %v1917 = vunpack.c.h.b16 %v1464
    %v1918 = vunpack.c.l.b16 %v1465
    %v1919 = vunpack.c.h.b16 %v1465
    %v1920 = vunpack.c.l.b16 %v1466
    %v1921 = vunpack.c.h.b16 %v1466
    %v1922 = vunpack.c.l.b16 %v1467
    %v1923 = vunpack.c.h.b16 %v1467
    %v1924 = vunpack.c.l.b16 %v1468
    %v1925 = vunpack.c.h.b16 %v1468
    %v1926 = vunpack.c.l.b16 %v1469
    %v1927 = vunpack.c.h.b16 %v1469
    %v1928 = vunpack.c.l.b16 %v1470
    %v1929 = vunpack.c.h.b16 %v1470
    %v1930 = vunpack.c.l.b16 %v1471
    %v1931 = vunpack.c.h.b16 %v1471
    %v1932 = vunpack.c.l.b16 %v1472
    %v1933 = vunpack.c.h.b16 %v1472
    %v1934 = vunpack.c.l.b16 %v1473
    %v1935 = vunpack.c.h.b16 %v1473
    %v1936 = vunpack.c.l.b16 %v1474
    %v1937 = vunpack.c.h.b16 %v1474
    %v1938 = vunpack.c.l.b16 %v1475
    %v1939 = vunpack.c.h.b16 %v1475
    %v1940 = vunpack.c.l.b16 %v1476
    %v1941 = vunpack.c.h.b16 %v1476
    %v1942 = vunpack.c.l.b16 %v1477
    %v1943 = vunpack.c.h.b16 %v1477
    %v1944 = vunpack.c.l.b16 %v1478
    %v1945 = vunpack.c.h.b16 %v1478
    %v1946 = vunpack.c.l.b16 %v1479
    %v1947 = vunpack.c.h.b16 %v1479
    %v1948 = vunpack.c.l.b16 %v1480
    %v1949 = vunpack.c.h.b16 %v1480
    %v1950 = vunpack.c.l.b16 %v1481
    %v1951 = vunpack.c.h.b16 %v1481
    %v1952 = vunpack.c.l.b16 %v1482
    %v1953 = vunpack.c.h.b16 %v1482
    %v1954 = vunpack.c.l.b16 %v1483
    %v1955 = vunpack.c.h.b16 %v1483
    %v1956 = vunpack.c.l.b16 %v1484
    %v1957 = vunpack.c.h.b16 %v1484
    %v1958 = vunpack.c.l.b16 %v1485
    %v1959 = vunpack.c.h.b16 %v1485
    %v1960 = vunpack.c.l.b16 %v1486
    %v1961 = vunpack.c.h.b16 %v1486
    %v1962 = vunpack.c.l.b16 %v1487
    %v1963 = vunpack.c.h.b16 %v1487
    %v1964 = vunpack.c.l.b16 %v1488
    %v1965 = vunpack.c.h.b16 %v1488
    %v1966 = vunpack.c.l.b16 %v1489
    %v1967 = vunpack.c.h.b16 %v1489
    %v1968 = vunpack.c.l.b16 %v1490
    %v1969 = vunpack.c.h.b16 %v1490
    %v1970 = vunpack.c.l.b16 %v1491
    %v1971 = vunpack.c.h.b16 %v1491
    %v1972 = vunpack.c.l.b16 %v1492
    %v1973 = vunpack.c.h.b16 %v1492
    %v1974 = vunpack.c.l.b16 %v1493
    %v1975 = vunpack.c.h.b16 %v1493
    %v1976 = vunpack.c.l.b16 %v1494
    %v1977 = vunpack.c.h.b16 %v1494
    %v1978 = vunpack.c.l.b16 %v1495
    %v1979 = vunpack.c.h.b16 %v1495
    %v1980 = vunpack.c.l.b16 %v1496
    %v1981 = vunpack.c.h.b16 %v1496
    %v1982 = vunpack.c.l.b16 %v1497
    %v1983 = vunpack.c.h.b16 %v1497
    %v1984 = vunpack.c.l.b16 %v1498
    %v1985 = vunpack.c.h.b16 %v1498
    %v1986 = vunpack.c.l.b16 %v1499
    %v1987 = vunpack.c.h.b16 %v1499
    %v1988 = vunpack.c.l.b16 %v1500
    %v1989 = vunpack.c.h.b16 %v1500
    %v1990 = vunpack.c.l.b16 %v1501
    %v1991 = vunpack.c.h.b16 %v1501
    %v1992 = vunpack.c.l.b16 %v1502
    %v1993 = vunpack.c.h.b16 %v1502
    %v1994 = vunpack.c.l.b16 %v1503
    %v1995 = vunpack.c.h.b16 %v1503
    %v1996 = vunpack.c.l.b16 %v1504
    %v1997 = vunpack.c.h.b16 %v1504
    %v1998 = vunpack.c.l.b16 %v1505
    %v1999 = vunpack.c.h.b16 %v1505
    %v2000 = vunpack.c.l.b16 %v1506
    %v2001 = vunpack.c.h.b16 %v1506
    %v2002 = vunpack.c.l.b16 %v1507
    %v2003 = vunpack.c.h.b16 %v1507
    %v2004 = vunpack.c.l.b16 %v1508
    %v2005 = vunpack.c.h.b16 %v1508
    %v2006 = vunpack.c.l.b16 %v1509
    %v2007 = vunpack.c.h.b16 %v1509
    %v2008 = vunpack.c.l.b16 %v1510
    %v2009 = vunpack.c.h.b16 %v1510
    %v2010 = vunpack.c.l.b16 %v1511
    %v2011 = vunpack.c.h.b16 %v1511
    %v2012 = vunpack.c.l.b16 %v1512
    %v2013 = vunpack.c.h.b16 %v1512
    %v2014 = vunpack.c.l.b16 %v1513
    %v2015 = vunpack.c.h.b16 %v1513
    %v2016 = vunpack.c.l.b16 %v1514
    %v2017 = vunpack.c.h.b16 %v1514
    %v2018 = vunpack.c.l.b16 %v1515
    %v2019 = vunpack.c.h.b16 %v1515
    %v2020 = vunpack.c.l.b16 %v1516
    %v2021 = vunpack.c.h.b16 %v1516
    %v2022 = vunpack.c.l.b16 %v1517
    %v2023 = vunpack.c.h.b16 %v1517
    %v2024 = vunpack.c.l.b16 %v1518
    %v2025 = vunpack.c.h.b16 %v1518
    %v2026 = vunpack.c.l.b16 %v1519
    %v2027 = vunpack.c.h.b16 %v1519
    %v2028 = vunpack.c.l.b16 %v1520
    %v2029 = vunpack.c.h.b16 %v1520
    %v2030 = vunpack.c.l.b16 %v1521
    %v2031 = vunpack.c.h.b16 %v1521
    %v2032 = vunpack.c.l.b16 %v1522
    %v2033 = vunpack.c.h.b16 %v1522
    %v2034 = vunpack.c.l.b16 %v1523
    %v2035 = vunpack.c.h.b16 %v1523
    %v2036 = vunpack.c.l.b16 %v1524
    %v2037 = vunpack.c.h.b16 %v1524
    %v2038 = vunpack.c.l.b16 %v1525
    %v2039 = vunpack.c.h.b16 %v1525
    %v2040 = vunpack.c.l.b16 %v1526
    %v2041 = vunpack.c.h.b16 %v1526
    %v2042 = vunpack.c.l.b16 %v1527
    %v2043 = vunpack.c.h.b16 %v1527
    %v2044 = vunpack.c.l.b16 %v1528
    %v2045 = vunpack.c.h.b16 %v1528
    %v2046 = vunpack.c.l.b16 %v1529
    %v2047 = vunpack.c.h.b16 %v1529
    %v2048 = vunpack.c.l.b16 %v1530
    %v2049 = vunpack.c.h.b16 %v1530
    %v2050 = vunpack.c.l.b16 %v1531
    %v2051 = vunpack.c.h.b16 %v1531
    %v2052 = vunpack.c.l.b16 %v1532
    %v2053 = vunpack.c.h.b16 %v1532
    %v2054 = vunpack.c.l.b16 %v1533
    %v2055 = vunpack.c.h.b16 %v1533
    %v2056 = vunpack.c.l.b16 %v1534
    %v2057 = vunpack.c.h.b16 %v1534
    %v2058 = vunpack.c.l.b16 %v1535
    %v2059 = vunpack.c.h.b16 %v1535
    %v2060 = vunpack.c.l.b16 %v1536
    %v2061 = vunpack.c.h.b16 %v1536
    %v2062 = vunpack.c.l.b16 %v1537
    %v2063 = vunpack.c.h.b16 %v1537
    %v2064 = vunpack.c.l.b16 %v1538
    %v2065 = vunpack.c.h.b16 %v1538
    %v2066 = vunpack.c.l.b16 %v1539
    %v2067 = vunpack.c.h.b16 %v1539
    %v2068 = vunpack.c.l.b16 %v1540
    %v2069 = vunpack.c.h.b16 %v1540
    %v2070 = vunpack.c.l.b16 %v1541
    %v2071 = vunpack.c.h.b16 %v1541
    %v2072 = vunpack.c.l.b16 %v1542
    %v2073 = vunpack.c.h.b16 %v1542
    %v2074 = vunpack.c.l.b16 %v1543
    %v2075 = vunpack.c.h.b16 %v1543
    %v2076 = vunpack.c.l.b16 %v1544
    %v2077 = vunpack.c.h.b16 %v1544
    %v2078 = vunpack.c.l.b16 %v1545
    %v2079 = vunpack.c.h.b16 %v1545
    %v2080 = vunpack.c.l.b16 %v1546
    %v2081 = vunpack.c.h.b16 %v1546
    %v2082 = vunpack.c.l.b16 %v1547
    %v2083 = vunpack.c.h.b16 %v1547
    %v2084 = vunpack.c.l.b16 %v1548
    %v2085 = vunpack.c.h.b16 %v1548
    %v2086 = vunpack.c.l.b16 %v1549
    %v2087 = vunpack.c.h.b16 %v1549
    %v2088 = vunpack.c.l.b16 %v1550
    %v2089 = vunpack.c.h.b16 %v1550
    %v2090 = vunpack.c.l.b16 %v1551
    %v2091 = vunpack.c.h.b16 %v1551
    %v2092 = vunpack.c.l.b16 %v1552
    %v2093 = vunpack.c.h.b16 %v1552
    %v2094 = vunpack.c.l.b16 %v1553
    %v2095 = vunpack.c.h.b16 %v1553
    %v2096 = vunpack.c.l.b16 %v1554
    %v2097 = vunpack.c.h.b16 %v1554
    %v2098 = vunpack.c.l.b16 %v1555
    %v2099 = vunpack.c.h.b16 %v1555
    %v2100 = vunpack.c.l.b16 %v1556
    %v2101 = vunpack.c.h.b16 %v1556
    %v2102 = vunpack.c.l.b16 %v1557
    %v2103 = vunpack.c.h.b16 %v1557
    %v2104 = vunpack.c.l.b16 %v1558
    %v2105 = vunpack.c.h.b16 %v1558
    %v2106 = vunpack.c.l.b16 %v1559
    %v2107 = vunpack.c.h.b16 %v1559
    %v2108 = vunpack.c.l.b16 %v1560
    %v2109 = vunpack.c.h.b16 %v1560
    %v2110 = vunpack.c.l.b16 %v1561
    %v2111 = vunpack.c.h.b16 %v1561
    %v2112 = vunpack.c.l.b16 %v1562
    %v2113 = vunpack.c.h.b16 %v1562
    %v2114 = vunpack.c.l.b16 %v1563
    %v2115 = vunpack.c.h.b16 %v1563
    %v2116 = vunpack.c.l.b16 %v1564
    %v2117 = vunpack.c.h.b16 %v1564
    %v2118 = vunpack.c.l.b16 %v1565
    %v2119 = vunpack.c.h.b16 %v1565
    %v2120 = vunpack.c.l.b16 %v1566
    %v2121 = vunpack.c.h.b16 %v1566
    %v2122 = vunpack.c.l.b16 %v1567
    %v2123 = vunpack.c.h.b16 %v1567
    %v2124 = vunpack.c.l.b16 %v1568
    %v2125 = vunpack.c.h.b16 %v1568
    %v2126 = vunpack.c.l.b16 %v1569
    %v2127 = vunpack.c.h.b16 %v1569
    %v2128 = vunpack.c.l.b16 %v1570
    %v2129 = vunpack.c.h.b16 %v1570
    %v2130 = vunpack.c.l.b16 %v1571
    %v2131 = vunpack.c.h.b16 %v1571
    %v2132 = vunpack.c.l.b16 %v1572
    %v2133 = vunpack.c.h.b16 %v1572
    %v2134 = vunpack.c.l.b16 %v1573
    %v2135 = vunpack.c.h.b16 %v1573
    %v2136 = vunpack.c.l.b16 %v1574
    %v2137 = vunpack.c.h.b16 %v1574
    %v2138 = vunpack.c.l.b16 %v1575
    %v2139 = vunpack.c.h.b16 %v1575
    %v2140 = vunpack.c.l.b16 %v1576
    %v2141 = vunpack.c.h.b16 %v1576
    %v2142 = vunpack.c.l.b16 %v1577
    %v2143 = vunpack.c.h.b16 %v1577
    %v2144 = vunpack.c.l.b16 %v1578
    %v2145 = vunpack.c.h.b16 %v1578
    %v2146 = vunpack.c.l.b16 %v1579
    %v2147 = vunpack.c.h.b16 %v1579
    %v2148 = vunpack.c.l.b16 %v1580
    %v2149 = vunpack.c.h.b16 %v1580
    %v2150 = vunpack.c.l.b16 %v1581
    %v2151 = vunpack.c.h.b16 %v1581
    %v2152 = vunpack.c.l.b16 %v1582
    %v2153 = vunpack.c.h.b16 %v1582
    %v2154 = vunpack.c.l.b16 %v1583
    %v2155 = vunpack.c.h.b16 %v1583
    %v2156 = vunpack.c.l.b16 %v1584
    %v2157 = vunpack.c.h.b16 %v1584
    %v2158 = vunpack.c.l.b16 %v1585
    %v2159 = vunpack.c.h.b16 %v1585
    %v2160 = vunpack.c.l.b16 %v1586
    %v2161 = vunpack.c.h.b16 %v1586
    %v2162 = vunpack.c.l.b16 %v1587
    %v2163 = vunpack.c.h.b16 %v1587
    %v2164 = vpack.c.b16 %v1786, %v1780
    %v2165 = vpack.c.b16 %v1787, %v1781
    %v2166 = vpack.c.b16 %v1788, %v1782
    %v2167 = vpack.c.b16 %v1789, %v1783
    %v2168 = vpack.c.b16 %v1790, %v1784
    %v2169 = vpack.c.b16 %v1791, %v1785
    %v2170 = vpack.c.b16 %v1798, %v1792
    %v2171 = vpack.c.b16 %v1799, %v1793
    %v2172 = vpack.c.b16 %v1800, %v1794
    %v2173 = vpack.c.b16 %v1801, %v1795
    %v2174 = vpack.c.b16 %v1802, %v1796
    %v2175 = vpack.c.b16 %v1803, %v1797
    %v2176 = vpack.c.b16 %v1810, %v1804
    %v2177 = vpack.c.b16 %v1811, %v1805
    %v2178 = vpack.c.b16 %v1812, %v1806
    %v2179 = vpack.c.b16 %v1813, %v1807
    %v2180 = vpack.c.b16 %v1814, %v1808
    %v2181 = vpack.c.b16 %v1815, %v1809
    %v2182 = vpack.c.b16 %v1822, %v1816
    %v2183 = vpack.c.b16 %v1823, %v1817
    %v2184 = vpack.c.b16 %v1824, %v1818
    %v2185 = vpack.c.b16 %v1825, %v1819
    %v2186 = vpack.c.b16 %v1826, %v1820
    %v2187 = vpack.c.b16 %v1827, %v1821
    %v2188 = vpack.c.b16 %v1834, %v1828
    %v2189 = vpack.c.b16 %v1835, %v1829
    %v2190 = vpack.c.b16 %v1836, %v1830
    %v2191 = vpack.c.b16 %v1837, %v1831
    %v2192 = vpack.c.b16 %v1838, %v1832
    %v2193 = vpack.c.b16 %v1839, %v1833
    %v2194 = vpack.c.b16 %v1846, %v1840
    %v2195 = vpack.c.b16 %v1847, %v1841
    %v2196 = vpack.c.b16 %v1848, %v1842
    %v2197 = vpack.c.b16 %v1849, %v1843
    %v2198 = vpack.c.b16 %v1850, %v1844
    %v2199 = vpack.c.b16 %v1851, %v1845
    %v2200 = vpack.c.b16 %v1858, %v1852
    %v2201 = vpack.c.b16 %v1859, %v1853
    %v2202 = vpack.c.b16 %v1860, %v1854
    %v2203 = vpack.c.b16 %v1861, %v1855
    %v2204 = vpack.c.b16 %v1862, %v1856
    %v2205 = vpack.c.b16 %v1863, %v1857
    %v2206 = vpack.c.b16 %v1870, %v1864
    %v2207 = vpack.c.b16 %v1871, %v1865
    %v2208 = vpack.c.b16 %v1872, %v1866
    %v2209 = vpack.c.b16 %v1873, %v1867
    %v2210 = vpack.c.b16 %v1874, %v1868
    %v2211 = vpack.c.b16 %v1875, %v1869
    %v2212 = vpack.c.b16 %v1882, %v1876
    %v2213 = vpack.c.b16 %v1883, %v1877
    %v2214 = vpack.c.b16 %v1884, %v1878
    %v2215 = vpack.c.b16 %v1885, %v1879
    %v2216 = vpack.c.b16 %v1886, %v1880
    %v2217 = vpack.c.b16 %v1887, %v1881
    %v2218 = vpack.c.b16 %v1894, %v1888
    %v2219 = vpack.c.b16 %v1895, %v1889
    %v2220 = vpack.c.b16 %v1896, %v1890
    %v2221 = vpack.c.b16 %v1897, %v1891
    %v2222 = vpack.c.b16 %v1898, %v1892
    %v2223 = vpack.c.b16 %v1899, %v1893
    %v2224 = vpack.c.b16 %v1906, %v1900
    %v2225 = vpack.c.b16 %v1907, %v1901
    %v2226 = vpack.c.b16 %v1908, %v1902
    %v2227 = vpack.c.b16 %v1909, %v1903
    %v2228 = vpack.c.b16 %v1910, %v1904
    %v2229 = vpack.c.b16 %v1911, %v1905
    %v2230 = vpack.c.b16 %v1918, %v1912
    %v2231 = vpack.c.b16 %v1919, %v1913
    %v2232 = vpack.c.b16 %v1920, %v1914
    %v2233 = vpack.c.b16 %v1921, %v1915
    %v2234 = vpack.c.b16 %v1922, %v1916
    %v2235 = vpack.c.b16 %v1923, %v1917
    %v2236 = vpack.c.b16 %v1930, %v1924
    %v2237 = vpack.c.b16 %v1931, %v1925
    %v2238 = vpack.c.b16 %v1932, %v1926
    %v2239 = vpack.c.b16 %v1933, %v1927
    %v2240 = vpack.c.b16 %v1934, %v1928
    %v2241 = vpack.c.b16 %v1935, %v1929
    %v2242 = vpack.c.b16 %v1942, %v1936
    %v2243 = vpack.c.b16 %v1943, %v1937
    %v2244 = vpack.c.b16 %v1944, %v1938
    %v2245 = vpack.c.b16 %v1945, %v1939
    %v2246 = vpack.c.b16 %v1946, %v1940
    %v2247 = vpack.c.b16 %v1947, %v1941
    %v2248 = vpack.c.b16 %v1954, %v1948
    %v2249 = vpack.c.b16 %v1955, %v1949
    %v2250 = vpack.c.b16 %v1956, %v1950
    %v2251 = vpack.c.b16 %v1957, %v1951
    %v2252 = vpack.c.b16 %v1958, %v1952
    %v2253 = vpack.c.b16 %v1959, %v1953
    %v2254 = vpack.c.b16 %v1966, %v1960
    %v2255 = vpack.c.b16 %v1967, %v1961
    %v2256 = vpack.c.b16 %v1968, %v1962
    %v2257 = vpack.c.b16 %v1969, %v1963
    %v2258 = vpack.c.b16 %v1970, %v1964
    %v2259 = vpack.c.b16 %v1971, %v1965
    %v2260 = vpack.c.b16 %v1978, %v1972
    %v2261 = vpack.c.b16 %v1979, %v1973
    %v2262 = vpack.c.b16 %v1980, %v1974
    %v2263 = vpack.c.b16 %v1981, %v1975
    %v2264 = vpack.c.b16 %v1982, %v1976
    %v2265 = vpack.c.b16 %v1983, %v1977
    %v2266 = vpack.c.b16 %v1990, %v1984
    %v2267 = vpack.c.b16 %v1991, %v1985
    %v2268 = vpack.c.b16 %v1992, %v1986
    %v2269 = vpack.c.b16 %v1993, %v1987
    %v2270 = vpack.c.b16 %v1994, %v1988
    %v2271 = vpack.c.b16 %v1995, %v1989
    %v2272 = vpack.c.b16 %v2002, %v1996
    %v2273 = vpack.c.b16 %v2003, %v1997
    %v2274 = vpack.c.b16 %v2004, %v1998
    %v2275 = vpack.c.b16 %v2005, %v1999
    %v2276 = vpack.c.b16 %v2006, %v2000
    %v2277 = vpack.c.b16 %v2007, %v2001
    %v2278 = vpack.c.b16 %v2014, %v2008
    %v2279 = vpack.c.b16 %v2015, %v2009
    %v2280 = vpack.c.b16 %v2016, %v2010
    %v2281 = vpack.c.b16 %v2017, %v2011
    %v2282 = vpack.c.b16 %v2018, %v2012
    %v2283 = vpack.c.b16 %v2019, %v2013
    %v2284 = vpack.c.b16 %v2026, %v2020
    %v2285 = vpack.c.b16 %v2027, %v2021
    %v2286 = vpack.c.b16 %v2028, %v2022
    %v2287 = vpack.c.b16 %v2029, %v2023
    %v2288 = vpack.c.b16 %v2030, %v2024
    %v2289 = vpack.c.b16 %v2031, %v2025
    %v2290 = vpack.c.b16 %v2038, %v2032
    %v2291 = vpack.c.b16 %v2039, %v2033
    %v2292 = vpack.c.b16 %v2040, %v2034
    %v2293 = vpack.c.b16 %v2041, %v2035
    %v2294 = vpack.c.b16 %v2042, %v2036
    %v2295 = vpack.c.b16 %v2043, %v2037
    %v2296 = vpack.c.b16 %v2050, %v2044
    %v2297 = vpack.c.b16 %v2051, %v2045
    %v2298 = vpack.c.b16 %v2052, %v2046
    %v2299 = vpack.c.b16 %v2053, %v2047
    %v2300 = vpack.c.b16 %v2054, %v2048
    %v2301 = vpack.c.b16 %v2055, %v2049
    %v2302 = vpack.c.b16 %v2062, %v2056
    %v2303 = vpack.c.b16 %v2063, %v2057
    %v2304 = vpack.c.b16 %v2064, %v2058
    %v2305 = vpack.c.b16 %v2065, %v2059
    %v2306 = vpack.c.b16 %v2066, %v2060
    %v2307 = vpack.c.b16 %v2067, %v2061
    %v2308 = vpack.c.b16 %v2074, %v2068
    %v2309 = vpack.c.b16 %v2075, %v2069
    %v2310 = vpack.c.b16 %v2076, %v2070
    %v2311 = vpack.c.b16 %v2077, %v2071
    %v2312 = vpack.c.b16 %v2078, %v2072
    %v2313 = vpack.c.b16 %v2079, %v2073
    %v2314 = vpack.c.b16 %v2086, %v2080
    %v2315 = vpack.c.b16 %v2087, %v2081
    %v2316 = vpack.c.b16 %v2088, %v2082
    %v2317 = vpack.c.b16 %v2089, %v2083
    %v2318 = vpack.c.b16 %v2090, %v2084
    %v2319 = vpack.c.b16 %v2091, %v2085
    %v2320 = vpack.c.b16 %v2098, %v2092
    %v2321 = vpack.c.b16 %v2099, %v2093
    %v2322 = vpack.c.b16 %v2100, %v2094
    %v2323 = vpack.c.b16 %v2101, %v2095
    %v2324 = vpack.c.b16 %v2102, %v2096
    %v2325 = vpack.c.b16 %v2103, %v2097
    %v2326 = vpack.c.b16 %v2110, %v2104
    %v2327 = vpack.c.b16 %v2111, %v2105
    %v2328 = vpack.c.b16 %v2112, %v2106
    %v2329 = vpack.c.b16 %v2113, %v2107
    %v2330 = vpack.c.b16 %v2114, %v2108
    %v2331 = vpack.c.b16 %v2115, %v2109
    %v2332 = vpack.c.b16 %v2122, %v2116
    %v2333 = vpack.c.b16 %v2123, %v2117
    %v2334 = vpack.c.b16 %v2124, %v2118
    %v2335 = vpack.c.b16 %v2125, %v2119
    %v2336 = vpack.c.b16 %v2126, %v2120
    %v2337 = vpack.c.b16 %v2127, %v2121
    %v2338 = vpack.c.b16 %v2134, %v2128
    %v2339 = vpack.c.b16 %v2135, %v2129
    %v2340 = vpack.c.b16 %v2136, %v2130
    %v2341 = vpack.c.b16 %v2137, %v2131
    %v2342 = vpack.c.b16 %v2138, %v2132
    %v2343 = vpack.c.b16 %v2139, %v2133
    %v2344 = vpack.c.b16 %v2146, %v2140
    %v2345 = vpack.c.b16 %v2147, %v2141
    %v2346 = vpack.c.b16 %v2148, %v2142
    %v2347 = vpack.c.b16 %v2149, %v2143
    %v2348 = vpack.c.b16 %v2150, %v2144
    %v2349 = vpack.c.b16 %v2151, %v2145
    %v2350 = vpack.c.b16 %v2158, %v2152
    %v2351 = vpack.c.b16 %v2159, %v2153
    %v2352 = vpack.c.b16 %v2160, %v2154
    %v2353 = vpack.c.b16 %v2161, %v2155
    %v2354 = vpack.c.b16 %v2162, %v2156
    %v2355 = vpack.c.b16 %v2163, %v2157
    %2548 = vmatprep.subr.bf16.mxu0 %v2165
    %2549 = vmatpush1.bf16.msra.mxu0 %v2164
    %2550 = vmatprep.subr.bf16.mxu0 %v2171
    %2551 = vmatpush1.bf16.msra.mxu0 %v2170
    %2552 = vmatprep.subr.bf16.mxu0 %v2177
    %2553 = vmatpush1.bf16.msra.mxu0 %v2176
    %2554 = vmatprep.subr.bf16.mxu0 %v2183
    %2555 = vmatpush1.bf16.msra.mxu0 %v2182
    %2556 = vmatprep.subr.bf16.mxu0 %v2189
    %2557 = vmatpush1.bf16.msra.mxu0 %v2188
    %2558 = vmatprep.subr.bf16.mxu0 %v2195
    %2559 = vmatpush1.bf16.msra.mxu0 %v2194
    %2560 = vmatprep.subr.bf16.mxu0 %v2201
    %2561 = vmatpush1.bf16.msra.mxu0 %v2200
    %2562 = vmatprep.subr.bf16.mxu0 %v2207
    %2563 = vmatpush1.bf16.msra.mxu0 %v2206
    %2564 = vmatprep.subr.bf16.mxu0 %v2213
    %2565 = vmatpush1.bf16.msra.mxu0 %v2212
    %2566 = vmatprep.subr.bf16.mxu0 %v2219
    %2567 = vmatpush1.bf16.msra.mxu0 %v2218
    %2568 = vmatprep.subr.bf16.mxu0 %v2225
    %2569 = vmatpush1.bf16.msra.mxu0 %v2224
    %2570 = vmatprep.subr.bf16.mxu0 %v2231
    %2571 = vmatpush1.bf16.msra.mxu0 %v2230
    %2572 = vmatprep.subr.bf16.mxu0 %v2237
    %2573 = vmatpush1.bf16.msra.mxu0 %v2236
    %2574 = vmatprep.subr.bf16.mxu0 %v2243
    %2575 = vmatpush1.bf16.msra.mxu0 %v2242
    %2576 = vmatprep.subr.bf16.mxu0 %v2249
    %2577 = vmatpush1.bf16.msra.mxu0 %v2248
    %2578 = vmatprep.subr.bf16.mxu0 %v2255
    %2579 = vmatpush1.bf16.msra.mxu0 %v2254
    %2580 = vmatprep.mubr.bf16.mxu0 %v1393
    %2581 = vmatmul.mubr.bf16.gmra.mrb[0].mxu0 %v1392
    %v2582 = vpop.f32.mrb[0].mxu0
    %v2583 = vadd.f32 0.0, %v2582
    %v2584 = vpop.f32.mrb[0].mxu0
    %v2585 = vadd.f32 0.0, %v2584
    %v2586 = vpop.f32.mrb[0].mxu0
    %v2587 = vpop.f32.mrb[0].mxu0
    %2588 = vdwg.mxu0
    %2589 = vmatprep.subr.bf16.mxu0 %v2261
    %2590 = vmatpush1.bf16.msra.mxu0 %v2260
    %2591 = vmatprep.subr.bf16.mxu0 %v2267
    %2592 = vmatpush1.bf16.msra.mxu0 %v2266
    %2593 = vmatprep.subr.bf16.mxu0 %v2273
    %2594 = vmatpush1.bf16.msra.mxu0 %v2272
    %2595 = vmatprep.subr.bf16.mxu0 %v2279
    %2596 = vmatpush1.bf16.msra.mxu0 %v2278
    %2597 = vmatprep.subr.bf16.mxu0 %v2285
    %2598 = vmatpush1.bf16.msra.mxu0 %v2284
    %2599 = vmatprep.subr.bf16.mxu0 %v2291
    %2600 = vmatpush1.bf16.msra.mxu0 %v2290
    %2601 = vmatprep.subr.bf16.mxu0 %v2297
    %2602 = vmatpush1.bf16.msra.mxu0 %v2296
    %2603 = vmatprep.subr.bf16.mxu0 %v2303
    %2604 = vmatpush1.bf16.msra.mxu0 %v2302
    %2605 = vmatprep.subr.bf16.mxu0 %v2309
    %2606 = vmatpush1.bf16.msra.mxu0 %v2308
    %2607 = vmatprep.subr.bf16.mxu0 %v2315
    %2608 = vmatpush1.bf16.msra.mxu0 %v2314
    %2609 = vmatprep.subr.bf16.mxu0 %v2321
    %2610 = vmatpush1.bf16.msra.mxu0 %v2320
    %2611 = vmatprep.subr.bf16.mxu0 %v2327
    %2612 = vmatpush1.bf16.msra.mxu0 %v2326
    %2613 = vmatprep.subr.bf16.mxu0 %v2333
    %2614 = vmatpush1.bf16.msra.mxu0 %v2332
    %2615 = vmatprep.subr.bf16.mxu0 %v2339
    %2616 = vmatpush1.bf16.msra.mxu0 %v2338
    %2617 = vmatprep.subr.bf16.mxu0 %v2345
    %2618 = vmatpush1.bf16.msra.mxu0 %v2344
    %2619 = vmatprep.subr.bf16.mxu0 %v2351
    %2620 = vmatpush1.bf16.msra.mxu0 %v2350
    %2621 = vmatprep.mubr.bf16.mxu0 %v1395
    %2622 = vmatmul.mubr.bf16.gmra.mrb[0].mxu0 %v1394
    %v2623 = vpop.f32.mrb[0].mxu0
    %v2624 = vadd.f32 %v2583, %v2623
    %v2625 = vpop.f32.mrb[0].mxu0
    %v2626 = vadd.f32 %v2585, %v2625
    %v2627 = vpop.f32.mrb[0].mxu0
    %v2628 = vpop.f32.mrb[0].mxu0
    %2629 = vdwg.mxu0
    %2630 = vmatprep.subr.bf16.mxu0 %v2167
    %2631 = vmatpush1.bf16.msra.mxu0 %v2166
    %2632 = vmatprep.subr.bf16.mxu0 %v2173
    %2633 = vmatpush1.bf16.msra.mxu0 %v2172
    %2634 = vmatprep.subr.bf16.mxu0 %v2179
    %2635 = vmatpush1.bf16.msra.mxu0 %v2178
    %2636 = vmatprep.subr.bf16.mxu0 %v2185
    %2637 = vmatpush1.bf16.msra.mxu0 %v2184
    %2638 = vmatprep.subr.bf16.mxu0 %v2191
    %2639 = vmatpush1.bf16.msra.mxu0 %v2190
    %2640 = vmatprep.subr.bf16.mxu0 %v2197
    %2641 = vmatpush1.bf16.msra.mxu0 %v2196
    %2642 = vmatprep.subr.bf16.mxu0 %v2203
    %2643 = vmatpush1.bf16.msra.mxu0 %v2202
    %2644 = vmatprep.subr.bf16.mxu0 %v2209
    %2645 = vmatpush1.bf16.msra.mxu0 %v2208
    %2646 = vmatprep.subr.bf16.mxu0 %v2215
    %2647 = vmatpush1.bf16.msra.mxu0 %v2214
    %2648 = vmatprep.subr.bf16.mxu0 %v2221
    %2649 = vmatpush1.bf16.msra.mxu0 %v2220
    %2650 = vmatprep.subr.bf16.mxu0 %v2227
    %2651 = vmatpush1.bf16.msra.mxu0 %v2226
    %2652 = vmatprep.subr.bf16.mxu0 %v2233
    %2653 = vmatpush1.bf16.msra.mxu0 %v2232
    %2654 = vmatprep.subr.bf16.mxu0 %v2239
    %2655 = vmatpush1.bf16.msra.mxu0 %v2238
    %2656 = vmatprep.subr.bf16.mxu0 %v2245
    %2657 = vmatpush1.bf16.msra.mxu0 %v2244
    %2658 = vmatprep.subr.bf16.mxu0 %v2251
    %2659 = vmatpush1.bf16.msra.mxu0 %v2250
    %2660 = vmatprep.subr.bf16.mxu0 %v2257
    %2661 = vmatpush1.bf16.msra.mxu0 %v2256
    %2662 = vmatprep.mubr.bf16.mxu0 %v1393
    %2663 = vmatmul.mubr.bf16.gmra.mrb[0].mxu0 %v1392
    %v2664 = vpop.f32.mrb[0].mxu0
    %v2665 = vadd.f32 0.0, %v2664
    %v2666 = vpop.f32.mrb[0].mxu0
    %v2667 = vadd.f32 0.0, %v2666
    %v2668 = vpop.f32.mrb[0].mxu0
    %v2669 = vpop.f32.mrb[0].mxu0
    %2670 = vdwg.mxu0
    %2671 = vmatprep.subr.bf16.mxu0 %v2263
    %2672 = vmatpush1.bf16.msra.mxu0 %v2262
    %2673 = vmatprep.subr.bf16.mxu0 %v2269
    %2674 = vmatpush1.bf16.msra.mxu0 %v2268
    %2675 = vmatprep.subr.bf16.mxu0 %v2275
    %2676 = vmatpush1.bf16.msra.mxu0 %v2274
    %2677 = vmatprep.subr.bf16.mxu0 %v2281
    %2678 = vmatpush1.bf16.msra.mxu0 %v2280
    %2679 = vmatprep.subr.bf16.mxu0 %v2287
    %2680 = vmatpush1.bf16.msra.mxu0 %v2286
    %2681 = vmatprep.subr.bf16.mxu0 %v2293
    %2682 = vmatpush1.bf16.msra.mxu0 %v2292
    %2683 = vmatprep.subr.bf16.mxu0 %v2299
    %2684 = vmatpush1.bf16.msra.mxu0 %v2298
    %2685 = vmatprep.subr.bf16.mxu0 %v2305
    %2686 = vmatpush1.bf16.msra.mxu0 %v2304
    %2687 = vmatprep.subr.bf16.mxu0 %v2311
    %2688 = vmatpush1.bf16.msra.mxu0 %v2310
    %2689 = vmatprep.subr.bf16.mxu0 %v2317
    %2690 = vmatpush1.bf16.msra.mxu0 %v2316
    %2691 = vmatprep.subr.bf16.mxu0 %v2323
    %2692 = vmatpush1.bf16.msra.mxu0 %v2322
    %2693 = vmatprep.subr.bf16.mxu0 %v2329
    %2694 = vmatpush1.bf16.msra.mxu0 %v2328
    %2695 = vmatprep.subr.bf16.mxu0 %v2335
    %2696 = vmatpush1.bf16.msra.mxu0 %v2334
    %2697 = vmatprep.subr.bf16.mxu0 %v2341
    %2698 = vmatpush1.bf16.msra.mxu0 %v2340
    %2699 = vmatprep.subr.bf16.mxu0 %v2347
    %2700 = vmatpush1.bf16.msra.mxu0 %v2346
    %2701 = vmatprep.subr.bf16.mxu0 %v2353
    %2702 = vmatpush1.bf16.msra.mxu0 %v2352
    %2703 = vmatprep.mubr.bf16.mxu0 %v1395
    %2704 = vmatmul.mubr.bf16.gmra.mrb[0].mxu0 %v1394
    %v2705 = vpop.f32.mrb[0].mxu0
    %v2706 = vadd.f32 %v2665, %v2705
    %v2707 = vpop.f32.mrb[0].mxu0
    %v2708 = vadd.f32 %v2667, %v2707
    %v2709 = vpop.f32.mrb[0].mxu0
    %v2710 = vpop.f32.mrb[0].mxu0
    %2711 = vdwg.mxu0
    %2712 = vmatprep.subr.bf16.mxu0 %v2169
    %2713 = vmatpush1.bf16.msra.mxu0 %v2168
    %2714 = vmatprep.subr.bf16.mxu0 %v2175
    %2715 = vmatpush1.bf16.msra.mxu0 %v2174
    %2716 = vmatprep.subr.bf16.mxu0 %v2181
    %2717 = vmatpush1.bf16.msra.mxu0 %v2180
    %2718 = vmatprep.subr.bf16.mxu0 %v2187
    %2719 = vmatpush1.bf16.msra.mxu0 %v2186
    %2720 = vmatprep.subr.bf16.mxu0 %v2193
    %2721 = vmatpush1.bf16.msra.mxu0 %v2192
    %2722 = vmatprep.subr.bf16.mxu0 %v2199
    %2723 = vmatpush1.bf16.msra.mxu0 %v2198
    %2724 = vmatprep.subr.bf16.mxu0 %v2205
    %2725 = vmatpush1.bf16.msra.mxu0 %v2204
    %2726 = vmatprep.subr.bf16.mxu0 %v2211
    %2727 = vmatpush1.bf16.msra.mxu0 %v2210
    %2728 = vmatprep.subr.bf16.mxu0 %v2217
    %2729 = vmatpush1.bf16.msra.mxu0 %v2216
    %2730 = vmatprep.subr.bf16.mxu0 %v2223
    %2731 = vmatpush1.bf16.msra.mxu0 %v2222
    %2732 = vmatprep.subr.bf16.mxu0 %v2229
    %2733 = vmatpush1.bf16.msra.mxu0 %v2228
    %2734 = vmatprep.subr.bf16.mxu0 %v2235
    %2735 = vmatpush1.bf16.msra.mxu0 %v2234
    %2736 = vmatprep.subr.bf16.mxu0 %v2241
    %2737 = vmatpush1.bf16.msra.mxu0 %v2240
    %2738 = vmatprep.subr.bf16.mxu0 %v2247
    %2739 = vmatpush1.bf16.msra.mxu0 %v2246
    %2740 = vmatprep.subr.bf16.mxu0 %v2253
    %2741 = vmatpush1.bf16.msra.mxu0 %v2252
    %2742 = vmatprep.subr.bf16.mxu0 %v2259
    %2743 = vmatpush1.bf16.msra.mxu0 %v2258
    %2744 = vmatprep.mubr.bf16.mxu0 %v1393
    %2745 = vmatmul.mubr.bf16.gmra.mrb[0].mxu0 %v1392
    %v2746 = vpop.f32.mrb[0].mxu0
    %v2747 = vadd.f32 0.0, %v2746
    %v2748 = vpop.f32.mrb[0].mxu0
    %v2749 = vadd.f32 0.0, %v2748
    %v2750 = vpop.f32.mrb[0].mxu0
    %v2751 = vpop.f32.mrb[0].mxu0
    %2752 = vdwg.mxu0
    %2753 = vmatprep.subr.bf16.mxu0 %v2265
    %2754 = vmatpush1.bf16.msra.mxu0 %v2264
    %2755 = vmatprep.subr.bf16.mxu0 %v2271
    %2756 = vmatpush1.bf16.msra.mxu0 %v2270
    %2757 = vmatprep.subr.bf16.mxu0 %v2277
    %2758 = vmatpush1.bf16.msra.mxu0 %v2276
    %2759 = vmatprep.subr.bf16.mxu0 %v2283
    %2760 = vmatpush1.bf16.msra.mxu0 %v2282
    %2761 = vmatprep.subr.bf16.mxu0 %v2289
    %2762 = vmatpush1.bf16.msra.mxu0 %v2288
    %2763 = vmatprep.subr.bf16.mxu0 %v2295
    %2764 = vmatpush1.bf16.msra.mxu0 %v2294
    %2765 = vmatprep.subr.bf16.mxu0 %v2301
    %2766 = vmatpush1.bf16.msra.mxu0 %v2300
    %2767 = vmatprep.subr.bf16.mxu0 %v2307
    %2768 = vmatpush1.bf16.msra.mxu0 %v2306
    %2769 = vmatprep.subr.bf16.mxu0 %v2313
    %2770 = vmatpush1.bf16.msra.mxu0 %v2312
    %2771 = vmatprep.subr.bf16.mxu0 %v2319
    %2772 = vmatpush1.bf16.msra.mxu0 %v2318
    %2773 = vmatprep.subr.bf16.mxu0 %v2325
    %2774 = vmatpush1.bf16.msra.mxu0 %v2324
    %2775 = vmatprep.subr.bf16.mxu0 %v2331
    %2776 = vmatpush1.bf16.msra.mxu0 %v2330
    %2777 = vmatprep.subr.bf16.mxu0 %v2337
    %2778 = vmatpush1.bf16.msra.mxu0 %v2336
    %2779 = vmatprep.subr.bf16.mxu0 %v2343
    %2780 = vmatpush1.bf16.msra.mxu0 %v2342
    %2781 = vmatprep.subr.bf16.mxu0 %v2349
    %2782 = vmatpush1.bf16.msra.mxu0 %v2348
    %2783 = vmatprep.subr.bf16.mxu0 %v2355
    %2784 = vmatpush1.bf16.msra.mxu0 %v2354
    %2785 = vmatprep.mubr.bf16.mxu0 %v1395
    %2786 = vmatmul.mubr.bf16.gmra.mrb[0].mxu0 %v1394
    %v2787 = vpop.f32.mrb[0].mxu0
    %v2788 = vadd.f32 %v2747, %v2787
    %v2789 = vpop.f32.mrb[0].mxu0
    %v2790 = vadd.f32 %v2749, %v2789
    %v2791 = vpop.f32.mrb[0].mxu0
    %v2792 = vpop.f32.mrb[0].mxu0
    %2793 = vdwg.mxu0
    %v2794 = vmax.f32 %v2624, 0.0
    %v2795 = vmax.f32 %v2626, 0.0
    %v2796 = vmax.f32 %v2706, 0.0
    %v2797 = vmax.f32 %v2708, 0.0
    %v2798 = vmax.f32 %v2788, 0.0
    %v2799 = vmax.f32 %v2790, 0.0
    %v2800 = vpack.c.bf16 %v2794, %v2794
    %v2801 = vpack.c.bf16 %v2795, %v2795
    %v2802 = vpack.c.bf16 %v2796, %v2796
    %v2803 = vpack.c.bf16 %v2797, %v2797
    %v2804 = vpack.c.bf16 %v2798, %v2798
    %v2805 = vpack.c.bf16 %v2799, %v2799
    %v2806 = vld [vmem:[#allocation8] sm:$0xf]
    %v2807 = vld [vmem:[#allocation8 + $0x4] sm:$0xf]
    %v2808 = vld [vmem:[#allocation8 + $0x8] sm:$0xf]
    %v2809 = vld [vmem:[#allocation8 + $0xc] sm:$0xf]
    %v2810 = vld [vmem:[#allocation8 + $0x10] sm:$0xf]
    %v2811 = vld [vmem:[#allocation8 + $0x14] sm:$0xf]
    %v2812 = vld [vmem:[#allocation8 + $0x18] sm:$0xf]
    %v2813 = vld [vmem:[#allocation8 + $0x1c] sm:$0xf]
    %v2814 = vld [vmem:[#allocation8 + $0x20] sm:$0xf]
    %v2815 = vld [vmem:[#allocation8 + $0x24] sm:$0xf]
    %v2816 = vld [vmem:[#allocation8 + $0x28] sm:$0xf]
    %v2817 = vld [vmem:[#allocation8 + $0x2c] sm:$0xf]
    %v2818 = vld [vmem:[#allocation8 + $0x30] sm:$0xf]
    %v2819 = vld [vmem:[#allocation8 + $0x34] sm:$0xf]
    %v2820 = vld [vmem:[#allocation8 + $0x38] sm:$0xf]
    %v2821 = vld [vmem:[#allocation8 + $0x3c] sm:$0xf]
    %v2822 = vld [vmem:[#allocation8 + $0x40] sm:$0xf]
    %v2823 = vld [vmem:[#allocation8 + $0x44] sm:$0xf]
    %v2824 = vld [vmem:[#allocation8 + $0x48] sm:$0xf]
    %v2825 = vld [vmem:[#allocation8 + $0x4c] sm:$0xf]
    %v2826 = vld [vmem:[#allocation8 + $0x50] sm:$0xf]
    %v2827 = vld [vmem:[#allocation8 + $0x54] sm:$0xf]
    %v2828 = vld [vmem:[#allocation8 + $0x58] sm:$0xf]
    %v2829 = vld [vmem:[#allocation8 + $0x5c] sm:$0xf]
    %v2830 = vld [vmem:[#allocation8 + $0x60] sm:$0xf]
    %v2831 = vld [vmem:[#allocation8 + $0x64] sm:$0xf]
    %v2832 = vld [vmem:[#allocation8 + $0x68] sm:$0xf]
    %v2833 = vld [vmem:[#allocation8 + $0x6c] sm:$0xf]
    %v2834 = vld [vmem:[#allocation8 + $0x70] sm:$0xf]
    %v2835 = vld [vmem:[#allocation8 + $0x74] sm:$0xf]
    %v2836 = vld [vmem:[#allocation8 + $0x78] sm:$0xf]
    %v2837 = vld [vmem:[#allocation8 + $0x7c] sm:$0xf]
    %v2838 = vld [vmem:[#allocation8 + $0x80] sm:$0xf]
    %v2839 = vld [vmem:[#allocation8 + $0x84] sm:$0xf]
    %v2840 = vld [vmem:[#allocation8 + $0x88] sm:$0xf]
    %v2841 = vld [vmem:[#allocation8 + $0x8c] sm:$0xf]
    %v2842 = vld [vmem:[#allocation8 + $0x90] sm:$0xf]
    %v2843 = vld [vmem:[#allocation8 + $0x94] sm:$0xf]
    %v2844 = vld [vmem:[#allocation8 + $0x98] sm:$0xf]
    %v2845 = vld [vmem:[#allocation8 + $0x9c] sm:$0xf]
    %v2846 = vld [vmem:[#allocation8 + $0xa0] sm:$0xf]
    %v2847 = vld [vmem:[#allocation8 + $0xa4] sm:$0xf]
    %v2848 = vld [vmem:[#allocation8 + $0xa8] sm:$0xf]
    %v2849 = vld [vmem:[#allocation8 + $0xac] sm:$0xf]
    %v2850 = vld [vmem:[#allocation8 + $0xb0] sm:$0xf]
    %v2851 = vld [vmem:[#allocation8 + $0xb4] sm:$0xf]
    %v2852 = vld [vmem:[#allocation8 + $0xb8] sm:$0xf]
    %v2853 = vld [vmem:[#allocation8 + $0xbc] sm:$0xf]
    %v2854 = vld [vmem:[#allocation8 + $0xc0] sm:$0xf]
    %v2855 = vld [vmem:[#allocation8 + $0xc4] sm:$0xf]
    %v2856 = vld [vmem:[#allocation8 + $0xc8] sm:$0xf]
    %v2857 = vld [vmem:[#allocation8 + $0xcc] sm:$0xf]
    %v2858 = vld [vmem:[#allocation8 + $0xd0] sm:$0xf]
    %v2859 = vld [vmem:[#allocation8 + $0xd4] sm:$0xf]
    %v2860 = vld [vmem:[#allocation8 + $0xd8] sm:$0xf]
    %v2861 = vld [vmem:[#allocation8 + $0xdc] sm:$0xf]
    %v2862 = vld [vmem:[#allocation8 + $0xe0] sm:$0xf]
    %v2863 = vld [vmem:[#allocation8 + $0xe4] sm:$0xf]
    %v2864 = vld [vmem:[#allocation8 + $0xe8] sm:$0xf]
    %v2865 = vld [vmem:[#allocation8 + $0xec] sm:$0xf]
    %v2866 = vld [vmem:[#allocation8 + $0xf0] sm:$0xf]
    %v2867 = vld [vmem:[#allocation8 + $0xf4] sm:$0xf]
    %v2868 = vld [vmem:[#allocation8 + $0xf8] sm:$0xf]
    %v2869 = vld [vmem:[#allocation8 + $0xfc] sm:$0xf]
    %v2870 = vld [vmem:[#allocation8 + $0x100] sm:$0xf]
    %v2871 = vld [vmem:[#allocation8 + $0x104] sm:$0xf]
    %v2872 = vld [vmem:[#allocation8 + $0x108] sm:$0xf]
    %v2873 = vld [vmem:[#allocation8 + $0x10c] sm:$0xf]
    %v2874 = vld [vmem:[#allocation8 + $0x110] sm:$0xf]
    %v2875 = vld [vmem:[#allocation8 + $0x114] sm:$0xf]
    %v2876 = vld [vmem:[#allocation8 + $0x118] sm:$0xf]
    %v2877 = vld [vmem:[#allocation8 + $0x11c] sm:$0xf]
    %v2878 = vld [vmem:[#allocation8 + $0x120] sm:$0xf]
    %v2879 = vld [vmem:[#allocation8 + $0x124] sm:$0xf]
    %v2880 = vld [vmem:[#allocation8 + $0x128] sm:$0xf]
    %v2881 = vld [vmem:[#allocation8 + $0x12c] sm:$0xf]
    %v2882 = vld [vmem:[#allocation8 + $0x130] sm:$0xf]
    %v2883 = vld [vmem:[#allocation8 + $0x134] sm:$0xf]
    %v2884 = vld [vmem:[#allocation8 + $0x138] sm:$0xf]
    %v2885 = vld [vmem:[#allocation8 + $0x13c] sm:$0xf]
    %v2886 = vld [vmem:[#allocation8 + $0x140] sm:$0xf]
    %v2887 = vld [vmem:[#allocation8 + $0x144] sm:$0xf]
    %v2888 = vld [vmem:[#allocation8 + $0x148] sm:$0xf]
    %v2889 = vld [vmem:[#allocation8 + $0x14c] sm:$0xf]
    %v2890 = vld [vmem:[#allocation8 + $0x150] sm:$0xf]
    %v2891 = vld [vmem:[#allocation8 + $0x154] sm:$0xf]
    %v2892 = vld [vmem:[#allocation8 + $0x158] sm:$0xf]
    %v2893 = vld [vmem:[#allocation8 + $0x15c] sm:$0xf]
    %v2894 = vld [vmem:[#allocation8 + $0x160] sm:$0xf]
    %v2895 = vld [vmem:[#allocation8 + $0x164] sm:$0xf]
    %v2896 = vld [vmem:[#allocation8 + $0x168] sm:$0xf]
    %v2897 = vld [vmem:[#allocation8 + $0x16c] sm:$0xf]
    %v2898 = vld [vmem:[#allocation8 + $0x170] sm:$0xf]
    %v2899 = vld [vmem:[#allocation8 + $0x174] sm:$0xf]
    %v2900 = vld [vmem:[#allocation8 + $0x178] sm:$0xf]
    %v2901 = vld [vmem:[#allocation8 + $0x17c] sm:$0xf]
    %v2902 = vld [vmem:[%s6] sm:$0x1]
    %v2904 = vlaneseq
    %v2905 = vshrl.u32 %v2904, 7
    %v2906 = vsub.s32 0, %v2905
    %v2907 = vrot.slane %v2902, %v2906
    %v3005 = vunpack.c.l.b16 %v2806
    %v3006 = vunpack.c.l.b16 %v2807
    %v3007 = vunpack.c.l.b16 %v2808
    %v3008 = vunpack.c.l.b16 %v2809
    %v3009 = vunpack.c.l.b16 %v2810
    %v3010 = vunpack.c.l.b16 %v2811
    %v3011 = vunpack.c.l.b16 %v2812
    %v3012 = vunpack.c.l.b16 %v2813
    %v3013 = vunpack.c.l.b16 %v2814
    %v3014 = vunpack.c.l.b16 %v2815
    %v3015 = vunpack.c.l.b16 %v2816
    %v3016 = vunpack.c.l.b16 %v2817
    %v3017 = vunpack.c.l.b16 %v2818
    %v3018 = vunpack.c.l.b16 %v2819
    %v3019 = vunpack.c.l.b16 %v2820
    %v3020 = vunpack.c.l.b16 %v2821
    %v3021 = vunpack.c.l.b16 %v2822
    %v3022 = vunpack.c.l.b16 %v2823
    %v3023 = vunpack.c.l.b16 %v2824
    %v3024 = vunpack.c.l.b16 %v2825
    %v3025 = vunpack.c.l.b16 %v2826
    %v3026 = vunpack.c.l.b16 %v2827
    %v3027 = vunpack.c.l.b16 %v2828
    %v3028 = vunpack.c.l.b16 %v2829
    %v3029 = vunpack.c.l.b16 %v2830
    %v3030 = vunpack.c.l.b16 %v2831
    %v3031 = vunpack.c.l.b16 %v2832
    %v3032 = vunpack.c.l.b16 %v2833
    %v3033 = vunpack.c.l.b16 %v2834
    %v3034 = vunpack.c.l.b16 %v2835
    %v3035 = vunpack.c.l.b16 %v2836
    %v3036 = vunpack.c.l.b16 %v2837
    %v3037 = vunpack.c.l.b16 %v2838
    %v3038 = vunpack.c.l.b16 %v2839
    %v3039 = vunpack.c.l.b16 %v2840
    %v3040 = vunpack.c.l.b16 %v2841
    %v3041 = vunpack.c.l.b16 %v2842
    %v3042 = vunpack.c.l.b16 %v2843
    %v3043 = vunpack.c.l.b16 %v2844
    %v3044 = vunpack.c.l.b16 %v2845
    %v3045 = vunpack.c.l.b16 %v2846
    %v3046 = vunpack.c.l.b16 %v2847
    %v3047 = vunpack.c.l.b16 %v2848
    %v3048 = vunpack.c.l.b16 %v2849
    %v3049 = vunpack.c.l.b16 %v2850
    %v3050 = vunpack.c.l.b16 %v2851
    %v3051 = vunpack.c.l.b16 %v2852
    %v3052 = vunpack.c.l.b16 %v2853
    %v3053 = vunpack.c.l.b16 %v2854
    %v3054 = vunpack.c.l.b16 %v2855
    %v3055 = vunpack.c.l.b16 %v2856
    %v3056 = vunpack.c.l.b16 %v2857
    %v3057 = vunpack.c.l.b16 %v2858
    %v3058 = vunpack.c.l.b16 %v2859
    %v3059 = vunpack.c.l.b16 %v2860
    %v3060 = vunpack.c.l.b16 %v2861
    %v3061 = vunpack.c.l.b16 %v2862
    %v3062 = vunpack.c.l.b16 %v2863
    %v3063 = vunpack.c.l.b16 %v2864
    %v3064 = vunpack.c.l.b16 %v2865
    %v3065 = vunpack.c.l.b16 %v2866
    %v3066 = vunpack.c.l.b16 %v2867
    %v3067 = vunpack.c.l.b16 %v2868
    %v3068 = vunpack.c.l.b16 %v2869
    %v3069 = vunpack.c.l.b16 %v2870
    %v3070 = vunpack.c.l.b16 %v2871
    %v3071 = vunpack.c.l.b16 %v2872
    %v3072 = vunpack.c.l.b16 %v2873
    %v3073 = vunpack.c.l.b16 %v2874
    %v3074 = vunpack.c.l.b16 %v2875
    %v3075 = vunpack.c.l.b16 %v2876
    %v3076 = vunpack.c.l.b16 %v2877
    %v3077 = vunpack.c.l.b16 %v2878
    %v3078 = vunpack.c.l.b16 %v2879
    %v3079 = vunpack.c.l.b16 %v2880
    %v3080 = vunpack.c.l.b16 %v2881
    %v3081 = vunpack.c.l.b16 %v2882
    %v3082 = vunpack.c.l.b16 %v2883
    %v3083 = vunpack.c.l.b16 %v2884
    %v3084 = vunpack.c.l.b16 %v2885
    %v3085 = vunpack.c.l.b16 %v2886
    %v3086 = vunpack.c.l.b16 %v2887
    %v3087 = vunpack.c.l.b16 %v2888
    %v3088 = vunpack.c.l.b16 %v2889
    %v3089 = vunpack.c.l.b16 %v2890
    %v3090 = vunpack.c.l.b16 %v2891
    %v3091 = vunpack.c.l.b16 %v2892
    %v3092 = vunpack.c.l.b16 %v2893
    %v3093 = vunpack.c.l.b16 %v2894
    %v3094 = vunpack.c.l.b16 %v2895
    %v3095 = vunpack.c.l.b16 %v2896
    %v3096 = vunpack.c.l.b16 %v2897
    %v3097 = vunpack.c.l.b16 %v2898
    %v3098 = vunpack.c.l.b16 %v2899
    %v3099 = vunpack.c.l.b16 %v2900
    %v3100 = vunpack.c.l.b16 %v2901
    %v3101 = vpack.c.b16 %v3006, %v3005
    %v3102 = vpack.c.b16 %v3008, %v3007
    %v3103 = vpack.c.b16 %v3010, %v3009
    %v3104 = vpack.c.b16 %v3012, %v3011
    %v3105 = vpack.c.b16 %v3014, %v3013
    %v3106 = vpack.c.b16 %v3016, %v3015
    %v3107 = vpack.c.b16 %v3018, %v3017
    %v3108 = vpack.c.b16 %v3020, %v3019
    %v3109 = vpack.c.b16 %v3022, %v3021
    %v3110 = vpack.c.b16 %v3024, %v3023
    %v3111 = vpack.c.b16 %v3026, %v3025
    %v3112 = vpack.c.b16 %v3028, %v3027
    %v3113 = vpack.c.b16 %v3030, %v3029
    %v3114 = vpack.c.b16 %v3032, %v3031
    %v3115 = vpack.c.b16 %v3034, %v3033
    %v3116 = vpack.c.b16 %v3036, %v3035
    %v3117 = vpack.c.b16 %v3038, %v3037
    %v3118 = vpack.c.b16 %v3040, %v3039
    %v3119 = vpack.c.b16 %v3042, %v3041
    %v3120 = vpack.c.b16 %v3044, %v3043
    %v3121 = vpack.c.b16 %v3046, %v3045
    %v3122 = vpack.c.b16 %v3048, %v3047
    %v3123 = vpack.c.b16 %v3050, %v3049
    %v3124 = vpack.c.b16 %v3052, %v3051
    %v3125 = vpack.c.b16 %v3054, %v3053
    %v3126 = vpack.c.b16 %v3056, %v3055
    %v3127 = vpack.c.b16 %v3058, %v3057
    %v3128 = vpack.c.b16 %v3060, %v3059
    %v3129 = vpack.c.b16 %v3062, %v3061
    %v3130 = vpack.c.b16 %v3064, %v3063
    %v3131 = vpack.c.b16 %v3066, %v3065
    %v3132 = vpack.c.b16 %v3068, %v3067
    %v3133 = vpack.c.b16 %v3070, %v3069
    %v3134 = vpack.c.b16 %v3072, %v3071
    %v3135 = vpack.c.b16 %v3074, %v3073
    %v3136 = vpack.c.b16 %v3076, %v3075
    %v3137 = vpack.c.b16 %v3078, %v3077
    %v3138 = vpack.c.b16 %v3080, %v3079
    %v3139 = vpack.c.b16 %v3082, %v3081
    %v3140 = vpack.c.b16 %v3084, %v3083
    %v3141 = vpack.c.b16 %v3086, %v3085
    %v3142 = vpack.c.b16 %v3088, %v3087
    %v3143 = vpack.c.b16 %v3090, %v3089
    %v3144 = vpack.c.b16 %v3092, %v3091
    %v3145 = vpack.c.b16 %v3094, %v3093
    %v3146 = vpack.c.b16 %v3096, %v3095
    %v3147 = vpack.c.b16 %v3098, %v3097
    %v3148 = vpack.c.b16 %v3100, %v3099
    %3197 = vmatprep.subr.bf16.mxu0 0
    %3198 = vmatpush1.bf16.msra.mxu0 %v3101
    %3199 = vmatprep.subr.bf16.mxu0 0
    %3200 = vmatpush1.bf16.msra.mxu0 %v3102
    %3201 = vmatprep.subr.bf16.mxu0 0
    %3202 = vmatpush1.bf16.msra.mxu0 %v3103
    %3203 = vmatprep.subr.bf16.mxu0 0
    %3204 = vmatpush1.bf16.msra.mxu0 %v3104
    %3205 = vmatprep.subr.bf16.mxu0 0
    %3206 = vmatpush1.bf16.msra.mxu0 %v3105
    %3207 = vmatprep.subr.bf16.mxu0 0
    %3208 = vmatpush1.bf16.msra.mxu0 %v3106
    %3209 = vmatprep.subr.bf16.mxu0 0
    %3210 = vmatpush1.bf16.msra.mxu0 %v3107
    %3211 = vmatprep.subr.bf16.mxu0 0
    %3212 = vmatpush1.bf16.msra.mxu0 %v3108
    %3213 = vmatprep.subr.bf16.mxu0 0
    %3214 = vmatpush1.bf16.msra.mxu0 %v3109
    %3215 = vmatprep.subr.bf16.mxu0 0
    %3216 = vmatpush1.bf16.msra.mxu0 %v3110
    %3217 = vmatprep.subr.bf16.mxu0 0
    %3218 = vmatpush1.bf16.msra.mxu0 %v3111
    %3219 = vmatprep.subr.bf16.mxu0 0
    %3220 = vmatpush1.bf16.msra.mxu0 %v3112
    %3221 = vmatprep.subr.bf16.mxu0 0
    %3222 = vmatpush1.bf16.msra.mxu0 %v3113
    %3223 = vmatprep.subr.bf16.mxu0 0
    %3224 = vmatpush1.bf16.msra.mxu0 %v3114
    %3225 = vmatprep.subr.bf16.mxu0 0
    %3226 = vmatpush1.bf16.msra.mxu0 %v3115
    %3227 = vmatprep.subr.bf16.mxu0 0
    %3228 = vmatpush1.bf16.msra.mxu0 %v3116
    %3229 = vmatprep.mubr.bf16.mxu0 %v2801
    %3230 = vmatmul.mubr.bf16.gmra.mrb[0].mxu0 %v2800
    %v3231 = vpop.f32.mrb[0].mxu0
    %v3232 = vadd.f32 %v2907, %v3231
    %v3233 = vpop.f32.mrb[0].mxu0
    %v3234 = vpop.f32.mrb[0].mxu0
    %v3235 = vpop.f32.mrb[0].mxu0
    %3236 = vdwg.mxu0
    %3237 = vmatprep.subr.bf16.mxu0 0
    %3238 = vmatpush1.bf16.msra.mxu0 %v3117
    %3239 = vmatprep.subr.bf16.mxu0 0
    %3240 = vmatpush1.bf16.msra.mxu0 %v3118
    %3241 = vmatprep.subr.bf16.mxu0 0
    %3242 = vmatpush1.bf16.msra.mxu0 %v3119
    %3243 = vmatprep.subr.bf16.mxu0 0
    %3244 = vmatpush1.bf16.msra.mxu0 %v3120
    %3245 = vmatprep.subr.bf16.mxu0 0
    %3246 = vmatpush1.bf16.msra.mxu0 %v3121
    %3247 = vmatprep.subr.bf16.mxu0 0
    %3248 = vmatpush1.bf16.msra.mxu0 %v3122
    %3249 = vmatprep.subr.bf16.mxu0 0
    %3250 = vmatpush1.bf16.msra.mxu0 %v3123
    %3251 = vmatprep.subr.bf16.mxu0 0
    %3252 = vmatpush1.bf16.msra.mxu0 %v3124
    %3253 = vmatprep.subr.bf16.mxu0 0
    %3254 = vmatpush1.bf16.msra.mxu0 %v3125
    %3255 = vmatprep.subr.bf16.mxu0 0
    %3256 = vmatpush1.bf16.msra.mxu0 %v3126
    %3257 = vmatprep.subr.bf16.mxu0 0
    %3258 = vmatpush1.bf16.msra.mxu0 %v3127
    %3259 = vmatprep.subr.bf16.mxu0 0
    %3260 = vmatpush1.bf16.msra.mxu0 %v3128
    %3261 = vmatprep.subr.bf16.mxu0 0
    %3262 = vmatpush1.bf16.msra.mxu0 %v3129
    %3263 = vmatprep.subr.bf16.mxu0 0
    %3264 = vmatpush1.bf16.msra.mxu0 %v3130
    %3265 = vmatprep.subr.bf16.mxu0 0
    %3266 = vmatpush1.bf16.msra.mxu0 %v3131
    %3267 = vmatprep.subr.bf16.mxu0 0
    %3268 = vmatpush1.bf16.msra.mxu0 %v3132
    %3269 = vmatprep.mubr.bf16.mxu0 %v2803
    %3270 = vmatmul.mubr.bf16.gmra.mrb[0].mxu0 %v2802
    %v3271 = vpop.f32.mrb[0].mxu0
    %v3272 = vadd.f32 %v3232, %v3271
    %v3273 = vpop.f32.mrb[0].mxu0
    %v3274 = vpop.f32.mrb[0].mxu0
    %v3275 = vpop.f32.mrb[0].mxu0
    %3276 = vdwg.mxu0
    %3277 = vmatprep.subr.bf16.mxu0 0
    %3278 = vmatpush1.bf16.msra.mxu0 %v3133
    %3279 = vmatprep.subr.bf16.mxu0 0
    %3280 = vmatpush1.bf16.msra.mxu0 %v3134
    %3281 = vmatprep.subr.bf16.mxu0 0
    %3282 = vmatpush1.bf16.msra.mxu0 %v3135
    %3283 = vmatprep.subr.bf16.mxu0 0
    %3284 = vmatpush1.bf16.msra.mxu0 %v3136
    %3285 = vmatprep.subr.bf16.mxu0 0
    %3286 = vmatpush1.bf16.msra.mxu0 %v3137
    %3287 = vmatprep.subr.bf16.mxu0 0
    %3288 = vmatpush1.bf16.msra.mxu0 %v3138
    %3289 = vmatprep.subr.bf16.mxu0 0
    %3290 = vmatpush1.bf16.msra.mxu0 %v3139
    %3291 = vmatprep.subr.bf16.mxu0 0
    %3292 = vmatpush1.bf16.msra.mxu0 %v3140
    %3293 = vmatprep.subr.bf16.mxu0 0
    %3294 = vmatpush1.bf16.msra.mxu0 %v3141
    %3295 = vmatprep.subr.bf16.mxu0 0
    %3296 = vmatpush1.bf16.msra.mxu0 %v3142
    %3297 = vmatprep.subr.bf16.mxu0 0
    %3298 = vmatpush1.bf16.msra.mxu0 %v3143
    %3299 = vmatprep.subr.bf16.mxu0 0
    %3300 = vmatpush1.bf16.msra.mxu0 %v3144
    %3301 = vmatprep.subr.bf16.mxu0 0
    %3302 = vmatpush1.bf16.msra.mxu0 %v3145
    %3303 = vmatprep.subr.bf16.mxu0 0
    %3304 = vmatpush1.bf16.msra.mxu0 %v3146
    %3305 = vmatprep.subr.bf16.mxu0 0
    %3306 = vmatpush1.bf16.msra.mxu0 %v3147
    %3307 = vmatprep.subr.bf16.mxu0 0
    %3308 = vmatpush1.bf16.msra.mxu0 %v3148
    %3309 = vmatprep.mubr.bf16.mxu0 %v2805
    %3310 = vmatmul.mubr.bf16.gmra.mrb[0].mxu0 %v2804
    %v3311 = vpop.f32.mrb[0].mxu0
    %v3312 = vadd.f32 %v3272, %v3311
    %v3313 = vpop.f32.mrb[0].mxu0
    %v3314 = vpop.f32.mrb[0].mxu0
    %v3315 = vpop.f32.mrb[0].mxu0
    %3316 = vdwg.mxu0
    %3317 = vst [vmem:[#allocation10] sm:$0xff] %v3312
    // Predicated region
    $region46: #{tpu_custom_call.1} parent=1 // pred_check
      _
    $region47: #{tpu_custom_call.1} parent=1 // pred_check_branch
      %3319 = sbr.rel (0) target = $region49
    $region48: #{tpu_custom_call.1} parent=1 // pred_region
      %s3321 = ssub.s32 128, 128
      %3322 = vsyncadd [#allocation4], %s3321
      %s3324 = sshll.u32 [#allocation10], 4
      %s3325 = int_to_ptr.vmem [resolvable:$true] %s3324
      %3327 = dma.vmem_to_hbm [thread:$0]  %s3325, 128, %s7, [#allocation4]
    $region49: #{tpu_custom_call.1} parent=1 // pred_fallthru
      _
    // Predicated region
    $region50: #{tpu_custom_call.1} parent=1 // pred_check
      _
    $region51: #{tpu_custom_call.1} parent=1 // pred_check_branch
      %3329 = sbr.rel (0) target = $region53
    $region52: #{tpu_custom_call.1} parent=1 // pred_region
      %3330 = dma.done [#allocation4], 128
    $region53: #{tpu_custom_call.1} parent=1 // pred_fallthru
      _
    %3331 = vsyncpa [#allocation3], 1
    %3332 = vsyncpa [#allocation6], 1
    %3333 = vsyncpa [#allocation9], 1
    %3334 = vsyncpa [#allocation4], 1

</llo_original>
